<compile_context>
chip_gen: v6e
topology: v6e:2x2x1
jax: 0.10.0
libtpu: 0.0.40
codegen_flags: <defaults>
</compile_context>

<pallas_src>
import jax
import jax.numpy as jnp
from jax.experimental import pallas as pl
from jax.experimental.pallas import tpu as pltpu


# ----------------------------- parameter setup (plain JAX glue) -----------------------------

def _silu(x):
    return x * jax.nn.sigmoid(x)


def init_linear(key, fan_in, fan_out):
    kw, kb = jax.random.split(key)
    bound = 1.0 / (fan_in ** 0.5)
    w = jax.random.uniform(kw, (fan_in, fan_out), jnp.float32, -bound, bound)
    b = jax.random.uniform(kb, (1, fan_out), jnp.float32, -bound, bound)
    return w, b


def init_mlp(key, in_dim, hidden_dims, out_dim):
    dims = [in_dim] + list(hidden_dims) + [out_dim]
    keys = jax.random.split(key, len(dims) - 1)
    return [init_linear(k, dims[i], dims[i + 1]) for i, k in enumerate(keys)]


def mlp_apply(x, layers):
    # SiLU after every layer except the last (matches the nn.Sequential construction)
    for w, b in layers[:-1]:
        x = _silu(x @ w + b)
    w, b = layers[-1]
    return x @ w + b


# ----------------------------------- Pallas kernel -----------------------------------

def mol_kernel(qmat_ref, qw_ref, item_ref, iw_ref,
               wl1_ref, bl1_ref, wl2_ref, bl2_ref, wl3_ref, bl3_ref,
               wg_ref, bg_ref, out_ref):
    """One grid step = one tile of `tn` items (lane axis), all query batches.

    Transposed layout: item_ref (I*D, tn), iw_ref (L, tn), qw_ref (L, B); MLP/gate
    weights are pre-transposed so each Linear is W^T @ activation (features x tn).
    out_ref block is (B, tn) -> lane-dense stores.
    """
    # Hoisted once per grid step (not per batch): weight/bias reads.
    qmat = qmat_ref[...]        # (B*L, I*D) bf16
    item = item_ref[...]        # (I*D, tn)  bf16
    iw = iw_ref[...]            # (L, tn)    f32
    qw = qw_ref[...]            # (L, B)     f32
    wl1 = wl1_ref[...]; bl1 = bl1_ref[...]
    wl2 = wl2_ref[...]; bl2 = bl2_ref[...]
    wl3 = wl3_ref[...]; bl3 = bl3_ref[...]
    wg = wg_ref[...]; bg = bg_ref[...]

    n_batch = qw_ref.shape[1]
    L = iw_ref.shape[0]

    # Fused logits matmul for ALL query batches at once:
    #   (B*L, I*D) @ (I*D, tn) -> (B*L, tn), f32 accumulation on the MXU.
    # TODO(synk): on v5e the eye()-expanded qmat does ~I x redundant FLOPs; there the
    # logits could instead be precomputed with an XLA einsum and streamed in.
    logits_all = jnp.dot(qmat, item, preferred_element_type=jnp.float32)

    for b in range(n_batch):    # B is tiny and static -> unrolled
        logits = logits_all[b * L:(b + 1) * L, :]                      # (L, tn) f32

        # logit_weight_fn MLP (Linear+SiLU, Linear+SiLU, Linear), transposed form.
        h = jnp.dot(wl1, logits.astype(wl1.dtype),
                    preferred_element_type=jnp.float32) + bl1
        h = h * jax.nn.sigmoid(h)
        h = jnp.dot(wl2, h.astype(wl2.dtype),
                    preferred_element_type=jnp.float32) + bl2
        h = h * jax.nn.sigmoid(h)
        lw = jnp.dot(wl3, h.astype(wl3.dtype),
                     preferred_element_type=jnp.float32) + bl3          # (L, tn)

        # gate: Linear(L, L) + softmax over the logit axis (sublanes here).
        gate_in = qw[:, b:b + 1] * iw + lw                              # (L, tn)
        g = jnp.dot(wg, gate_in.astype(wg.dtype),
                    preferred_element_type=jnp.float32) + bg            # (L, tn)
        g = g - jnp.max(g, axis=0, keepdims=True)
        e = jnp.exp(g)
        gating = e * pl.reciprocal(jnp.sum(e, axis=0, keepdims=True), approx=True)

        # weighted sum over the logit axis -> one lane-dense row per query batch.
        out_ref[b:b + 1, :] = jnp.sum(logits * gating, axis=0, keepdims=True)


# ----------------------------------- wrapper -----------------------------------

def _full_spec(arr):
    nd = arr.ndim
    return pl.BlockSpec(arr.shape, lambda n, _nd=nd: (0,) * _nd)


def _pick_tile(n, tn):
    # lane-dense tiles (multiples of 128); keep >= 2 grid steps so the "parallel"
    # item axis can be split across both v7x TensorCores.
    tn = min(tn, max(128, n // 2))
    while n % tn:
        tn //= 2
    return max(tn, 1)


def mixture_of_logits_forward(x, item_emb, params, topk, tn=512):
    B, Q, D = x.shape
    N, I, D2 = item_emb.shape
    assert D == D2
    L = Q * I
    ID = I * D
    tn = _pick_tile(N, tn)
    assert N % tn == 0 and tn % 128 == 0

    # ---- wrapper-side layout plumbing (transposed, bf16 MXU operands) ----
    # item_t[i*D+d, n] = item_emb[n, i, d]
    item_t = item_emb.reshape(N, ID).T.astype(jnp.bfloat16)                        # (I*D, N)
    # qmat_t[b*L + q*I + i, j*D + d] = x[b,q,d] * delta(i,j), so that
    # qmat_t @ item_t reproduces logits.view(B, N, Q*I) transposed to (B*L, N).
    qmat_t = jnp.einsum('bqd,ij->bqijd', x, jnp.eye(I, dtype=x.dtype)
                        ).reshape(B * L, ID).astype(jnp.bfloat16)                   # (B*L, I*D)

    # query/item weight MLPs are O(B)/O(N) glue (not the O(B*N) hot path) -> plain JAX.
    qw_t = mlp_apply(x.reshape(B, Q * D), params['query']).T                        # (L, B) f32
    iw_t = mlp_apply(item_emb.reshape(N, ID), params['item']).T                     # (L, N) f32

    assert len(params['logit']) == 3, "kernel is specialised to 2 hidden MLP dims"
    (wl1, bl1), (wl2, bl2), (wl3, bl3) = params['logit']
    wg, bg = params['gate']
    bf16 = jnp.bfloat16
    wl1_t, wl2_t, wl3_t, wg_t = (w.T.astype(bf16) for w in (wl1, wl2, wl3, wg))
    bl1_t, bl2_t, bl3_t, bg_t = (bb.T for bb in (bl1, bl2, bl3, bg))                # (out, 1) f32

    # Advisory cost estimate so XLA schedules the qw/iw MLPs + top_k around the call.
    mlp_flops = 0
    k_in = L
    for w, _ in params['logit']:
        mlp_flops += 2 * k_in * w.shape[1]
        k_in = w.shape[1]
    flops = N * (2 * (B * L) * ID + B * (mlp_flops + 2 * L * L))
    transcendentals = N * B * (sum(w.shape[1] for w, _ in params['logit'][:-1]) + L + 1)
    bytes_accessed = (item_t.size * 2 + iw_t.size * 4 + qmat_t.size * 2 + B * N * 4
                      + sum(w.size * 2 + bb.size * 4 for w, bb in params['logit'])
                      + wg.size * 2 + bg.size * 4 + qw_t.size * 4)

    grid = (N // tn,)
    sims = pl.pallas_call(
        mol_kernel,
        out_shape=jax.ShapeDtypeStruct((B, N), jnp.float32),
        grid=grid,
        in_specs=[
            _full_spec(qmat_t),                               # (B*L, I*D), VMEM-resident
            _full_spec(qw_t),                                 # (L, B),     VMEM-resident
            pl.BlockSpec((ID, tn), lambda n: (0, n)),         # item tile (streamed)
            pl.BlockSpec((L, tn), lambda n: (0, n)),          # item-weight tile (streamed)
            _full_spec(wl1_t), _full_spec(bl1_t),
            _full_spec(wl2_t), _full_spec(bl2_t),
            _full_spec(wl3_t), _full_spec(bl3_t),
            _full_spec(wg_t), _full_spec(bg_t),
        ],
        out_specs=pl.BlockSpec((B, tn), lambda n: (0, n)),    # lane-dense output block
        compiler_params=pltpu.CompilerParams(
            dimension_semantics=("parallel",),
            # double-buffered (I*D, tn)+(L, tn) tiles + resident qmat fit easily;
            # re-budget if tn / model dims are scaled up (v7x has 64 MiB physical VMEM).
            vmem_limit_bytes=32 * 1024 * 1024,
        ),
        cost_estimate=pl.CostEstimate(
            flops=int(flops),
            transcendentals=int(transcendentals),
            bytes_accessed=int(bytes_accessed)),
    )(qmat_t, qw_t, item_t, iw_t,
      wl1_t, bl1_t, wl2_t, bl2_t, wl3_t, bl3_t, wg_t, bg_t)

    # TODO(synk): top-k stays in lax.top_k; a fused in-kernel running top-k only pays
    # off at retrieval-scale N (it would avoid re-reading sims from HBM).
    scores, indices = jax.lax.top_k(sims, topk)
    return scores, indices, sims


# ----------------------------------- pure-JAX reference -----------------------------------

def reference_forward(x, item_emb, params, topk):
    B, Q, D = x.shape
    N, I, _ = item_emb.shape
    L = Q * I
    logits = jnp.einsum('bqd,nid->bnqi', x, item_emb).reshape(B, N, L)
    qw = mlp_apply(x.reshape(B, Q * D), params['query'])
    iw = mlp_apply(item_emb.reshape(N, I * D), params['item'])
    lw = mlp_apply(logits, params['logit'])
    wg, bg = params['gate']
    gating = jax.nn.softmax((qw[:, None, :] * iw[None, :, :] + lw) @ wg + bg, axis=-1)
    sims = jnp.sum(logits * gating, axis=-1)
    scores, indices = jax.lax.top_k(sims, topk)
    return scores, indices, sims


# ----------------------------------- main -----------------------------------

if __name__ == "__main__":
    # Small but TPU-friendly sizes: L = num_query_emb * num_item_emb = 128 (lane-dense),
    # N = 1024 so the tn=512 tiled grid has 2 parallel steps (keeps both v7x TCs busy).
    num_items, emb_dim = 1024, 16
    num_item_emb, num_query_emb = 16, 8
    weight_mlp_dims = [64, 32]
    topk = 5
    batch = 2
    L = num_query_emb * num_item_emb

    key = jax.random.PRNGKey(0)
    k_item, k_x, k_q, k_i, k_l, k_g = jax.random.split(key, 6)
    item_emb = jax.random.normal(k_item, (num_items, num_item_emb, emb_dim), jnp.float32)
    x = jax.random.normal(k_x, (batch, num_query_emb, emb_dim), jnp.float32)

    params = {
        'query': init_mlp(k_q, num_query_emb * emb_dim, weight_mlp_dims, L),
        'item':  init_mlp(k_i, num_item_emb * emb_dim, weight_mlp_dims, L),
        'logit': init_mlp(k_l, L, weight_mlp_dims, L),
        'gate':  init_linear(k_g, L, L),
    }

    scores, indices, sims = mixture_of_logits_forward(x, item_emb, params, topk)
    jax.block_until_ready((scores, indices, sims))

    ref_scores, ref_indices, ref_sims = reference_forward(x, item_emb, params, topk)
    # bf16 MXU operands (f32 accumulation) -> slightly looser tolerance than pure f32.
    assert jnp.allclose(sims, ref_sims, rtol=5e-2, atol=5e-2), "similarity mismatch"
    assert jnp.allclose(scores, ref_scores, rtol=5e-2, atol=5e-2), "top-k score mismatch"

    print("KERNEL_OK")
</pallas_src>

<mosaic_0001>
module attributes {stable_mosaic.version = 11 : i64} {
  func.func @mol_kernel(%arg0: i32, %arg1: memref<256x256xbf16, #tpu.memory_space<vmem>>, %arg2: memref<128x2xf32, #tpu.memory_space<vmem>>, %arg3: memref<256x512xbf16, #tpu.memory_space<vmem>>, %arg4: memref<128x512xf32, #tpu.memory_space<vmem>>, %arg5: memref<64x128xbf16, #tpu.memory_space<vmem>>, %arg6: memref<64x1xf32, #tpu.memory_space<vmem>>, %arg7: memref<32x64xbf16, #tpu.memory_space<vmem>>, %arg8: memref<32x1xf32, #tpu.memory_space<vmem>>, %arg9: memref<128x32xbf16, #tpu.memory_space<vmem>>, %arg10: memref<128x1xf32, #tpu.memory_space<vmem>>, %arg11: memref<128x128xbf16, #tpu.memory_space<vmem>>, %arg12: memref<128x1xf32, #tpu.memory_space<vmem>>, %arg13: memref<2x512xf32, #tpu.memory_space<vmem>>) attributes {dimension_semantics = [#tpu.dimension_semantics<parallel>], iteration_bounds = array<i64: 2>, scalar_prefetch = 0 : i64, scratch_operands = 0 : i64, tpu.core_type = #tpu.core_type<tc>, window_params = [{pipeline_mode = #tpu.pipeline_mode<synchronous>, transform_indices = @transform_0, window_bounds = array<i64: 256, 256>}, {pipeline_mode = #tpu.pipeline_mode<synchronous>, transform_indices = @transform_1, window_bounds = array<i64: 128, 2>}, {transform_indices = @transform_2, window_bounds = array<i64: 256, 512>}, {transform_indices = @transform_3, window_bounds = array<i64: 128, 512>}, {pipeline_mode = #tpu.pipeline_mode<synchronous>, transform_indices = @transform_4, window_bounds = array<i64: 64, 128>}, {pipeline_mode = #tpu.pipeline_mode<synchronous>, transform_indices = @transform_5, window_bounds = array<i64: 64, 1>}, {pipeline_mode = #tpu.pipeline_mode<synchronous>, transform_indices = @transform_6, window_bounds = array<i64: 32, 64>}, {pipeline_mode = #tpu.pipeline_mode<synchronous>, transform_indices = @transform_7, window_bounds = array<i64: 32, 1>}, {pipeline_mode = #tpu.pipeline_mode<synchronous>, transform_indices = @transform_8, window_bounds = array<i64: 128, 32>}, {pipeline_mode = #tpu.pipeline_mode<synchronous>, transform_indices = @transform_9, window_bounds = array<i64: 128, 1>}, {pipeline_mode = #tpu.pipeline_mode<synchronous>, transform_indices = @transform_10, window_bounds = array<i64: 128, 128>}, {pipeline_mode = #tpu.pipeline_mode<synchronous>, transform_indices = @transform_11, window_bounds = array<i64: 128, 1>}, {transform_indices = @transform_12, window_bounds = array<i64: 2, 512>}]} {
    %c0 = arith.constant 0 : index
    %c0_0 = arith.constant 0 : index
    %0 = vector.load %arg1[%c0, %c0_0] : memref<256x256xbf16, #tpu.memory_space<vmem>>, vector<256x256xbf16>
    %c0_1 = arith.constant 0 : index
    %c0_2 = arith.constant 0 : index
    %1 = vector.load %arg3[%c0_1, %c0_2] : memref<256x512xbf16, #tpu.memory_space<vmem>>, vector<256x512xbf16>
    %c0_3 = arith.constant 0 : index
    %c0_4 = arith.constant 0 : index
    %2 = vector.load %arg4[%c0_3, %c0_4] : memref<128x512xf32, #tpu.memory_space<vmem>>, vector<128x512xf32>
    %c0_5 = arith.constant 0 : index
    %c0_6 = arith.constant 0 : index
    %3 = vector.load %arg2[%c0_5, %c0_6] : memref<128x2xf32, #tpu.memory_space<vmem>>, vector<128x2xf32>
    %c0_7 = arith.constant 0 : index
    %c0_8 = arith.constant 0 : index
    %4 = vector.load %arg5[%c0_7, %c0_8] : memref<64x128xbf16, #tpu.memory_space<vmem>>, vector<64x128xbf16>
    %c0_9 = arith.constant 0 : index
    %c0_10 = arith.constant 0 : index
    %5 = vector.load %arg6[%c0_9, %c0_10] : memref<64x1xf32, #tpu.memory_space<vmem>>, vector<64x1xf32>
    %c0_11 = arith.constant 0 : index
    %c0_12 = arith.constant 0 : index
    %6 = vector.load %arg7[%c0_11, %c0_12] : memref<32x64xbf16, #tpu.memory_space<vmem>>, vector<32x64xbf16>
    %c0_13 = arith.constant 0 : index
    %c0_14 = arith.constant 0 : index
    %7 = vector.load %arg8[%c0_13, %c0_14] : memref<32x1xf32, #tpu.memory_space<vmem>>, vector<32x1xf32>
    %c0_15 = arith.constant 0 : index
    %c0_16 = arith.constant 0 : index
    %8 = vector.load %arg9[%c0_15, %c0_16] : memref<128x32xbf16, #tpu.memory_space<vmem>>, vector<128x32xbf16>
    %c0_17 = arith.constant 0 : index
    %c0_18 = arith.constant 0 : index
    %9 = vector.load %arg10[%c0_17, %c0_18] : memref<128x1xf32, #tpu.memory_space<vmem>>, vector<128x1xf32>
    %c0_19 = arith.constant 0 : index
    %c0_20 = arith.constant 0 : index
    %10 = vector.load %arg11[%c0_19, %c0_20] : memref<128x128xbf16, #tpu.memory_space<vmem>>, vector<128x128xbf16>
    %c0_21 = arith.constant 0 : index
    %c0_22 = arith.constant 0 : index
    %11 = vector.load %arg12[%c0_21, %c0_22] : memref<128x1xf32, #tpu.memory_space<vmem>>, vector<128x1xf32>
    %cst = arith.constant dense<0.000000e+00> : vector<256x512xf32>
    %12 = tpu.matmul %0, %1, %cst {dimension_numbers = #tpu.dot_dimension_numbers<[1], [0], [0], [1], [0, 0, 1, 1], [], []>} : vector<256x256xbf16>, vector<256x512xbf16>, vector<256x512xf32> -> vector<256x512xf32>
    %13 = vector.extract_strided_slice %12 {offsets = [0, 0], sizes = [128, 512], strides = [1, 1]} : vector<256x512xf32> to vector<128x512xf32>
    %14 = arith.truncf %13 : vector<128x512xf32> to vector<128x512xbf16>
    %cst_23 = arith.constant dense<0.000000e+00> : vector<64x512xf32>
    %15 = tpu.matmul %4, %14, %cst_23 {dimension_numbers = #tpu.dot_dimension_numbers<[1], [0], [0], [1], [0, 0, 1, 1], [], []>} : vector<64x128xbf16>, vector<128x512xbf16>, vector<64x512xf32> -> vector<64x512xf32>
    %16 = vector.broadcast %5 : vector<64x1xf32> to vector<64x512xf32>
    %17 = arith.addf %15, %16 : vector<64x512xf32>
    %18 = arith.negf %17 : vector<64x512xf32>
    %19 = math.exp %18 : vector<64x512xf32>
    %cst_24 = arith.constant 1.000000e+00 : f32
    %20 = vector.broadcast %cst_24 : f32 to vector<64x512xf32>
    %21 = arith.addf %20, %19 : vector<64x512xf32>
    %22 = arith.divf %20, %21 : vector<64x512xf32>
    %23 = arith.mulf %17, %22 : vector<64x512xf32>
    %24 = arith.truncf %23 : vector<64x512xf32> to vector<64x512xbf16>
    %cst_25 = arith.constant dense<0.000000e+00> : vector<32x512xf32>
    %25 = tpu.matmul %6, %24, %cst_25 {dimension_numbers = #tpu.dot_dimension_numbers<[1], [0], [0], [1], [0, 0, 1, 1], [], []>} : vector<32x64xbf16>, vector<64x512xbf16>, vector<32x512xf32> -> vector<32x512xf32>
    %26 = vector.broadcast %7 : vector<32x1xf32> to vector<32x512xf32>
    %27 = arith.addf %25, %26 : vector<32x512xf32>
    %28 = arith.negf %27 : vector<32x512xf32>
    %29 = math.exp %28 : vector<32x512xf32>
    %cst_26 = arith.constant 1.000000e+00 : f32
    %30 = vector.broadcast %cst_26 : f32 to vector<32x512xf32>
    %31 = arith.addf %30, %29 : vector<32x512xf32>
    %32 = arith.divf %30, %31 : vector<32x512xf32>
    %33 = arith.mulf %27, %32 : vector<32x512xf32>
    %34 = arith.truncf %33 : vector<32x512xf32> to vector<32x512xbf16>
    %cst_27 = arith.constant dense<0.000000e+00> : vector<128x512xf32>
    %35 = tpu.matmul %8, %34, %cst_27 {dimension_numbers = #tpu.dot_dimension_numbers<[1], [0], [0], [1], [0, 0, 1, 1], [], []>} : vector<128x32xbf16>, vector<32x512xbf16>, vector<128x512xf32> -> vector<128x512xf32>
    %36 = vector.broadcast %9 : vector<128x1xf32> to vector<128x512xf32>
    %37 = arith.addf %35, %36 : vector<128x512xf32>
    %38 = vector.extract_strided_slice %3 {offsets = [0, 0], sizes = [128, 1], strides = [1, 1]} : vector<128x2xf32> to vector<128x1xf32>
    %39 = vector.broadcast %38 : vector<128x1xf32> to vector<128x512xf32>
    %40 = arith.mulf %39, %2 : vector<128x512xf32>
    %41 = arith.addf %40, %37 : vector<128x512xf32>
    %42 = arith.truncf %41 : vector<128x512xf32> to vector<128x512xbf16>
    %cst_28 = arith.constant dense<0.000000e+00> : vector<128x512xf32>
    %43 = tpu.matmul %10, %42, %cst_28 {dimension_numbers = #tpu.dot_dimension_numbers<[1], [0], [0], [1], [0, 0, 1, 1], [], []>} : vector<128x128xbf16>, vector<128x512xbf16>, vector<128x512xf32> -> vector<128x512xf32>
    %44 = vector.broadcast %11 : vector<128x1xf32> to vector<128x512xf32>
    %45 = arith.addf %43, %44 : vector<128x512xf32>
    %cst_29 = arith.constant dense<0xFF800000> : vector<512xf32>
    %46 = vector.multi_reduction <maximumf>, %45, %cst_29 [0] : vector<128x512xf32> to vector<512xf32>
    %47 = vector.shape_cast %46 : vector<512xf32> to vector<1x512xf32>
    %48 = vector.broadcast %47 : vector<1x512xf32> to vector<128x512xf32>
    %49 = arith.subf %45, %48 : vector<128x512xf32>
    %50 = math.exp %49 : vector<128x512xf32>
    %cst_30 = arith.constant dense<0.000000e+00> : vector<512xf32>
    %51 = vector.multi_reduction <add>, %50, %cst_30 [0] : vector<128x512xf32> to vector<512xf32>
    %52 = vector.shape_cast %51 : vector<512xf32> to vector<1x512xf32>
    %53 = tpu.reciprocal %52 {approx = true} : vector<1x512xf32> -> vector<1x512xf32>
    %54 = vector.broadcast %53 : vector<1x512xf32> to vector<128x512xf32>
    %55 = arith.mulf %50, %54 : vector<128x512xf32>
    %56 = arith.mulf %13, %55 : vector<128x512xf32>
    %cst_31 = arith.constant dense<0.000000e+00> : vector<512xf32>
    %57 = vector.multi_reduction <add>, %56, %cst_31 [0] : vector<128x512xf32> to vector<512xf32>
    %58 = vector.shape_cast %57 : vector<512xf32> to vector<1x512xf32>
    %c0_32 = arith.constant 0 : index
    %c0_33 = arith.constant 0 : index
    %59 = vector.load %arg13[%c0_32, %c0_33] : memref<2x512xf32, #tpu.memory_space<vmem>>, vector<1x512xf32>
    tpu.vector_store %arg13[%c0_32, %c0_33], %58 {strides = array<i32>} : memref<2x512xf32, #tpu.memory_space<vmem>>, vector<1x512xf32>,
    %60 = vector.extract_strided_slice %12 {offsets = [128, 0], sizes = [128, 512], strides = [1, 1]} : vector<256x512xf32> to vector<128x512xf32>
    %61 = arith.truncf %60 : vector<128x512xf32> to vector<128x512xbf16>
    %cst_34 = arith.constant dense<0.000000e+00> : vector<64x512xf32>
    %62 = tpu.matmul %4, %61, %cst_34 {dimension_numbers = #tpu.dot_dimension_numbers<[1], [0], [0], [1], [0, 0, 1, 1], [], []>} : vector<64x128xbf16>, vector<128x512xbf16>, vector<64x512xf32> -> vector<64x512xf32>
    %63 = vector.broadcast %5 : vector<64x1xf32> to vector<64x512xf32>
    %64 = arith.addf %62, %63 : vector<64x512xf32>
    %65 = arith.negf %64 : vector<64x512xf32>
    %66 = math.exp %65 : vector<64x512xf32>
    %cst_35 = arith.constant 1.000000e+00 : f32
    %67 = vector.broadcast %cst_35 : f32 to vector<64x512xf32>
    %68 = arith.addf %67, %66 : vector<64x512xf32>
    %69 = arith.divf %67, %68 : vector<64x512xf32>
    %70 = arith.mulf %64, %69 : vector<64x512xf32>
    %71 = arith.truncf %70 : vector<64x512xf32> to vector<64x512xbf16>
    %cst_36 = arith.constant dense<0.000000e+00> : vector<32x512xf32>
    %72 = tpu.matmul %6, %71, %cst_36 {dimension_numbers = #tpu.dot_dimension_numbers<[1], [0], [0], [1], [0, 0, 1, 1], [], []>} : vector<32x64xbf16>, vector<64x512xbf16>, vector<32x512xf32> -> vector<32x512xf32>
    %73 = vector.broadcast %7 : vector<32x1xf32> to vector<32x512xf32>
    %74 = arith.addf %72, %73 : vector<32x512xf32>
    %75 = arith.negf %74 : vector<32x512xf32>
    %76 = math.exp %75 : vector<32x512xf32>
    %cst_37 = arith.constant 1.000000e+00 : f32
    %77 = vector.broadcast %cst_37 : f32 to vector<32x512xf32>
    %78 = arith.addf %77, %76 : vector<32x512xf32>
    %79 = arith.divf %77, %78 : vector<32x512xf32>
    %80 = arith.mulf %74, %79 : vector<32x512xf32>
    %81 = arith.truncf %80 : vector<32x512xf32> to vector<32x512xbf16>
    %cst_38 = arith.constant dense<0.000000e+00> : vector<128x512xf32>
    %82 = tpu.matmul %8, %81, %cst_38 {dimension_numbers = #tpu.dot_dimension_numbers<[1], [0], [0], [1], [0, 0, 1, 1], [], []>} : vector<128x32xbf16>, vector<32x512xbf16>, vector<128x512xf32> -> vector<128x512xf32>
    %83 = vector.broadcast %9 : vector<128x1xf32> to vector<128x512xf32>
    %84 = arith.addf %82, %83 : vector<128x512xf32>
    %85 = vector.extract_strided_slice %3 {offsets = [0, 1], sizes = [128, 1], strides = [1, 1]} : vector<128x2xf32> to vector<128x1xf32>
    %86 = vector.broadcast %85 : vector<128x1xf32> to vector<128x512xf32>
    %87 = arith.mulf %86, %2 : vector<128x512xf32>
    %88 = arith.addf %87, %84 : vector<128x512xf32>
    %89 = arith.truncf %88 : vector<128x512xf32> to vector<128x512xbf16>
    %cst_39 = arith.constant dense<0.000000e+00> : vector<128x512xf32>
    %90 = tpu.matmul %10, %89, %cst_39 {dimension_numbers = #tpu.dot_dimension_numbers<[1], [0], [0], [1], [0, 0, 1, 1], [], []>} : vector<128x128xbf16>, vector<128x512xbf16>, vector<128x512xf32> -> vector<128x512xf32>
    %91 = vector.broadcast %11 : vector<128x1xf32> to vector<128x512xf32>
    %92 = arith.addf %90, %91 : vector<128x512xf32>
    %cst_40 = arith.constant dense<0xFF800000> : vector<512xf32>
    %93 = vector.multi_reduction <maximumf>, %92, %cst_40 [0] : vector<128x512xf32> to vector<512xf32>
    %94 = vector.shape_cast %93 : vector<512xf32> to vector<1x512xf32>
    %95 = vector.broadcast %94 : vector<1x512xf32> to vector<128x512xf32>
    %96 = arith.subf %92, %95 : vector<128x512xf32>
    %97 = math.exp %96 : vector<128x512xf32>
    %cst_41 = arith.constant dense<0.000000e+00> : vector<512xf32>
    %98 = vector.multi_reduction <add>, %97, %cst_41 [0] : vector<128x512xf32> to vector<512xf32>
    %99 = vector.shape_cast %98 : vector<512xf32> to vector<1x512xf32>
    %100 = tpu.reciprocal %99 {approx = true} : vector<1x512xf32> -> vector<1x512xf32>
    %101 = vector.broadcast %100 : vector<1x512xf32> to vector<128x512xf32>
    %102 = arith.mulf %97, %101 : vector<128x512xf32>
    %103 = arith.mulf %60, %102 : vector<128x512xf32>
    %cst_42 = arith.constant dense<0.000000e+00> : vector<512xf32>
    %104 = vector.multi_reduction <add>, %103, %cst_42 [0] : vector<128x512xf32> to vector<512xf32>
    %105 = vector.shape_cast %104 : vector<512xf32> to vector<1x512xf32>
    %c1 = arith.constant 1 : index
    %c0_43 = arith.constant 0 : index
    %106 = vector.load %arg13[%c1, %c0_43] : memref<2x512xf32, #tpu.memory_space<vmem>>, vector<1x512xf32>
    tpu.vector_store %arg13[%c1, %c0_43], %105 {strides = array<i32>} : memref<2x512xf32, #tpu.memory_space<vmem>>, vector<1x512xf32>,
    return
  }
  func.func @transform_0(%arg0: i32) -> (i32, i32) {
    %c0_i32 = arith.constant 0 : i32
    %c0_i32_0 = arith.constant 0 : i32
    %c0_i32_1 = arith.constant 0 : i32
    return %c0_i32, %c0_i32_0 : i32, i32
  }
  func.func @transform_1(%arg0: i32) -> (i32, i32) {
    %c0_i32 = arith.constant 0 : i32
    %c0_i32_0 = arith.constant 0 : i32
    %c0_i32_1 = arith.constant 0 : i32
    return %c0_i32, %c0_i32_0 : i32, i32
  }
  func.func @transform_2(%arg0: i32) -> (i32, i32) {
    %c0_i32 = arith.constant 0 : i32
    %c0_i32_0 = arith.constant 0 : i32
    return %c0_i32, %arg0 : i32, i32
  }
  func.func @transform_3(%arg0: i32) -> (i32, i32) {
    %c0_i32 = arith.constant 0 : i32
    %c0_i32_0 = arith.constant 0 : i32
    return %c0_i32, %arg0 : i32, i32
  }
  func.func @transform_4(%arg0: i32) -> (i32, i32) {
    %c0_i32 = arith.constant 0 : i32
    %c0_i32_0 = arith.constant 0 : i32
    %c0_i32_1 = arith.constant 0 : i32
    return %c0_i32, %c0_i32_0 : i32, i32
  }
  func.func @transform_5(%arg0: i32) -> (i32, i32) {
    %c0_i32 = arith.constant 0 : i32
    %c0_i32_0 = arith.constant 0 : i32
    %c0_i32_1 = arith.constant 0 : i32
    return %c0_i32, %c0_i32_0 : i32, i32
  }
  func.func @transform_6(%arg0: i32) -> (i32, i32) {
    %c0_i32 = arith.constant 0 : i32
    %c0_i32_0 = arith.constant 0 : i32
    %c0_i32_1 = arith.constant 0 : i32
    return %c0_i32, %c0_i32_0 : i32, i32
  }
  func.func @transform_7(%arg0: i32) -> (i32, i32) {
    %c0_i32 = arith.constant 0 : i32
    %c0_i32_0 = arith.constant 0 : i32
    %c0_i32_1 = arith.constant 0 : i32
    return %c0_i32, %c0_i32_0 : i32, i32
  }
  func.func @transform_8(%arg0: i32) -> (i32, i32) {
    %c0_i32 = arith.constant 0 : i32
    %c0_i32_0 = arith.constant 0 : i32
    %c0_i32_1 = arith.constant 0 : i32
    return %c0_i32, %c0_i32_0 : i32, i32
  }
  func.func @transform_9(%arg0: i32) -> (i32, i32) {
    %c0_i32 = arith.constant 0 : i32
    %c0_i32_0 = arith.constant 0 : i32
    %c0_i32_1 = arith.constant 0 : i32
    return %c0_i32, %c0_i32_0 : i32, i32
  }
  func.func @transform_10(%arg0: i32) -> (i32, i32) {
    %c0_i32 = arith.constant 0 : i32
    %c0_i32_0 = arith.constant 0 : i32
    %c0_i32_1 = arith.constant 0 : i32
    return %c0_i32, %c0_i32_0 : i32, i32
  }
  func.func @transform_11(%arg0: i32) -> (i32, i32) {
    %c0_i32 = arith.constant 0 : i32
    %c0_i32_0 = arith.constant 0 : i32
    %c0_i32_1 = arith.constant 0 : i32
    return %c0_i32, %c0_i32_0 : i32, i32
  }
  func.func @transform_12(%arg0: i32) -> (i32, i32) {
    %c0_i32 = arith.constant 0 : i32
    %c0_i32_0 = arith.constant 0 : i32
    return %c0_i32, %arg0 : i32, i32
  }
}

</mosaic_0001>

<llo_original>
// kernel: tpu_custom_call.1
$region0: #{tpu_custom_call.1}
  #allocation0 [shape = 'u32[]', space=smem, size = 0x4, offset = 0x4, fixed_abs, tag = 'smem constant byte address 0x4 - core index']
  #allocation1 [shape = 'u32[144,128]{1,0:T(1,128)}', space=vmem, size = 0x12000, scoped, tag = 'internal scratch']
  %s0 = inlined_call_operand.vmem [shape: bf16[256,256], index: 0, kind: input, shape index: {}]
  %s1 = inlined_call_operand.vmem [shape: f32[128,2], index: 1, kind: input, shape index: {}]
  %s2 = inlined_call_operand.hbm [shape: bf16[256,1024], index: 2, kind: input, shape index: {}]
  %s3 = inlined_call_operand.hbm [shape: f32[128,1024], index: 3, kind: input, shape index: {}]
  %s4 = inlined_call_operand.vmem [shape: bf16[64,128], index: 4, kind: input, shape index: {}]
  %s5 = inlined_call_operand.vmem [shape: f32[64,1], index: 5, kind: input, shape index: {}]
  %s6 = inlined_call_operand.vmem [shape: bf16[32,64], index: 6, kind: input, shape index: {}]
  %s7 = inlined_call_operand.vmem [shape: f32[32,1], index: 7, kind: input, shape index: {}]
  %s8 = inlined_call_operand.vmem [shape: bf16[128,32], index: 8, kind: input, shape index: {}]
  %s9 = inlined_call_operand.vmem [shape: f32[128,1], index: 9, kind: input, shape index: {}]
  %s10 = inlined_call_operand.vmem [shape: bf16[128,128], index: 10, kind: input, shape index: {}]
  %s11 = inlined_call_operand.vmem [shape: f32[128,1], index: 11, kind: input, shape index: {}]
  %s12 = inlined_call_operand.hbm [shape: f32[2,1024], index: 12, kind: output, shape index: {}]
  %s13 = sld [smem:[#allocation0]]
  $region89: #{tpu_custom_call.1} parent=0
    _
  %s15 = ssub.s32 1, %s13
  %s16 = scalar_select 0, %s15, %s13
  $region1: #{tpu_custom_call.1} parent=0
    #allocation2 [shape = 'u8[524288]{0}', space=vmem, size = 0x80000, scoped, tag = 'input window, operand 2']
    #allocation3 [shape = 's32[2]{0}', space=sflag, size = 0x8, scoped, tag = 'scoped memory for tpu_custom_call.1']
    #allocation4 [shape = 's32[2]{0}', space=sflag, size = 0x8, scoped, tag = 'scoped memory for tpu_custom_call.1']
    #allocation5 [shape = 'u8[524288]{0}', space=vmem, size = 0x80000, scoped, tag = 'input window, operand 3']
    #allocation6 [shape = 's32[2]{0}', space=sflag, size = 0x8, scoped, tag = 'scoped memory for tpu_custom_call.1']
    #allocation7 [shape = 'u8[8192]{0}', space=vmem, size = 0x2000, scoped, tag = 'output window, operand 0']
    %17 = vsyncpa [#allocation3], 0
    %s18 = scalar_lea.sflag [#allocation3], 1
    %19 = vsyncpa %s18, 0
    %20 = vsyncpa [#allocation6], 0
    %s21 = scalar_lea.sflag [#allocation6], 1
    %22 = vsyncpa %s21, 0
    %23 = vsyncpa [#allocation4], 0
    %s24 = scalar_lea.sflag [#allocation4], 1
    %25 = vsyncpa %s24, 0
    loop: start=0, step=1, limit=4
    $region2: #{tpu_custom_call.1} parent=1 // loop_pre_header
      _
    $region3: #{tpu_custom_call.1} parent=1 // loop_header
      %s27 = sphi 0, %s31
      %p28 = scmp.ge.s32.totalorder %s27, 4
      %s35 = sphi 0, %s35
      %s37 = sphi 0, %s35
      %s38 = sphi 0, %s37
      %s52 = sphi 0, %s38
      %s56 = sphi 0, %s56
      %s58 = sphi 0, %s56
      %s59 = sphi 0, %s58
      %s73 = sphi 0, %s59
      %s79 = sphi 0, %s81
      %s82 = sphi 0, %s79
      %s83 = sphi 0, %s82
      %s99 = sphi 0, %s83
      %s105 = sphi 0, %s107
      %s108 = sphi 0, %s105
      %s109 = sphi 0, %s108
      %s125 = sphi 0, %s109
      %s129 = sphi 0, %s129
      %s131 = sphi 0, %s129
      %s132 = sphi 0, %s131
      %s146 = sphi 0, %s132
      %s150 = sphi 0, %s150
      %s152 = sphi 0, %s150
      %s153 = sphi 0, %s152
      %s167 = sphi 0, %s153
      %s171 = sphi 0, %s171
      %s173 = sphi 0, %s171
      %s174 = sphi 0, %s173
      %s188 = sphi 0, %s174
      %s192 = sphi 0, %s192
      %s194 = sphi 0, %s192
      %s195 = sphi 0, %s194
      %s209 = sphi 0, %s195
      %s213 = sphi 0, %s213
      %s215 = sphi 0, %s213
      %s216 = sphi 0, %s215
      %s230 = sphi 0, %s216
      %s234 = sphi 0, %s234
      %s236 = sphi 0, %s234
      %s237 = sphi 0, %s236
      %s251 = sphi 0, %s237
      %s255 = sphi 0, %s255
      %s257 = sphi 0, %s255
      %s258 = sphi 0, %s257
      %s272 = sphi 0, %s258
      %s276 = sphi 0, %s276
      %s278 = sphi 0, %s276
      %s279 = sphi 0, %s278
      %s293 = sphi 0, %s279
      %s299 = sphi 0, %s301
      %s302 = sphi 0, %s299
      %s303 = sphi 0, %s302
      %s319 = sphi 0, %s303
    $region4: #{tpu_custom_call.1} parent=1 // loop_header_branch
      %30 = sbr.rel (%p28) target = $region8
    $region5: #{tpu_custom_call.1} parent=1 // loop_body
      %s32 = ssub.s32 %s27, 1
      %s33 = ssub.s32 %s27, 2
      %s34 = sadd.s32 %s27, 1
      %s36 = sadd.s32 %s35, 1
      %p39 = scmp.eq.s32.totalorder %s27, 1
      %p40 = scmp.ne.s32.totalorder %s35, %s37
      %p41 = scmp.eq.s32.totalorder %s27, 0
      %p42 = por %p40, %p41
      %p43 = scmp.ne.s32.totalorder %s35, %s37
      %p44 = scmp.eq.s32.totalorder %s32, 1
      %p45 = por %p43, %p44
      %p46 = scmp.ne.s32.totalorder %s37, %s38
      %p47 = scmp.eq.s32.totalorder %s32, 0
      %p48 = por %p46, %p47
      %p49 = scmp.ne.s32.totalorder %s37, %s38
      %p50 = scmp.eq.s32.totalorder %s33, 1
      %p51 = por %p49, %p50
      %p53 = scmp.ne.s32.totalorder %s38, %s52
      %p54 = scmp.eq.s32.totalorder %s33, 0
      %p55 = por %p53, %p54
      %s57 = sadd.s32 %s56, 1
      %p60 = scmp.eq.s32.totalorder %s27, 1
      %p61 = scmp.ne.s32.totalorder %s56, %s58
      %p62 = scmp.eq.s32.totalorder %s27, 0
      %p63 = por %p61, %p62
      %p64 = scmp.ne.s32.totalorder %s56, %s58
      %p65 = scmp.eq.s32.totalorder %s32, 1
      %p66 = por %p64, %p65
      %p67 = scmp.ne.s32.totalorder %s58, %s59
      %p68 = scmp.eq.s32.totalorder %s32, 0
      %p69 = por %p67, %p68
      %p70 = scmp.ne.s32.totalorder %s58, %s59
      %p71 = scmp.eq.s32.totalorder %s33, 1
      %p72 = por %p70, %p71
      %p74 = scmp.ne.s32.totalorder %s59, %s73
      %p75 = scmp.eq.s32.totalorder %s33, 0
      %p76 = por %p74, %p75
      %s77 = ssub.s32 %s27, %s34
      %p78 = scmp.eq.s32.totalorder %s77, 0
      %s80 = sadd.s32 %s79, 1
      %s81 = scalar_select %p78, %s79, %s80
      %p84 = pneg %p78
      %p85 = scmp.eq.s32.totalorder %s27, 1
      %p86 = por %p84, %p85
      %p87 = scmp.ne.s32.totalorder %s79, %s82
      %p88 = scmp.eq.s32.totalorder %s27, 0
      %p89 = por %p87, %p88
      %p90 = scmp.ne.s32.totalorder %s79, %s82
      %p91 = scmp.eq.s32.totalorder %s32, 1
      %p92 = por %p90, %p91
      %p93 = scmp.ne.s32.totalorder %s82, %s83
      %p94 = scmp.eq.s32.totalorder %s32, 0
      %p95 = por %p93, %p94
      %p96 = scmp.ne.s32.totalorder %s82, %s83
      %p97 = scmp.eq.s32.totalorder %s33, 1
      %p98 = por %p96, %p97
      %p100 = scmp.ne.s32.totalorder %s83, %s99
      %p101 = scmp.eq.s32.totalorder %s33, 0
      %p102 = por %p100, %p101
      %s103 = ssub.s32 %s27, %s34
      %p104 = scmp.eq.s32.totalorder %s103, 0
      %s106 = sadd.s32 %s105, 1
      %s107 = scalar_select %p104, %s105, %s106
      %p110 = pneg %p104
      %p111 = scmp.eq.s32.totalorder %s27, 1
      %p112 = por %p110, %p111
      %p113 = scmp.ne.s32.totalorder %s105, %s108
      %p114 = scmp.eq.s32.totalorder %s27, 0
      %p115 = por %p113, %p114
      %p116 = scmp.ne.s32.totalorder %s105, %s108
      %p117 = scmp.eq.s32.totalorder %s32, 1
      %p118 = por %p116, %p117
      %p119 = scmp.ne.s32.totalorder %s108, %s109
      %p120 = scmp.eq.s32.totalorder %s32, 0
      %p121 = por %p119, %p120
      %p122 = scmp.ne.s32.totalorder %s108, %s109
      %p123 = scmp.eq.s32.totalorder %s33, 1
      %p124 = por %p122, %p123
      %p126 = scmp.ne.s32.totalorder %s109, %s125
      %p127 = scmp.eq.s32.totalorder %s33, 0
      %p128 = por %p126, %p127
      %s130 = sadd.s32 %s129, 1
      %p133 = scmp.eq.s32.totalorder %s27, 1
      %p134 = scmp.ne.s32.totalorder %s129, %s131
      %p135 = scmp.eq.s32.totalorder %s27, 0
      %p136 = por %p134, %p135
      %p137 = scmp.ne.s32.totalorder %s129, %s131
      %p138 = scmp.eq.s32.totalorder %s32, 1
      %p139 = por %p137, %p138
      %p140 = scmp.ne.s32.totalorder %s131, %s132
      %p141 = scmp.eq.s32.totalorder %s32, 0
      %p142 = por %p140, %p141
      %p143 = scmp.ne.s32.totalorder %s131, %s132
      %p144 = scmp.eq.s32.totalorder %s33, 1
      %p145 = por %p143, %p144
      %p147 = scmp.ne.s32.totalorder %s132, %s146
      %p148 = scmp.eq.s32.totalorder %s33, 0
      %p149 = por %p147, %p148
      %s151 = sadd.s32 %s150, 1
      %p154 = scmp.eq.s32.totalorder %s27, 1
      %p155 = scmp.ne.s32.totalorder %s150, %s152
      %p156 = scmp.eq.s32.totalorder %s27, 0
      %p157 = por %p155, %p156
      %p158 = scmp.ne.s32.totalorder %s150, %s152
      %p159 = scmp.eq.s32.totalorder %s32, 1
      %p160 = por %p158, %p159
      %p161 = scmp.ne.s32.totalorder %s152, %s153
      %p162 = scmp.eq.s32.totalorder %s32, 0
      %p163 = por %p161, %p162
      %p164 = scmp.ne.s32.totalorder %s152, %s153
      %p165 = scmp.eq.s32.totalorder %s33, 1
      %p166 = por %p164, %p165
      %p168 = scmp.ne.s32.totalorder %s153, %s167
      %p169 = scmp.eq.s32.totalorder %s33, 0
      %p170 = por %p168, %p169
      %s172 = sadd.s32 %s171, 1
      %p175 = scmp.eq.s32.totalorder %s27, 1
      %p176 = scmp.ne.s32.totalorder %s171, %s173
      %p177 = scmp.eq.s32.totalorder %s27, 0
      %p178 = por %p176, %p177
      %p179 = scmp.ne.s32.totalorder %s171, %s173
      %p180 = scmp.eq.s32.totalorder %s32, 1
      %p181 = por %p179, %p180
      %p182 = scmp.ne.s32.totalorder %s173, %s174
      %p183 = scmp.eq.s32.totalorder %s32, 0
      %p184 = por %p182, %p183
      %p185 = scmp.ne.s32.totalorder %s173, %s174
      %p186 = scmp.eq.s32.totalorder %s33, 1
      %p187 = por %p185, %p186
      %p189 = scmp.ne.s32.totalorder %s174, %s188
      %p190 = scmp.eq.s32.totalorder %s33, 0
      %p191 = por %p189, %p190
      %s193 = sadd.s32 %s192, 1
      %p196 = scmp.eq.s32.totalorder %s27, 1
      %p197 = scmp.ne.s32.totalorder %s192, %s194
      %p198 = scmp.eq.s32.totalorder %s27, 0
      %p199 = por %p197, %p198
      %p200 = scmp.ne.s32.totalorder %s192, %s194
      %p201 = scmp.eq.s32.totalorder %s32, 1
      %p202 = por %p200, %p201
      %p203 = scmp.ne.s32.totalorder %s194, %s195
      %p204 = scmp.eq.s32.totalorder %s32, 0
      %p205 = por %p203, %p204
      %p206 = scmp.ne.s32.totalorder %s194, %s195
      %p207 = scmp.eq.s32.totalorder %s33, 1
      %p208 = por %p206, %p207
      %p210 = scmp.ne.s32.totalorder %s195, %s209
      %p211 = scmp.eq.s32.totalorder %s33, 0
      %p212 = por %p210, %p211
      %s214 = sadd.s32 %s213, 1
      %p217 = scmp.eq.s32.totalorder %s27, 1
      %p218 = scmp.ne.s32.totalorder %s213, %s215
      %p219 = scmp.eq.s32.totalorder %s27, 0
      %p220 = por %p218, %p219
      %p221 = scmp.ne.s32.totalorder %s213, %s215
      %p222 = scmp.eq.s32.totalorder %s32, 1
      %p223 = por %p221, %p222
      %p224 = scmp.ne.s32.totalorder %s215, %s216
      %p225 = scmp.eq.s32.totalorder %s32, 0
      %p226 = por %p224, %p225
      %p227 = scmp.ne.s32.totalorder %s215, %s216
      %p228 = scmp.eq.s32.totalorder %s33, 1
      %p229 = por %p227, %p228
      %p231 = scmp.ne.s32.totalorder %s216, %s230
      %p232 = scmp.eq.s32.totalorder %s33, 0
      %p233 = por %p231, %p232
      %s235 = sadd.s32 %s234, 1
      %p238 = scmp.eq.s32.totalorder %s27, 1
      %p239 = scmp.ne.s32.totalorder %s234, %s236
      %p240 = scmp.eq.s32.totalorder %s27, 0
      %p241 = por %p239, %p240
      %p242 = scmp.ne.s32.totalorder %s234, %s236
      %p243 = scmp.eq.s32.totalorder %s32, 1
      %p244 = por %p242, %p243
      %p245 = scmp.ne.s32.totalorder %s236, %s237
      %p246 = scmp.eq.s32.totalorder %s32, 0
      %p247 = por %p245, %p246
      %p248 = scmp.ne.s32.totalorder %s236, %s237
      %p249 = scmp.eq.s32.totalorder %s33, 1
      %p250 = por %p248, %p249
      %p252 = scmp.ne.s32.totalorder %s237, %s251
      %p253 = scmp.eq.s32.totalorder %s33, 0
      %p254 = por %p252, %p253
      %s256 = sadd.s32 %s255, 1
      %p259 = scmp.eq.s32.totalorder %s27, 1
      %p260 = scmp.ne.s32.totalorder %s255, %s257
      %p261 = scmp.eq.s32.totalorder %s27, 0
      %p262 = por %p260, %p261
      %p263 = scmp.ne.s32.totalorder %s255, %s257
      %p264 = scmp.eq.s32.totalorder %s32, 1
      %p265 = por %p263, %p264
      %p266 = scmp.ne.s32.totalorder %s257, %s258
      %p267 = scmp.eq.s32.totalorder %s32, 0
      %p268 = por %p266, %p267
      %p269 = scmp.ne.s32.totalorder %s257, %s258
      %p270 = scmp.eq.s32.totalorder %s33, 1
      %p271 = por %p269, %p270
      %p273 = scmp.ne.s32.totalorder %s258, %s272
      %p274 = scmp.eq.s32.totalorder %s33, 0
      %p275 = por %p273, %p274
      %s277 = sadd.s32 %s276, 1
      %p280 = scmp.eq.s32.totalorder %s27, 1
      %p281 = scmp.ne.s32.totalorder %s276, %s278
      %p282 = scmp.eq.s32.totalorder %s27, 0
      %p283 = por %p281, %p282
      %p284 = scmp.ne.s32.totalorder %s276, %s278
      %p285 = scmp.eq.s32.totalorder %s32, 1
      %p286 = por %p284, %p285
      %p287 = scmp.ne.s32.totalorder %s278, %s279
      %p288 = scmp.eq.s32.totalorder %s32, 0
      %p289 = por %p287, %p288
      %p290 = scmp.ne.s32.totalorder %s278, %s279
      %p291 = scmp.eq.s32.totalorder %s33, 1
      %p292 = por %p290, %p291
      %p294 = scmp.ne.s32.totalorder %s279, %s293
      %p295 = scmp.eq.s32.totalorder %s33, 0
      %p296 = por %p294, %p295
      %s297 = ssub.s32 %s27, %s34
      %p298 = scmp.eq.s32.totalorder %s297, 0
      %s300 = sadd.s32 %s299, 1
      %s301 = scalar_select %p298, %s299, %s300
      %p304 = pneg %p298
      %p305 = scmp.eq.s32.totalorder %s27, 1
      %p306 = por %p304, %p305
      %p307 = scmp.ne.s32.totalorder %s299, %s302
      %p308 = scmp.eq.s32.totalorder %s27, 0
      %p309 = por %p307, %p308
      %p310 = scmp.ne.s32.totalorder %s299, %s302
      %p311 = scmp.eq.s32.totalorder %s32, 1
      %p312 = por %p310, %p311
      %p313 = scmp.ne.s32.totalorder %s302, %s303
      %p314 = scmp.eq.s32.totalorder %s32, 0
      %p315 = por %p313, %p314
      %p316 = scmp.ne.s32.totalorder %s302, %s303
      %p317 = scmp.eq.s32.totalorder %s33, 1
      %p318 = por %p316, %p317
      %p320 = scmp.ne.s32.totalorder %s303, %s319
      %p321 = scmp.eq.s32.totalorder %s33, 0
      %p322 = por %p320, %p321
      %p323 = scmp.le.s32.totalorder 1, %s27
      %p324 = scmp.lt.s32.totalorder %s27, 3
      %p325 = pnand %p323, %p324
      %p326 = pneg %p325
      // Predicated region
      $region9: #{tpu_custom_call.1} parent=5 // pred_check
        _
      $region10: #{tpu_custom_call.1} parent=5 // pred_check_branch
        %328 = sbr.rel (%p325) target = $region12
      $region11: #{tpu_custom_call.1} parent=5 // pred_region
        %s329 = ssub.s32 %s27, 1
        // Predicated region
        $region13: #{tpu_custom_call.1} parent=11 // pred_check
          %p330 = pneg %p48
        $region14: #{tpu_custom_call.1} parent=11 // pred_check_branch
          %332 = sbr.rel (%p330) target = $region16
        $region15: #{tpu_custom_call.1} parent=11 // pred_region
          _
        $region16: #{tpu_custom_call.1} parent=11 // pred_fallthru
          _
        // Predicated region
        $region17: #{tpu_custom_call.1} parent=11 // pred_check
          %p333 = pneg %p69
        $region18: #{tpu_custom_call.1} parent=11 // pred_check_branch
          %335 = sbr.rel (%p333) target = $region20
        $region19: #{tpu_custom_call.1} parent=11 // pred_region
          _
        $region20: #{tpu_custom_call.1} parent=11 // pred_fallthru
          _
        // Predicated region
        $region21: #{tpu_custom_call.1} parent=11 // pred_check
          %p336 = pneg %p142
        $region22: #{tpu_custom_call.1} parent=11 // pred_check_branch
          %338 = sbr.rel (%p336) target = $region24
        $region23: #{tpu_custom_call.1} parent=11 // pred_region
          _
        $region24: #{tpu_custom_call.1} parent=11 // pred_fallthru
          _
        // Predicated region
        $region25: #{tpu_custom_call.1} parent=11 // pred_check
          %p339 = pneg %p163
        $region26: #{tpu_custom_call.1} parent=11 // pred_check_branch
          %341 = sbr.rel (%p339) target = $region28
        $region27: #{tpu_custom_call.1} parent=11 // pred_region
          _
        $region28: #{tpu_custom_call.1} parent=11 // pred_fallthru
          _
        // Predicated region
        $region29: #{tpu_custom_call.1} parent=11 // pred_check
          %p342 = pneg %p184
        $region30: #{tpu_custom_call.1} parent=11 // pred_check_branch
          %344 = sbr.rel (%p342) target = $region32
        $region31: #{tpu_custom_call.1} parent=11 // pred_region
          _
        $region32: #{tpu_custom_call.1} parent=11 // pred_fallthru
          _
        // Predicated region
        $region33: #{tpu_custom_call.1} parent=11 // pred_check
          %p345 = pneg %p205
        $region34: #{tpu_custom_call.1} parent=11 // pred_check_branch
          %347 = sbr.rel (%p345) target = $region36
        $region35: #{tpu_custom_call.1} parent=11 // pred_region
          _
        $region36: #{tpu_custom_call.1} parent=11 // pred_fallthru
          _
        // Predicated region
        $region37: #{tpu_custom_call.1} parent=11 // pred_check
          %p348 = pneg %p226
        $region38: #{tpu_custom_call.1} parent=11 // pred_check_branch
          %350 = sbr.rel (%p348) target = $region40
        $region39: #{tpu_custom_call.1} parent=11 // pred_region
          _
        $region40: #{tpu_custom_call.1} parent=11 // pred_fallthru
          _
        // Predicated region
        $region41: #{tpu_custom_call.1} parent=11 // pred_check
          %p351 = pneg %p247
        $region42: #{tpu_custom_call.1} parent=11 // pred_check_branch
          %353 = sbr.rel (%p351) target = $region44
        $region43: #{tpu_custom_call.1} parent=11 // pred_region
          _
        $region44: #{tpu_custom_call.1} parent=11 // pred_fallthru
          _
        // Predicated region
        $region45: #{tpu_custom_call.1} parent=11 // pred_check
          %p354 = pneg %p268
        $region46: #{tpu_custom_call.1} parent=11 // pred_check_branch
          %356 = sbr.rel (%p354) target = $region48
        $region47: #{tpu_custom_call.1} parent=11 // pred_region
          _
        $region48: #{tpu_custom_call.1} parent=11 // pred_fallthru
          _
        // Predicated region
        $region49: #{tpu_custom_call.1} parent=11 // pred_check
          %p357 = pneg %p289
        $region50: #{tpu_custom_call.1} parent=11 // pred_check_branch
          %359 = sbr.rel (%p357) target = $region52
        $region51: #{tpu_custom_call.1} parent=11 // pred_region
          _
        $region52: #{tpu_custom_call.1} parent=11 // pred_fallthru
          _
      $region12: #{tpu_custom_call.1} parent=5 // pred_fallthru
        _
      %p360 = scmp.lt.s32.totalorder %s27, 2
      // Predicated region
      $region53: #{tpu_custom_call.1} parent=5 // pred_check
        %p361 = pneg %p360
      $region54: #{tpu_custom_call.1} parent=5 // pred_check_branch
        %363 = sbr.rel (%p361) target = $region56
      $region55: #{tpu_custom_call.1} parent=5 // pred_region
        // Predicated region
        $region57: #{tpu_custom_call.1} parent=55 // pred_check
          %p364 = pneg %p89
        $region58: #{tpu_custom_call.1} parent=55 // pred_check_branch
          %366 = sbr.rel (%p364) target = $region60
        $region59: #{tpu_custom_call.1} parent=55 // pred_region
          %s367 = sand.u32 %s79, 1
          %s368 = scalar_lea.sflag [#allocation3], %s367
          %s369 = sand.u32 %s79, 1
          %s370 = smul.addr %s369, 512
          %s371 = scalar_lea.vmem [#allocation2], %s370
          %s372 = smul.u32 4, %s27
          %s374 = ssub.s32 8192, 8192
          %375 = vsyncadd %s368, %s374
          %s376 = smul.addr %s372, 64
          %s377 = scalar_lea.hbm %s2, %s376
          %s378 = sshll.u32 %s371, 4
          %s379 = int_to_ptr.vmem [resolvable:$true] %s378
          %384 = dma.hbm_to_vmem [thread:$0]  %s377, 8192, %s379, %s368, 512, 256, 16
        $region60: #{tpu_custom_call.1} parent=55 // pred_fallthru
          _
        // Predicated region
        $region61: #{tpu_custom_call.1} parent=55 // pred_check
          %p385 = pneg %p115
        $region62: #{tpu_custom_call.1} parent=55 // pred_check_branch
          %387 = sbr.rel (%p385) target = $region64
        $region63: #{tpu_custom_call.1} parent=55 // pred_region
          %s388 = sand.u32 %s105, 1
          %s389 = scalar_lea.sflag [#allocation6], %s388
          %s390 = sand.u32 %s105, 1
          %s391 = smul.addr %s390, 512
          %s392 = scalar_lea.vmem [#allocation5], %s391
          %s393 = smul.u32 4, %s27
          %s395 = ssub.s32 8192, 8192
          %396 = vsyncadd %s389, %s395
          %s397 = smul.addr %s393, 128
          %s398 = scalar_lea.hbm %s3, %s397
          %s399 = sshll.u32 %s392, 4
          %s400 = int_to_ptr.vmem [resolvable:$true] %s399
          %405 = dma.hbm_to_vmem [thread:$0]  %s398, 8192, %s400, %s389, 1024, 512, 32
        $region64: #{tpu_custom_call.1} parent=55 // pred_fallthru
          _
      $region56: #{tpu_custom_call.1} parent=5 // pred_fallthru
        _
      %p406 = scmp.le.s32.totalorder 1, %s27
      %p407 = scmp.lt.s32.totalorder %s27, 3
      %p408 = pnand %p406, %p407
      %p409 = pneg %p408
      // Predicated region
      $region65: #{tpu_custom_call.1} parent=5 // pred_check
        _
      $region66: #{tpu_custom_call.1} parent=5 // pred_check_branch
        %411 = sbr.rel (%p408) target = $region68
      $region67: #{tpu_custom_call.1} parent=5 // pred_region
        %s412 = ssub.s32 %s27, 1
        %s413 = sand.u32 %s82, 1
        %s414 = scalar_lea.sflag [#allocation3], %s413
        %s415 = sand.u32 %s82, 1
        %s416 = smul.addr %s415, 512
        %s417 = scalar_lea.vmem [#allocation2], %s416
        // Predicated region
        $region69: #{tpu_custom_call.1} parent=67 // pred_check
          %p418 = pneg %p95
        $region70: #{tpu_custom_call.1} parent=67 // pred_check_branch
          %420 = sbr.rel (%p418) target = $region72
        $region71: #{tpu_custom_call.1} parent=67 // pred_region
          %421 = dma.done %s414, 8192
        $region72: #{tpu_custom_call.1} parent=67 // pred_fallthru
          _
        %s422 = sand.u32 %s108, 1
        %s423 = scalar_lea.sflag [#allocation6], %s422
        %s424 = sand.u32 %s108, 1
        %s425 = smul.addr %s424, 512
        %s426 = scalar_lea.vmem [#allocation5], %s425
        // Predicated region
        $region73: #{tpu_custom_call.1} parent=67 // pred_check
          %p427 = pneg %p121
        $region74: #{tpu_custom_call.1} parent=67 // pred_check_branch
          %429 = sbr.rel (%p427) target = $region76
        $region75: #{tpu_custom_call.1} parent=67 // pred_region
          %430 = dma.done %s423, 8192
        $region76: #{tpu_custom_call.1} parent=67 // pred_fallthru
          _
        %p431 = pneg %p48
        %p432 = pneg %p45
        %p433 = pneg %p69
        %p434 = pneg %p66
        %s435 = sand.u32 %s82, 1
        %s436 = scalar_lea.sflag [#allocation3], %s435
        %s437 = sand.u32 %s82, 1
        %s438 = smul.addr %s437, 512
        %s439 = scalar_lea.vmem [#allocation2], %s438
        %p440 = pneg %p95
        %p441 = pneg %p92
        %s442 = sand.u32 %s108, 1
        %s443 = scalar_lea.sflag [#allocation6], %s442
        %s444 = sand.u32 %s108, 1
        %s445 = smul.addr %s444, 512
        %s446 = scalar_lea.vmem [#allocation5], %s445
        %p447 = pneg %p121
        %p448 = pneg %p118
        %p449 = pneg %p142
        %p450 = pneg %p139
        %p451 = pneg %p163
        %p452 = pneg %p160
        %p453 = pneg %p184
        %p454 = pneg %p181
        %p455 = pneg %p205
        %p456 = pneg %p202
        %p457 = pneg %p226
        %p458 = pneg %p223
        %p459 = pneg %p247
        %p460 = pneg %p244
        %p461 = pneg %p268
        %p462 = pneg %p265
        %p463 = pneg %p289
        %p464 = pneg %p286
        %p465 = pneg %p315
        %p466 = pneg %p312
        %s467 = sand.u32 %s302, 1
        %s468 = scalar_lea.sflag [#allocation4], %s467
        %s469 = sand.u32 %s302, 1
        %s470 = smul.addr %s469, 8
        %s471 = scalar_lea.vmem [#allocation7], %s470
        %s472 = smul.u32 4, %s32
        %s473 = smul.u32 4, %s32
        %s474 = smul.u32 4, %s32
        %v476 = vld [vmem:[%s0] sm:$0xff]
        %v477 = vld [vmem:[%s0 + $0x8] sm:$0xff]
        %v478 = vld [vmem:[%s0 + $0x10] sm:$0xff]
        %v479 = vld [vmem:[%s0 + $0x18] sm:$0xff]
        %v480 = vld [vmem:[%s0 + $0x20] sm:$0xff]
        %v481 = vld [vmem:[%s0 + $0x28] sm:$0xff]
        %v482 = vld [vmem:[%s0 + $0x30] sm:$0xff]
        %v483 = vld [vmem:[%s0 + $0x38] sm:$0xff]
        %v484 = vld [vmem:[%s0 + $0x40] sm:$0xff]
        %v485 = vld [vmem:[%s0 + $0x48] sm:$0xff]
        %v486 = vld [vmem:[%s0 + $0x50] sm:$0xff]
        %v487 = vld [vmem:[%s0 + $0x58] sm:$0xff]
        %v488 = vld [vmem:[%s0 + $0x60] sm:$0xff]
        %v489 = vld [vmem:[%s0 + $0x68] sm:$0xff]
        %v490 = vld [vmem:[%s0 + $0x70] sm:$0xff]
        %v491 = vld [vmem:[%s0 + $0x78] sm:$0xff]
        %v492 = vld [vmem:[%s0 + $0x80] sm:$0xff]
        %v493 = vld [vmem:[%s0 + $0x88] sm:$0xff]
        %v494 = vld [vmem:[%s0 + $0x90] sm:$0xff]
        %v495 = vld [vmem:[%s0 + $0x98] sm:$0xff]
        %v496 = vld [vmem:[%s0 + $0xa0] sm:$0xff]
        %v497 = vld [vmem:[%s0 + $0xa8] sm:$0xff]
        %v498 = vld [vmem:[%s0 + $0xb0] sm:$0xff]
        %v499 = vld [vmem:[%s0 + $0xb8] sm:$0xff]
        %v500 = vld [vmem:[%s0 + $0xc0] sm:$0xff]
        %v501 = vld [vmem:[%s0 + $0xc8] sm:$0xff]
        %v502 = vld [vmem:[%s0 + $0xd0] sm:$0xff]
        %v503 = vld [vmem:[%s0 + $0xd8] sm:$0xff]
        %v504 = vld [vmem:[%s0 + $0xe0] sm:$0xff]
        %v505 = vld [vmem:[%s0 + $0xe8] sm:$0xff]
        %v506 = vld [vmem:[%s0 + $0xf0] sm:$0xff]
        %v507 = vld [vmem:[%s0 + $0xf8] sm:$0xff]
        %v508 = vld [vmem:[%s417] sm:$0xff]
        %v509 = vld [vmem:[%s417 + $0x8] sm:$0xff]
        %v510 = vld [vmem:[%s417 + $0x10] sm:$0xff]
        %v511 = vld [vmem:[%s417 + $0x18] sm:$0xff]
        %v512 = vld [vmem:[%s417 + $0x20] sm:$0xff]
        %v513 = vld [vmem:[%s417 + $0x28] sm:$0xff]
        %v514 = vld [vmem:[%s417 + $0x30] sm:$0xff]
        %v515 = vld [vmem:[%s417 + $0x38] sm:$0xff]
        %v516 = vld [vmem:[%s417 + $0x40] sm:$0xff]
        %v517 = vld [vmem:[%s417 + $0x48] sm:$0xff]
        %v518 = vld [vmem:[%s417 + $0x50] sm:$0xff]
        %v519 = vld [vmem:[%s417 + $0x58] sm:$0xff]
        %v520 = vld [vmem:[%s417 + $0x60] sm:$0xff]
        %v521 = vld [vmem:[%s417 + $0x68] sm:$0xff]
        %v522 = vld [vmem:[%s417 + $0x70] sm:$0xff]
        %v523 = vld [vmem:[%s417 + $0x78] sm:$0xff]
        %v524 = vld [vmem:[%s417 + $0x80] sm:$0xff]
        %v525 = vld [vmem:[%s417 + $0x88] sm:$0xff]
        %v526 = vld [vmem:[%s417 + $0x90] sm:$0xff]
        %v527 = vld [vmem:[%s417 + $0x98] sm:$0xff]
        %v528 = vld [vmem:[%s417 + $0xa0] sm:$0xff]
        %v529 = vld [vmem:[%s417 + $0xa8] sm:$0xff]
        %v530 = vld [vmem:[%s417 + $0xb0] sm:$0xff]
        %v531 = vld [vmem:[%s417 + $0xb8] sm:$0xff]
        %v532 = vld [vmem:[%s417 + $0xc0] sm:$0xff]
        %v533 = vld [vmem:[%s417 + $0xc8] sm:$0xff]
        %v534 = vld [vmem:[%s417 + $0xd0] sm:$0xff]
        %v535 = vld [vmem:[%s417 + $0xd8] sm:$0xff]
        %v536 = vld [vmem:[%s417 + $0xe0] sm:$0xff]
        %v537 = vld [vmem:[%s417 + $0xe8] sm:$0xff]
        %v538 = vld [vmem:[%s417 + $0xf0] sm:$0xff]
        %v539 = vld [vmem:[%s417 + $0xf8] sm:$0xff]
        %v540 = vld [vmem:[%s417 + $0x100] sm:$0xff]
        %v541 = vld [vmem:[%s417 + $0x108] sm:$0xff]
        %v542 = vld [vmem:[%s417 + $0x110] sm:$0xff]
        %v543 = vld [vmem:[%s417 + $0x118] sm:$0xff]
        %v544 = vld [vmem:[%s417 + $0x120] sm:$0xff]
        %v545 = vld [vmem:[%s417 + $0x128] sm:$0xff]
        %v546 = vld [vmem:[%s417 + $0x130] sm:$0xff]
        %v547 = vld [vmem:[%s417 + $0x138] sm:$0xff]
        %v548 = vld [vmem:[%s417 + $0x140] sm:$0xff]
        %v549 = vld [vmem:[%s417 + $0x148] sm:$0xff]
        %v550 = vld [vmem:[%s417 + $0x150] sm:$0xff]
        %v551 = vld [vmem:[%s417 + $0x158] sm:$0xff]
        %v552 = vld [vmem:[%s417 + $0x160] sm:$0xff]
        %v553 = vld [vmem:[%s417 + $0x168] sm:$0xff]
        %v554 = vld [vmem:[%s417 + $0x170] sm:$0xff]
        %v555 = vld [vmem:[%s417 + $0x178] sm:$0xff]
        %v556 = vld [vmem:[%s417 + $0x180] sm:$0xff]
        %v557 = vld [vmem:[%s417 + $0x188] sm:$0xff]
        %v558 = vld [vmem:[%s417 + $0x190] sm:$0xff]
        %v559 = vld [vmem:[%s417 + $0x198] sm:$0xff]
        %v560 = vld [vmem:[%s417 + $0x1a0] sm:$0xff]
        %v561 = vld [vmem:[%s417 + $0x1a8] sm:$0xff]
        %v562 = vld [vmem:[%s417 + $0x1b0] sm:$0xff]
        %v563 = vld [vmem:[%s417 + $0x1b8] sm:$0xff]
        %v564 = vld [vmem:[%s417 + $0x1c0] sm:$0xff]
        %v565 = vld [vmem:[%s417 + $0x1c8] sm:$0xff]
        %v566 = vld [vmem:[%s417 + $0x1d0] sm:$0xff]
        %v567 = vld [vmem:[%s417 + $0x1d8] sm:$0xff]
        %v568 = vld [vmem:[%s417 + $0x1e0] sm:$0xff]
        %v569 = vld [vmem:[%s417 + $0x1e8] sm:$0xff]
        %v570 = vld [vmem:[%s417 + $0x1f0] sm:$0xff]
        %v571 = vld [vmem:[%s417 + $0x1f8] sm:$0xff]
        %v572 = vld [vmem:[%s426] sm:$0xff]
        %v573 = vld [vmem:[%s426 + $0x8] sm:$0xff]
        %v574 = vld [vmem:[%s426 + $0x10] sm:$0xff]
        %v575 = vld [vmem:[%s426 + $0x18] sm:$0xff]
        %v576 = vld [vmem:[%s426 + $0x20] sm:$0xff]
        %v577 = vld [vmem:[%s426 + $0x28] sm:$0xff]
        %v578 = vld [vmem:[%s426 + $0x30] sm:$0xff]
        %v579 = vld [vmem:[%s426 + $0x38] sm:$0xff]
        %v580 = vld [vmem:[%s426 + $0x40] sm:$0xff]
        %v581 = vld [vmem:[%s426 + $0x48] sm:$0xff]
        %v582 = vld [vmem:[%s426 + $0x50] sm:$0xff]
        %v583 = vld [vmem:[%s426 + $0x58] sm:$0xff]
        %v584 = vld [vmem:[%s426 + $0x60] sm:$0xff]
        %v585 = vld [vmem:[%s426 + $0x68] sm:$0xff]
        %v586 = vld [vmem:[%s426 + $0x70] sm:$0xff]
        %v587 = vld [vmem:[%s426 + $0x78] sm:$0xff]
        %v588 = vld [vmem:[%s426 + $0x80] sm:$0xff]
        %v589 = vld [vmem:[%s426 + $0x88] sm:$0xff]
        %v590 = vld [vmem:[%s426 + $0x90] sm:$0xff]
        %v591 = vld [vmem:[%s426 + $0x98] sm:$0xff]
        %v592 = vld [vmem:[%s426 + $0xa0] sm:$0xff]
        %v593 = vld [vmem:[%s426 + $0xa8] sm:$0xff]
        %v594 = vld [vmem:[%s426 + $0xb0] sm:$0xff]
        %v595 = vld [vmem:[%s426 + $0xb8] sm:$0xff]
        %v596 = vld [vmem:[%s426 + $0xc0] sm:$0xff]
        %v597 = vld [vmem:[%s426 + $0xc8] sm:$0xff]
        %v598 = vld [vmem:[%s426 + $0xd0] sm:$0xff]
        %v599 = vld [vmem:[%s426 + $0xd8] sm:$0xff]
        %v600 = vld [vmem:[%s426 + $0xe0] sm:$0xff]
        %v601 = vld [vmem:[%s426 + $0xe8] sm:$0xff]
        %v602 = vld [vmem:[%s426 + $0xf0] sm:$0xff]
        %v603 = vld [vmem:[%s426 + $0xf8] sm:$0xff]
        %v604 = vld [vmem:[%s426 + $0x100] sm:$0xff]
        %v605 = vld [vmem:[%s426 + $0x108] sm:$0xff]
        %v606 = vld [vmem:[%s426 + $0x110] sm:$0xff]
        %v607 = vld [vmem:[%s426 + $0x118] sm:$0xff]
        %v608 = vld [vmem:[%s426 + $0x120] sm:$0xff]
        %v609 = vld [vmem:[%s426 + $0x128] sm:$0xff]
        %v610 = vld [vmem:[%s426 + $0x130] sm:$0xff]
        %v611 = vld [vmem:[%s426 + $0x138] sm:$0xff]
        %v612 = vld [vmem:[%s426 + $0x140] sm:$0xff]
        %v613 = vld [vmem:[%s426 + $0x148] sm:$0xff]
        %v614 = vld [vmem:[%s426 + $0x150] sm:$0xff]
        %v615 = vld [vmem:[%s426 + $0x158] sm:$0xff]
        %v616 = vld [vmem:[%s426 + $0x160] sm:$0xff]
        %v617 = vld [vmem:[%s426 + $0x168] sm:$0xff]
        %v618 = vld [vmem:[%s426 + $0x170] sm:$0xff]
        %v619 = vld [vmem:[%s426 + $0x178] sm:$0xff]
        %v620 = vld [vmem:[%s426 + $0x180] sm:$0xff]
        %v621 = vld [vmem:[%s426 + $0x188] sm:$0xff]
        %v622 = vld [vmem:[%s426 + $0x190] sm:$0xff]
        %v623 = vld [vmem:[%s426 + $0x198] sm:$0xff]
        %v624 = vld [vmem:[%s426 + $0x1a0] sm:$0xff]
        %v625 = vld [vmem:[%s426 + $0x1a8] sm:$0xff]
        %v626 = vld [vmem:[%s426 + $0x1b0] sm:$0xff]
        %v627 = vld [vmem:[%s426 + $0x1b8] sm:$0xff]
        %v628 = vld [vmem:[%s426 + $0x1c0] sm:$0xff]
        %v629 = vld [vmem:[%s426 + $0x1c8] sm:$0xff]
        %v630 = vld [vmem:[%s426 + $0x1d0] sm:$0xff]
        %v631 = vld [vmem:[%s426 + $0x1d8] sm:$0xff]
        %v632 = vld [vmem:[%s426 + $0x1e0] sm:$0xff]
        %v633 = vld [vmem:[%s426 + $0x1e8] sm:$0xff]
        %v634 = vld [vmem:[%s426 + $0x1f0] sm:$0xff]
        %v635 = vld [vmem:[%s426 + $0x1f8] sm:$0xff]
        %v636 = vld [vmem:[%s1] sm:$0xff]
        %v637 = vld [vmem:[%s1 + $0x8] sm:$0xff]
        %v638 = vld [vmem:[%s1 + $0x10] sm:$0xff]
        %v639 = vld [vmem:[%s1 + $0x18] sm:$0xff]
        %v640 = vld [vmem:[%s1 + $0x20] sm:$0xff]
        %v641 = vld [vmem:[%s1 + $0x28] sm:$0xff]
        %v642 = vld [vmem:[%s1 + $0x30] sm:$0xff]
        %v643 = vld [vmem:[%s1 + $0x38] sm:$0xff]
        %v644 = vld [vmem:[%s1 + $0x40] sm:$0xff]
        %v645 = vld [vmem:[%s1 + $0x48] sm:$0xff]
        %v646 = vld [vmem:[%s1 + $0x50] sm:$0xff]
        %v647 = vld [vmem:[%s1 + $0x58] sm:$0xff]
        %v648 = vld [vmem:[%s1 + $0x60] sm:$0xff]
        %v649 = vld [vmem:[%s1 + $0x68] sm:$0xff]
        %v650 = vld [vmem:[%s1 + $0x70] sm:$0xff]
        %v651 = vld [vmem:[%s1 + $0x78] sm:$0xff]
        %v652 = vld [vmem:[%s4] sm:$0xf]
        %v653 = vld [vmem:[%s4 + $0x4] sm:$0xf]
        %v654 = vld [vmem:[%s4 + $0x8] sm:$0xf]
        %v655 = vld [vmem:[%s4 + $0xc] sm:$0xf]
        %v656 = vld [vmem:[%s4 + $0x10] sm:$0xf]
        %v657 = vld [vmem:[%s4 + $0x14] sm:$0xf]
        %v658 = vld [vmem:[%s4 + $0x18] sm:$0xf]
        %v659 = vld [vmem:[%s4 + $0x1c] sm:$0xf]
        %v660 = vld [vmem:[%s5] sm:$0xff]
        %v661 = vld [vmem:[%s5 + $0x8] sm:$0xff]
        %v662 = vld [vmem:[%s5 + $0x10] sm:$0xff]
        %v663 = vld [vmem:[%s5 + $0x18] sm:$0xff]
        %v664 = vld [vmem:[%s5 + $0x20] sm:$0xff]
        %v665 = vld [vmem:[%s5 + $0x28] sm:$0xff]
        %v666 = vld [vmem:[%s5 + $0x30] sm:$0xff]
        %v667 = vld [vmem:[%s5 + $0x38] sm:$0xff]
        %v668 = vld [vmem:[%s6] sm:$0xf]
        %v669 = vld [vmem:[%s6 + $0x4] sm:$0xf]
        %v670 = vld [vmem:[%s6 + $0x8] sm:$0xf]
        %v671 = vld [vmem:[%s6 + $0xc] sm:$0xf]
        %v672 = vld [vmem:[%s7] sm:$0xff]
        %v673 = vld [vmem:[%s7 + $0x8] sm:$0xff]
        %v674 = vld [vmem:[%s7 + $0x10] sm:$0xff]
        %v675 = vld [vmem:[%s7 + $0x18] sm:$0xff]
        %v676 = vld [vmem:[%s8] sm:$0xf]
        %v677 = vld [vmem:[%s8 + $0x4] sm:$0xf]
        %v678 = vld [vmem:[%s8 + $0x8] sm:$0xf]
        %v679 = vld [vmem:[%s8 + $0xc] sm:$0xf]
        %v680 = vld [vmem:[%s8 + $0x10] sm:$0xf]
        %v681 = vld [vmem:[%s8 + $0x14] sm:$0xf]
        %v682 = vld [vmem:[%s8 + $0x18] sm:$0xf]
        %v683 = vld [vmem:[%s8 + $0x1c] sm:$0xf]
        %v684 = vld [vmem:[%s8 + $0x20] sm:$0xf]
        %v685 = vld [vmem:[%s8 + $0x24] sm:$0xf]
        %v686 = vld [vmem:[%s8 + $0x28] sm:$0xf]
        %v687 = vld [vmem:[%s8 + $0x2c] sm:$0xf]
        %v688 = vld [vmem:[%s8 + $0x30] sm:$0xf]
        %v689 = vld [vmem:[%s8 + $0x34] sm:$0xf]
        %v690 = vld [vmem:[%s8 + $0x38] sm:$0xf]
        %v691 = vld [vmem:[%s8 + $0x3c] sm:$0xf]
        %v692 = vld [vmem:[%s9] sm:$0xff]
        %v693 = vld [vmem:[%s9 + $0x8] sm:$0xff]
        %v694 = vld [vmem:[%s9 + $0x10] sm:$0xff]
        %v695 = vld [vmem:[%s9 + $0x18] sm:$0xff]
        %v696 = vld [vmem:[%s9 + $0x20] sm:$0xff]
        %v697 = vld [vmem:[%s9 + $0x28] sm:$0xff]
        %v698 = vld [vmem:[%s9 + $0x30] sm:$0xff]
        %v699 = vld [vmem:[%s9 + $0x38] sm:$0xff]
        %v700 = vld [vmem:[%s9 + $0x40] sm:$0xff]
        %v701 = vld [vmem:[%s9 + $0x48] sm:$0xff]
        %v702 = vld [vmem:[%s9 + $0x50] sm:$0xff]
        %v703 = vld [vmem:[%s9 + $0x58] sm:$0xff]
        %v704 = vld [vmem:[%s9 + $0x60] sm:$0xff]
        %v705 = vld [vmem:[%s9 + $0x68] sm:$0xff]
        %v706 = vld [vmem:[%s9 + $0x70] sm:$0xff]
        %v707 = vld [vmem:[%s9 + $0x78] sm:$0xff]
        %v708 = vld [vmem:[%s10] sm:$0xf]
        %v709 = vld [vmem:[%s10 + $0x4] sm:$0xf]
        %v710 = vld [vmem:[%s10 + $0x8] sm:$0xf]
        %v711 = vld [vmem:[%s10 + $0xc] sm:$0xf]
        %v712 = vld [vmem:[%s10 + $0x10] sm:$0xf]
        %v713 = vld [vmem:[%s10 + $0x14] sm:$0xf]
        %v714 = vld [vmem:[%s10 + $0x18] sm:$0xf]
        %v715 = vld [vmem:[%s10 + $0x1c] sm:$0xf]
        %v716 = vld [vmem:[%s10 + $0x20] sm:$0xf]
        %v717 = vld [vmem:[%s10 + $0x24] sm:$0xf]
        %v718 = vld [vmem:[%s10 + $0x28] sm:$0xf]
        %v719 = vld [vmem:[%s10 + $0x2c] sm:$0xf]
        %v720 = vld [vmem:[%s10 + $0x30] sm:$0xf]
        %v721 = vld [vmem:[%s10 + $0x34] sm:$0xf]
        %v722 = vld [vmem:[%s10 + $0x38] sm:$0xf]
        %v723 = vld [vmem:[%s10 + $0x3c] sm:$0xf]
        %v724 = vld [vmem:[%s11] sm:$0xff]
        %v725 = vld [vmem:[%s11 + $0x8] sm:$0xff]
        %v726 = vld [vmem:[%s11 + $0x10] sm:$0xff]
        %v727 = vld [vmem:[%s11 + $0x18] sm:$0xff]
        %v728 = vld [vmem:[%s11 + $0x20] sm:$0xff]
        %v729 = vld [vmem:[%s11 + $0x28] sm:$0xff]
        %v730 = vld [vmem:[%s11 + $0x30] sm:$0xff]
        %v731 = vld [vmem:[%s11 + $0x38] sm:$0xff]
        %v732 = vld [vmem:[%s11 + $0x40] sm:$0xff]
        %v733 = vld [vmem:[%s11 + $0x48] sm:$0xff]
        %v734 = vld [vmem:[%s11 + $0x50] sm:$0xff]
        %v735 = vld [vmem:[%s11 + $0x58] sm:$0xff]
        %v736 = vld [vmem:[%s11 + $0x60] sm:$0xff]
        %v737 = vld [vmem:[%s11 + $0x68] sm:$0xff]
        %v738 = vld [vmem:[%s11 + $0x70] sm:$0xff]
        %v739 = vld [vmem:[%s11 + $0x78] sm:$0xff]
        %v772 = vunpack.c.l.b16 %v476
        %v773 = vunpack.c.h.b16 %v476
        %v774 = vunpack.c.l.b16 %v477
        %v775 = vunpack.c.h.b16 %v477
        %v776 = vunpack.c.l.b16 %v478
        %v777 = vunpack.c.h.b16 %v478
        %v778 = vunpack.c.l.b16 %v479
        %v779 = vunpack.c.h.b16 %v479
        %v780 = vunpack.c.l.b16 %v480
        %v781 = vunpack.c.h.b16 %v480
        %v782 = vunpack.c.l.b16 %v481
        %v783 = vunpack.c.h.b16 %v481
        %v784 = vunpack.c.l.b16 %v482
        %v785 = vunpack.c.h.b16 %v482
        %v786 = vunpack.c.l.b16 %v483
        %v787 = vunpack.c.h.b16 %v483
        %v788 = vunpack.c.l.b16 %v484
        %v789 = vunpack.c.h.b16 %v484
        %v790 = vunpack.c.l.b16 %v485
        %v791 = vunpack.c.h.b16 %v485
        %v792 = vunpack.c.l.b16 %v486
        %v793 = vunpack.c.h.b16 %v486
        %v794 = vunpack.c.l.b16 %v487
        %v795 = vunpack.c.h.b16 %v487
        %v796 = vunpack.c.l.b16 %v488
        %v797 = vunpack.c.h.b16 %v488
        %v798 = vunpack.c.l.b16 %v489
        %v799 = vunpack.c.h.b16 %v489
        %v800 = vunpack.c.l.b16 %v490
        %v801 = vunpack.c.h.b16 %v490
        %v802 = vunpack.c.l.b16 %v491
        %v803 = vunpack.c.h.b16 %v491
        %v804 = vunpack.c.l.b16 %v492
        %v805 = vunpack.c.h.b16 %v492
        %v806 = vunpack.c.l.b16 %v493
        %v807 = vunpack.c.h.b16 %v493
        %v808 = vunpack.c.l.b16 %v494
        %v809 = vunpack.c.h.b16 %v494
        %v810 = vunpack.c.l.b16 %v495
        %v811 = vunpack.c.h.b16 %v495
        %v812 = vunpack.c.l.b16 %v496
        %v813 = vunpack.c.h.b16 %v496
        %v814 = vunpack.c.l.b16 %v497
        %v815 = vunpack.c.h.b16 %v497
        %v816 = vunpack.c.l.b16 %v498
        %v817 = vunpack.c.h.b16 %v498
        %v818 = vunpack.c.l.b16 %v499
        %v819 = vunpack.c.h.b16 %v499
        %v820 = vunpack.c.l.b16 %v500
        %v821 = vunpack.c.h.b16 %v500
        %v822 = vunpack.c.l.b16 %v501
        %v823 = vunpack.c.h.b16 %v501
        %v824 = vunpack.c.l.b16 %v502
        %v825 = vunpack.c.h.b16 %v502
        %v826 = vunpack.c.l.b16 %v503
        %v827 = vunpack.c.h.b16 %v503
        %v828 = vunpack.c.l.b16 %v504
        %v829 = vunpack.c.h.b16 %v504
        %v830 = vunpack.c.l.b16 %v505
        %v831 = vunpack.c.h.b16 %v505
        %v832 = vunpack.c.l.b16 %v506
        %v833 = vunpack.c.h.b16 %v506
        %v834 = vunpack.c.l.b16 %v507
        %v835 = vunpack.c.h.b16 %v507
        %v836 = vpack.c.b16 %v774, %v772
        %v837 = vpack.c.b16 %v775, %v773
        %v838 = vpack.c.b16 %v778, %v776
        %v839 = vpack.c.b16 %v779, %v777
        %v840 = vpack.c.b16 %v782, %v780
        %v841 = vpack.c.b16 %v783, %v781
        %v842 = vpack.c.b16 %v786, %v784
        %v843 = vpack.c.b16 %v787, %v785
        %v844 = vpack.c.b16 %v790, %v788
        %v845 = vpack.c.b16 %v791, %v789
        %v846 = vpack.c.b16 %v794, %v792
        %v847 = vpack.c.b16 %v795, %v793
        %v848 = vpack.c.b16 %v798, %v796
        %v849 = vpack.c.b16 %v799, %v797
        %v850 = vpack.c.b16 %v802, %v800
        %v851 = vpack.c.b16 %v803, %v801
        %v852 = vpack.c.b16 %v806, %v804
        %v853 = vpack.c.b16 %v807, %v805
        %v854 = vpack.c.b16 %v810, %v808
        %v855 = vpack.c.b16 %v811, %v809
        %v856 = vpack.c.b16 %v814, %v812
        %v857 = vpack.c.b16 %v815, %v813
        %v858 = vpack.c.b16 %v818, %v816
        %v859 = vpack.c.b16 %v819, %v817
        %v860 = vpack.c.b16 %v822, %v820
        %v861 = vpack.c.b16 %v823, %v821
        %v862 = vpack.c.b16 %v826, %v824
        %v863 = vpack.c.b16 %v827, %v825
        %v864 = vpack.c.b16 %v830, %v828
        %v865 = vpack.c.b16 %v831, %v829
        %v866 = vpack.c.b16 %v834, %v832
        %v867 = vpack.c.b16 %v835, %v833
        %v964 = vunpack.c.l.b16 %v508
        %v965 = vunpack.c.h.b16 %v508
        %v966 = vunpack.c.l.b16 %v509
        %v967 = vunpack.c.h.b16 %v509
        %v968 = vunpack.c.l.b16 %v510
        %v969 = vunpack.c.h.b16 %v510
        %v970 = vunpack.c.l.b16 %v511
        %v971 = vunpack.c.h.b16 %v511
        %v972 = vunpack.c.l.b16 %v512
        %v973 = vunpack.c.h.b16 %v512
        %v974 = vunpack.c.l.b16 %v513
        %v975 = vunpack.c.h.b16 %v513
        %v976 = vunpack.c.l.b16 %v514
        %v977 = vunpack.c.h.b16 %v514
        %v978 = vunpack.c.l.b16 %v515
        %v979 = vunpack.c.h.b16 %v515
        %v980 = vunpack.c.l.b16 %v516
        %v981 = vunpack.c.h.b16 %v516
        %v982 = vunpack.c.l.b16 %v517
        %v983 = vunpack.c.h.b16 %v517
        %v984 = vunpack.c.l.b16 %v518
        %v985 = vunpack.c.h.b16 %v518
        %v986 = vunpack.c.l.b16 %v519
        %v987 = vunpack.c.h.b16 %v519
        %v988 = vunpack.c.l.b16 %v520
        %v989 = vunpack.c.h.b16 %v520
        %v990 = vunpack.c.l.b16 %v521
        %v991 = vunpack.c.h.b16 %v521
        %v992 = vunpack.c.l.b16 %v522
        %v993 = vunpack.c.h.b16 %v522
        %v994 = vunpack.c.l.b16 %v523
        %v995 = vunpack.c.h.b16 %v523
        %v996 = vunpack.c.l.b16 %v524
        %v997 = vunpack.c.h.b16 %v524
        %v998 = vunpack.c.l.b16 %v525
        %v999 = vunpack.c.h.b16 %v525
        %v1000 = vunpack.c.l.b16 %v526
        %v1001 = vunpack.c.h.b16 %v526
        %v1002 = vunpack.c.l.b16 %v527
        %v1003 = vunpack.c.h.b16 %v527
        %v1004 = vunpack.c.l.b16 %v528
        %v1005 = vunpack.c.h.b16 %v528
        %v1006 = vunpack.c.l.b16 %v529
        %v1007 = vunpack.c.h.b16 %v529
        %v1008 = vunpack.c.l.b16 %v530
        %v1009 = vunpack.c.h.b16 %v530
        %v1010 = vunpack.c.l.b16 %v531
        %v1011 = vunpack.c.h.b16 %v531
        %v1012 = vunpack.c.l.b16 %v532
        %v1013 = vunpack.c.h.b16 %v532
        %v1014 = vunpack.c.l.b16 %v533
        %v1015 = vunpack.c.h.b16 %v533
        %v1016 = vunpack.c.l.b16 %v534
        %v1017 = vunpack.c.h.b16 %v534
        %v1018 = vunpack.c.l.b16 %v535
        %v1019 = vunpack.c.h.b16 %v535
        %v1020 = vunpack.c.l.b16 %v536
        %v1021 = vunpack.c.h.b16 %v536
        %v1022 = vunpack.c.l.b16 %v537
        %v1023 = vunpack.c.h.b16 %v537
        %v1024 = vunpack.c.l.b16 %v538
        %v1025 = vunpack.c.h.b16 %v538
        %v1026 = vunpack.c.l.b16 %v539
        %v1027 = vunpack.c.h.b16 %v539
        %v1028 = vunpack.c.l.b16 %v540
        %v1029 = vunpack.c.h.b16 %v540
        %v1030 = vunpack.c.l.b16 %v541
        %v1031 = vunpack.c.h.b16 %v541
        %v1032 = vunpack.c.l.b16 %v542
        %v1033 = vunpack.c.h.b16 %v542
        %v1034 = vunpack.c.l.b16 %v543
        %v1035 = vunpack.c.h.b16 %v543
        %v1036 = vunpack.c.l.b16 %v544
        %v1037 = vunpack.c.h.b16 %v544
        %v1038 = vunpack.c.l.b16 %v545
        %v1039 = vunpack.c.h.b16 %v545
        %v1040 = vunpack.c.l.b16 %v546
        %v1041 = vunpack.c.h.b16 %v546
        %v1042 = vunpack.c.l.b16 %v547
        %v1043 = vunpack.c.h.b16 %v547
        %v1044 = vunpack.c.l.b16 %v548
        %v1045 = vunpack.c.h.b16 %v548
        %v1046 = vunpack.c.l.b16 %v549
        %v1047 = vunpack.c.h.b16 %v549
        %v1048 = vunpack.c.l.b16 %v550
        %v1049 = vunpack.c.h.b16 %v550
        %v1050 = vunpack.c.l.b16 %v551
        %v1051 = vunpack.c.h.b16 %v551
        %v1052 = vunpack.c.l.b16 %v552
        %v1053 = vunpack.c.h.b16 %v552
        %v1054 = vunpack.c.l.b16 %v553
        %v1055 = vunpack.c.h.b16 %v553
        %v1056 = vunpack.c.l.b16 %v554
        %v1057 = vunpack.c.h.b16 %v554
        %v1058 = vunpack.c.l.b16 %v555
        %v1059 = vunpack.c.h.b16 %v555
        %v1060 = vunpack.c.l.b16 %v556
        %v1061 = vunpack.c.h.b16 %v556
        %v1062 = vunpack.c.l.b16 %v557
        %v1063 = vunpack.c.h.b16 %v557
        %v1064 = vunpack.c.l.b16 %v558
        %v1065 = vunpack.c.h.b16 %v558
        %v1066 = vunpack.c.l.b16 %v559
        %v1067 = vunpack.c.h.b16 %v559
        %v1068 = vunpack.c.l.b16 %v560
        %v1069 = vunpack.c.h.b16 %v560
        %v1070 = vunpack.c.l.b16 %v561
        %v1071 = vunpack.c.h.b16 %v561
        %v1072 = vunpack.c.l.b16 %v562
        %v1073 = vunpack.c.h.b16 %v562
        %v1074 = vunpack.c.l.b16 %v563
        %v1075 = vunpack.c.h.b16 %v563
        %v1076 = vunpack.c.l.b16 %v564
        %v1077 = vunpack.c.h.b16 %v564
        %v1078 = vunpack.c.l.b16 %v565
        %v1079 = vunpack.c.h.b16 %v565
        %v1080 = vunpack.c.l.b16 %v566
        %v1081 = vunpack.c.h.b16 %v566
        %v1082 = vunpack.c.l.b16 %v567
        %v1083 = vunpack.c.h.b16 %v567
        %v1084 = vunpack.c.l.b16 %v568
        %v1085 = vunpack.c.h.b16 %v568
        %v1086 = vunpack.c.l.b16 %v569
        %v1087 = vunpack.c.h.b16 %v569
        %v1088 = vunpack.c.l.b16 %v570
        %v1089 = vunpack.c.h.b16 %v570
        %v1090 = vunpack.c.l.b16 %v571
        %v1091 = vunpack.c.h.b16 %v571
        %v1092 = vpack.c.b16 %v968, %v964
        %v1093 = vpack.c.b16 %v969, %v965
        %v1094 = vpack.c.b16 %v970, %v966
        %v1095 = vpack.c.b16 %v971, %v967
        %v1096 = vpack.c.b16 %v976, %v972
        %v1097 = vpack.c.b16 %v977, %v973
        %v1098 = vpack.c.b16 %v978, %v974
        %v1099 = vpack.c.b16 %v979, %v975
        %v1100 = vpack.c.b16 %v984, %v980
        %v1101 = vpack.c.b16 %v985, %v981
        %v1102 = vpack.c.b16 %v986, %v982
        %v1103 = vpack.c.b16 %v987, %v983
        %v1104 = vpack.c.b16 %v992, %v988
        %v1105 = vpack.c.b16 %v993, %v989
        %v1106 = vpack.c.b16 %v994, %v990
        %v1107 = vpack.c.b16 %v995, %v991
        %v1108 = vpack.c.b16 %v1000, %v996
        %v1109 = vpack.c.b16 %v1001, %v997
        %v1110 = vpack.c.b16 %v1002, %v998
        %v1111 = vpack.c.b16 %v1003, %v999
        %v1112 = vpack.c.b16 %v1008, %v1004
        %v1113 = vpack.c.b16 %v1009, %v1005
        %v1114 = vpack.c.b16 %v1010, %v1006
        %v1115 = vpack.c.b16 %v1011, %v1007
        %v1116 = vpack.c.b16 %v1016, %v1012
        %v1117 = vpack.c.b16 %v1017, %v1013
        %v1118 = vpack.c.b16 %v1018, %v1014
        %v1119 = vpack.c.b16 %v1019, %v1015
        %v1120 = vpack.c.b16 %v1024, %v1020
        %v1121 = vpack.c.b16 %v1025, %v1021
        %v1122 = vpack.c.b16 %v1026, %v1022
        %v1123 = vpack.c.b16 %v1027, %v1023
        %v1124 = vpack.c.b16 %v1032, %v1028
        %v1125 = vpack.c.b16 %v1033, %v1029
        %v1126 = vpack.c.b16 %v1034, %v1030
        %v1127 = vpack.c.b16 %v1035, %v1031
        %v1128 = vpack.c.b16 %v1040, %v1036
        %v1129 = vpack.c.b16 %v1041, %v1037
        %v1130 = vpack.c.b16 %v1042, %v1038
        %v1131 = vpack.c.b16 %v1043, %v1039
        %v1132 = vpack.c.b16 %v1048, %v1044
        %v1133 = vpack.c.b16 %v1049, %v1045
        %v1134 = vpack.c.b16 %v1050, %v1046
        %v1135 = vpack.c.b16 %v1051, %v1047
        %v1136 = vpack.c.b16 %v1056, %v1052
        %v1137 = vpack.c.b16 %v1057, %v1053
        %v1138 = vpack.c.b16 %v1058, %v1054
        %v1139 = vpack.c.b16 %v1059, %v1055
        %v1140 = vpack.c.b16 %v1064, %v1060
        %v1141 = vpack.c.b16 %v1065, %v1061
        %v1142 = vpack.c.b16 %v1066, %v1062
        %v1143 = vpack.c.b16 %v1067, %v1063
        %v1144 = vpack.c.b16 %v1072, %v1068
        %v1145 = vpack.c.b16 %v1073, %v1069
        %v1146 = vpack.c.b16 %v1074, %v1070
        %v1147 = vpack.c.b16 %v1075, %v1071
        %v1148 = vpack.c.b16 %v1080, %v1076
        %v1149 = vpack.c.b16 %v1081, %v1077
        %v1150 = vpack.c.b16 %v1082, %v1078
        %v1151 = vpack.c.b16 %v1083, %v1079
        %v1152 = vpack.c.b16 %v1088, %v1084
        %v1153 = vpack.c.b16 %v1089, %v1085
        %v1154 = vpack.c.b16 %v1090, %v1086
        %v1155 = vpack.c.b16 %v1091, %v1087
        %1220 = vmatprep.subr.bf16.mxu0 %v1121
        %1221 = vmatpush1.bf16.msra.mxu0 %v1120
        %1222 = vmatprep.subr.bf16.mxu0 %v1117
        %1223 = vmatpush1.bf16.msra.mxu0 %v1116
        %1224 = vmatprep.subr.bf16.mxu0 %v1113
        %1225 = vmatpush1.bf16.msra.mxu0 %v1112
        %1226 = vmatprep.subr.bf16.mxu0 %v1109
        %1227 = vmatpush1.bf16.msra.mxu0 %v1108
        %1228 = vmatprep.subr.bf16.mxu0 %v1105
        %1229 = vmatpush1.bf16.msra.mxu0 %v1104
        %1230 = vmatprep.subr.bf16.mxu0 %v1101
        %1231 = vmatpush1.bf16.msra.mxu0 %v1100
        %1232 = vmatprep.subr.bf16.mxu0 %v1097
        %1233 = vmatpush1.bf16.msra.mxu0 %v1096
        %1234 = vmatprep.subr.bf16.mxu0 %v1093
        %1235 = vmatpush1.bf16.msra.mxu0 %v1092
        %1236 = vmatprep.subr.bf16.mxu0 %v1153
        %1237 = vmatpush2.bf16.msra.mxu0 %v1152
        %1238 = vmatprep.subr.bf16.mxu0 %v1149
        %1239 = vmatpush2.bf16.msra.mxu0 %v1148
        %1240 = vmatprep.subr.bf16.mxu0 %v1145
        %1241 = vmatpush2.bf16.msra.mxu0 %v1144
        %1242 = vmatprep.subr.bf16.mxu0 %v1141
        %1243 = vmatpush2.bf16.msra.mxu0 %v1140
        %1244 = vmatprep.subr.bf16.mxu0 %v1137
        %1245 = vmatpush2.bf16.msra.mxu0 %v1136
        %1246 = vmatprep.subr.bf16.mxu0 %v1133
        %1247 = vmatpush2.bf16.msra.mxu0 %v1132
        %1248 = vmatprep.subr.bf16.mxu0 %v1129
        %1249 = vmatpush2.bf16.msra.mxu0 %v1128
        %1250 = vmatprep.subr.bf16.mxu0 %v1125
        %1251 = vmatpush2.bf16.msra.mxu0 %v1124
        %1252 = vmatprep.mubr.bf16.mxu0 %v837
        %1253 = vmatmul.mubr.bf16.gmra.mxu0 %v836
        %v1254 = vpop.f32.mrf.mxu0
        %v1255 = vadd.f32 0.0, %v1254
        %v1256 = vpop.f32.mrf.mxu0
        %v1257 = vadd.f32 0.0, %v1256
        %v1258 = vpop.f32.mrf.mxu0
        %v1259 = vadd.f32 0.0, %v1258
        %v1260 = vpop.f32.mrf.mxu0
        %v1261 = vadd.f32 0.0, %v1260
        %1262 = vmatprep.mubr.bf16.mxu0 %v839
        %1263 = vmatmul.mubr.bf16.gmra.mxu0 %v838
        %v1264 = vpop.f32.mrf.mxu0
        %v1265 = vadd.f32 0.0, %v1264
        %v1266 = vpop.f32.mrf.mxu0
        %v1267 = vadd.f32 0.0, %v1266
        %v1268 = vpop.f32.mrf.mxu0
        %v1269 = vadd.f32 0.0, %v1268
        %v1270 = vpop.f32.mrf.mxu0
        %v1271 = vadd.f32 0.0, %v1270
        %1272 = vmatprep.mubr.bf16.mxu0 %v841
        %1273 = vmatmul.mubr.bf16.gmra.mxu0 %v840
        %v1274 = vpop.f32.mrf.mxu0
        %v1275 = vadd.f32 0.0, %v1274
        %v1276 = vpop.f32.mrf.mxu0
        %v1277 = vadd.f32 0.0, %v1276
        %v1278 = vpop.f32.mrf.mxu0
        %v1279 = vadd.f32 0.0, %v1278
        %v1280 = vpop.f32.mrf.mxu0
        %v1281 = vadd.f32 0.0, %v1280
        %1282 = vmatprep.mubr.bf16.mxu0 %v843
        %1283 = vmatmul.mubr.bf16.gmra.mxu0 %v842
        %v1284 = vpop.f32.mrf.mxu0
        %v1285 = vadd.f32 0.0, %v1284
        %v1286 = vpop.f32.mrf.mxu0
        %v1287 = vadd.f32 0.0, %v1286
        %v1288 = vpop.f32.mrf.mxu0
        %v1289 = vadd.f32 0.0, %v1288
        %v1290 = vpop.f32.mrf.mxu0
        %v1291 = vadd.f32 0.0, %v1290
        %1292 = vmatprep.mubr.bf16.mxu0 %v845
        %1293 = vmatmul.mubr.bf16.gmra.mxu0 %v844
        %v1294 = vpop.f32.mrf.mxu0
        %v1295 = vadd.f32 0.0, %v1294
        %v1296 = vpop.f32.mrf.mxu0
        %v1297 = vadd.f32 0.0, %v1296
        %v1298 = vpop.f32.mrf.mxu0
        %v1299 = vadd.f32 0.0, %v1298
        %v1300 = vpop.f32.mrf.mxu0
        %v1301 = vadd.f32 0.0, %v1300
        %1302 = vmatprep.mubr.bf16.mxu0 %v847
        %1303 = vmatmul.mubr.bf16.gmra.mxu0 %v846
        %v1304 = vpop.f32.mrf.mxu0
        %v1305 = vadd.f32 0.0, %v1304
        %v1306 = vpop.f32.mrf.mxu0
        %v1307 = vadd.f32 0.0, %v1306
        %v1308 = vpop.f32.mrf.mxu0
        %v1309 = vadd.f32 0.0, %v1308
        %v1310 = vpop.f32.mrf.mxu0
        %v1311 = vadd.f32 0.0, %v1310
        %1312 = vmatprep.mubr.bf16.mxu0 %v849
        %1313 = vmatmul.mubr.bf16.gmra.mxu0 %v848
        %v1314 = vpop.f32.mrf.mxu0
        %v1315 = vadd.f32 0.0, %v1314
        %v1316 = vpop.f32.mrf.mxu0
        %v1317 = vadd.f32 0.0, %v1316
        %v1318 = vpop.f32.mrf.mxu0
        %v1319 = vadd.f32 0.0, %v1318
        %v1320 = vpop.f32.mrf.mxu0
        %v1321 = vadd.f32 0.0, %v1320
        %1322 = vmatprep.mubr.bf16.mxu0 %v851
        %1323 = vmatmul.mubr.bf16.gmra.mxu0 %v850
        %v1324 = vpop.f32.mrf.mxu0
        %v1325 = vadd.f32 0.0, %v1324
        %v1326 = vpop.f32.mrf.mxu0
        %v1327 = vadd.f32 0.0, %v1326
        %v1328 = vpop.f32.mrf.mxu0
        %v1329 = vadd.f32 0.0, %v1328
        %v1330 = vpop.f32.mrf.mxu0
        %v1331 = vadd.f32 0.0, %v1330
        %1332 = vmatprep.mubr.bf16.mxu0 %v853
        %1333 = vmatmul.mubr.bf16.gmra.mxu0 %v852
        %v1334 = vpop.f32.mrf.mxu0
        %v1335 = vadd.f32 0.0, %v1334
        %v1336 = vpop.f32.mrf.mxu0
        %v1337 = vadd.f32 0.0, %v1336
        %v1338 = vpop.f32.mrf.mxu0
        %v1339 = vadd.f32 0.0, %v1338
        %v1340 = vpop.f32.mrf.mxu0
        %v1341 = vadd.f32 0.0, %v1340
        %1342 = vmatprep.mubr.bf16.mxu0 %v855
        %1343 = vmatmul.mubr.bf16.gmra.mxu0 %v854
        %v1344 = vpop.f32.mrf.mxu0
        %v1345 = vadd.f32 0.0, %v1344
        %v1346 = vpop.f32.mrf.mxu0
        %v1347 = vadd.f32 0.0, %v1346
        %v1348 = vpop.f32.mrf.mxu0
        %v1349 = vadd.f32 0.0, %v1348
        %v1350 = vpop.f32.mrf.mxu0
        %v1351 = vadd.f32 0.0, %v1350
        %1352 = vmatprep.mubr.bf16.mxu0 %v857
        %1353 = vmatmul.mubr.bf16.gmra.mxu0 %v856
        %v1354 = vpop.f32.mrf.mxu0
        %v1355 = vadd.f32 0.0, %v1354
        %v1356 = vpop.f32.mrf.mxu0
        %v1357 = vadd.f32 0.0, %v1356
        %v1358 = vpop.f32.mrf.mxu0
        %v1359 = vadd.f32 0.0, %v1358
        %v1360 = vpop.f32.mrf.mxu0
        %v1361 = vadd.f32 0.0, %v1360
        %1362 = vmatprep.mubr.bf16.mxu0 %v859
        %1363 = vmatmul.mubr.bf16.gmra.mxu0 %v858
        %v1364 = vpop.f32.mrf.mxu0
        %v1365 = vadd.f32 0.0, %v1364
        %v1366 = vpop.f32.mrf.mxu0
        %v1367 = vadd.f32 0.0, %v1366
        %v1368 = vpop.f32.mrf.mxu0
        %v1369 = vadd.f32 0.0, %v1368
        %v1370 = vpop.f32.mrf.mxu0
        %v1371 = vadd.f32 0.0, %v1370
        %1372 = vmatprep.mubr.bf16.mxu0 %v861
        %1373 = vmatmul.mubr.bf16.gmra.mxu0 %v860
        %v1374 = vpop.f32.mrf.mxu0
        %v1375 = vadd.f32 0.0, %v1374
        %v1376 = vpop.f32.mrf.mxu0
        %v1377 = vadd.f32 0.0, %v1376
        %v1378 = vpop.f32.mrf.mxu0
        %v1379 = vadd.f32 0.0, %v1378
        %v1380 = vpop.f32.mrf.mxu0
        %v1381 = vadd.f32 0.0, %v1380
        %1382 = vmatprep.mubr.bf16.mxu0 %v863
        %1383 = vmatmul.mubr.bf16.gmra.mxu0 %v862
        %v1384 = vpop.f32.mrf.mxu0
        %v1385 = vadd.f32 0.0, %v1384
        %v1386 = vpop.f32.mrf.mxu0
        %v1387 = vadd.f32 0.0, %v1386
        %v1388 = vpop.f32.mrf.mxu0
        %v1389 = vadd.f32 0.0, %v1388
        %v1390 = vpop.f32.mrf.mxu0
        %v1391 = vadd.f32 0.0, %v1390
        %1392 = vmatprep.mubr.bf16.mxu0 %v865
        %1393 = vmatmul.mubr.bf16.gmra.mxu0 %v864
        %v1394 = vpop.f32.mrf.mxu0
        %v1395 = vadd.f32 0.0, %v1394
        %v1396 = vpop.f32.mrf.mxu0
        %v1397 = vadd.f32 0.0, %v1396
        %v1398 = vpop.f32.mrf.mxu0
        %v1399 = vadd.f32 0.0, %v1398
        %v1400 = vpop.f32.mrf.mxu0
        %v1401 = vadd.f32 0.0, %v1400
        %1402 = vmatprep.mubr.bf16.mxu0 %v867
        %1403 = vmatmul.mubr.bf16.gmra.mxu0 %v866
        %v1404 = vpop.f32.mrf.mxu0
        %v1405 = vadd.f32 0.0, %v1404
        %v1406 = vpop.f32.mrf.mxu0
        %v1407 = vadd.f32 0.0, %v1406
        %v1408 = vpop.f32.mrf.mxu0
        %v1409 = vadd.f32 0.0, %v1408
        %v1410 = vpop.f32.mrf.mxu0
        %v1411 = vadd.f32 0.0, %v1410
        %1412 = vdwg.mxu0
        %1413 = vmatprep.subr.bf16.mxu0 %v1123
        %1414 = vmatpush1.bf16.msra.mxu0 %v1122
        %1415 = vmatprep.subr.bf16.mxu0 %v1119
        %1416 = vmatpush1.bf16.msra.mxu0 %v1118
        %1417 = vmatprep.subr.bf16.mxu0 %v1115
        %1418 = vmatpush1.bf16.msra.mxu0 %v1114
        %1419 = vmatprep.subr.bf16.mxu0 %v1111
        %1420 = vmatpush1.bf16.msra.mxu0 %v1110
        %1421 = vmatprep.subr.bf16.mxu0 %v1107
        %1422 = vmatpush1.bf16.msra.mxu0 %v1106
        %1423 = vmatprep.subr.bf16.mxu0 %v1103
        %1424 = vmatpush1.bf16.msra.mxu0 %v1102
        %1425 = vmatprep.subr.bf16.mxu0 %v1099
        %1426 = vmatpush1.bf16.msra.mxu0 %v1098
        %1427 = vmatprep.subr.bf16.mxu0 %v1095
        %1428 = vmatpush1.bf16.msra.mxu0 %v1094
        %1429 = vmatprep.subr.bf16.mxu0 %v1155
        %1430 = vmatpush2.bf16.msra.mxu0 %v1154
        %1431 = vmatprep.subr.bf16.mxu0 %v1151
        %1432 = vmatpush2.bf16.msra.mxu0 %v1150
        %1433 = vmatprep.subr.bf16.mxu0 %v1147
        %1434 = vmatpush2.bf16.msra.mxu0 %v1146
        %1435 = vmatprep.subr.bf16.mxu0 %v1143
        %1436 = vmatpush2.bf16.msra.mxu0 %v1142
        %1437 = vmatprep.subr.bf16.mxu0 %v1139
        %1438 = vmatpush2.bf16.msra.mxu0 %v1138
        %1439 = vmatprep.subr.bf16.mxu0 %v1135
        %1440 = vmatpush2.bf16.msra.mxu0 %v1134
        %1441 = vmatprep.subr.bf16.mxu0 %v1131
        %1442 = vmatpush2.bf16.msra.mxu0 %v1130
        %1443 = vmatprep.subr.bf16.mxu0 %v1127
        %1444 = vmatpush2.bf16.msra.mxu0 %v1126
        %1445 = vmatprep.mubr.bf16.mxu0 %v837
        %1446 = vmatmul.mubr.bf16.gmra.mxu0 %v836
        %v1447 = vpop.f32.mrf.mxu0
        %v1448 = vadd.f32 0.0, %v1447
        %v1449 = vpop.f32.mrf.mxu0
        %v1450 = vadd.f32 0.0, %v1449
        %v1451 = vpop.f32.mrf.mxu0
        %v1452 = vadd.f32 0.0, %v1451
        %v1453 = vpop.f32.mrf.mxu0
        %v1454 = vadd.f32 0.0, %v1453
        %1455 = vmatprep.mubr.bf16.mxu0 %v839
        %1456 = vmatmul.mubr.bf16.gmra.mxu0 %v838
        %v1457 = vpop.f32.mrf.mxu0
        %v1458 = vadd.f32 0.0, %v1457
        %v1459 = vpop.f32.mrf.mxu0
        %v1460 = vadd.f32 0.0, %v1459
        %v1461 = vpop.f32.mrf.mxu0
        %v1462 = vadd.f32 0.0, %v1461
        %v1463 = vpop.f32.mrf.mxu0
        %v1464 = vadd.f32 0.0, %v1463
        %1465 = vmatprep.mubr.bf16.mxu0 %v841
        %1466 = vmatmul.mubr.bf16.gmra.mxu0 %v840
        %v1467 = vpop.f32.mrf.mxu0
        %v1468 = vadd.f32 0.0, %v1467
        %v1469 = vpop.f32.mrf.mxu0
        %v1470 = vadd.f32 0.0, %v1469
        %v1471 = vpop.f32.mrf.mxu0
        %v1472 = vadd.f32 0.0, %v1471
        %v1473 = vpop.f32.mrf.mxu0
        %v1474 = vadd.f32 0.0, %v1473
        %1475 = vmatprep.mubr.bf16.mxu0 %v843
        %1476 = vmatmul.mubr.bf16.gmra.mxu0 %v842
        %v1477 = vpop.f32.mrf.mxu0
        %v1478 = vadd.f32 0.0, %v1477
        %v1479 = vpop.f32.mrf.mxu0
        %v1480 = vadd.f32 0.0, %v1479
        %v1481 = vpop.f32.mrf.mxu0
        %v1482 = vadd.f32 0.0, %v1481
        %v1483 = vpop.f32.mrf.mxu0
        %v1484 = vadd.f32 0.0, %v1483
        %1485 = vmatprep.mubr.bf16.mxu0 %v845
        %1486 = vmatmul.mubr.bf16.gmra.mxu0 %v844
        %v1487 = vpop.f32.mrf.mxu0
        %v1488 = vadd.f32 0.0, %v1487
        %v1489 = vpop.f32.mrf.mxu0
        %v1490 = vadd.f32 0.0, %v1489
        %v1491 = vpop.f32.mrf.mxu0
        %v1492 = vadd.f32 0.0, %v1491
        %v1493 = vpop.f32.mrf.mxu0
        %v1494 = vadd.f32 0.0, %v1493
        %1495 = vmatprep.mubr.bf16.mxu0 %v847
        %1496 = vmatmul.mubr.bf16.gmra.mxu0 %v846
        %v1497 = vpop.f32.mrf.mxu0
        %v1498 = vadd.f32 0.0, %v1497
        %v1499 = vpop.f32.mrf.mxu0
        %v1500 = vadd.f32 0.0, %v1499
        %v1501 = vpop.f32.mrf.mxu0
        %v1502 = vadd.f32 0.0, %v1501
        %v1503 = vpop.f32.mrf.mxu0
        %v1504 = vadd.f32 0.0, %v1503
        %1505 = vmatprep.mubr.bf16.mxu0 %v849
        %1506 = vmatmul.mubr.bf16.gmra.mxu0 %v848
        %v1507 = vpop.f32.mrf.mxu0
        %v1508 = vadd.f32 0.0, %v1507
        %v1509 = vpop.f32.mrf.mxu0
        %v1510 = vadd.f32 0.0, %v1509
        %v1511 = vpop.f32.mrf.mxu0
        %v1512 = vadd.f32 0.0, %v1511
        %v1513 = vpop.f32.mrf.mxu0
        %v1514 = vadd.f32 0.0, %v1513
        %1515 = vmatprep.mubr.bf16.mxu0 %v851
        %1516 = vmatmul.mubr.bf16.gmra.mxu0 %v850
        %v1517 = vpop.f32.mrf.mxu0
        %v1518 = vadd.f32 0.0, %v1517
        %v1519 = vpop.f32.mrf.mxu0
        %v1520 = vadd.f32 0.0, %v1519
        %v1521 = vpop.f32.mrf.mxu0
        %v1522 = vadd.f32 0.0, %v1521
        %v1523 = vpop.f32.mrf.mxu0
        %v1524 = vadd.f32 0.0, %v1523
        %1525 = vmatprep.mubr.bf16.mxu0 %v853
        %1526 = vmatmul.mubr.bf16.gmra.mxu0 %v852
        %v1527 = vpop.f32.mrf.mxu0
        %v1528 = vadd.f32 0.0, %v1527
        %v1529 = vpop.f32.mrf.mxu0
        %v1530 = vadd.f32 0.0, %v1529
        %v1531 = vpop.f32.mrf.mxu0
        %v1532 = vadd.f32 0.0, %v1531
        %v1533 = vpop.f32.mrf.mxu0
        %v1534 = vadd.f32 0.0, %v1533
        %1535 = vmatprep.mubr.bf16.mxu0 %v855
        %1536 = vmatmul.mubr.bf16.gmra.mxu0 %v854
        %v1537 = vpop.f32.mrf.mxu0
        %v1538 = vadd.f32 0.0, %v1537
        %v1539 = vpop.f32.mrf.mxu0
        %v1540 = vadd.f32 0.0, %v1539
        %v1541 = vpop.f32.mrf.mxu0
        %v1542 = vadd.f32 0.0, %v1541
        %v1543 = vpop.f32.mrf.mxu0
        %v1544 = vadd.f32 0.0, %v1543
        %1545 = vmatprep.mubr.bf16.mxu0 %v857
        %1546 = vmatmul.mubr.bf16.gmra.mxu0 %v856
        %v1547 = vpop.f32.mrf.mxu0
        %v1548 = vadd.f32 0.0, %v1547
        %v1549 = vpop.f32.mrf.mxu0
        %v1550 = vadd.f32 0.0, %v1549
        %v1551 = vpop.f32.mrf.mxu0
        %v1552 = vadd.f32 0.0, %v1551
        %v1553 = vpop.f32.mrf.mxu0
        %v1554 = vadd.f32 0.0, %v1553
        %1555 = vmatprep.mubr.bf16.mxu0 %v859
        %1556 = vmatmul.mubr.bf16.gmra.mxu0 %v858
        %v1557 = vpop.f32.mrf.mxu0
        %v1558 = vadd.f32 0.0, %v1557
        %v1559 = vpop.f32.mrf.mxu0
        %v1560 = vadd.f32 0.0, %v1559
        %v1561 = vpop.f32.mrf.mxu0
        %v1562 = vadd.f32 0.0, %v1561
        %v1563 = vpop.f32.mrf.mxu0
        %v1564 = vadd.f32 0.0, %v1563
        %1565 = vmatprep.mubr.bf16.mxu0 %v861
        %1566 = vmatmul.mubr.bf16.gmra.mxu0 %v860
        %v1567 = vpop.f32.mrf.mxu0
        %v1568 = vadd.f32 0.0, %v1567
        %v1569 = vpop.f32.mrf.mxu0
        %v1570 = vadd.f32 0.0, %v1569
        %v1571 = vpop.f32.mrf.mxu0
        %v1572 = vadd.f32 0.0, %v1571
        %v1573 = vpop.f32.mrf.mxu0
        %v1574 = vadd.f32 0.0, %v1573
        %1575 = vmatprep.mubr.bf16.mxu0 %v863
        %1576 = vmatmul.mubr.bf16.gmra.mxu0 %v862
        %v1577 = vpop.f32.mrf.mxu0
        %v1578 = vadd.f32 0.0, %v1577
        %v1579 = vpop.f32.mrf.mxu0
        %v1580 = vadd.f32 0.0, %v1579
        %v1581 = vpop.f32.mrf.mxu0
        %v1582 = vadd.f32 0.0, %v1581
        %v1583 = vpop.f32.mrf.mxu0
        %v1584 = vadd.f32 0.0, %v1583
        %1585 = vmatprep.mubr.bf16.mxu0 %v865
        %1586 = vmatmul.mubr.bf16.gmra.mxu0 %v864
        %v1587 = vpop.f32.mrf.mxu0
        %v1588 = vadd.f32 0.0, %v1587
        %v1589 = vpop.f32.mrf.mxu0
        %v1590 = vadd.f32 0.0, %v1589
        %v1591 = vpop.f32.mrf.mxu0
        %v1592 = vadd.f32 0.0, %v1591
        %v1593 = vpop.f32.mrf.mxu0
        %v1594 = vadd.f32 0.0, %v1593
        %1595 = vmatprep.mubr.bf16.mxu0 %v867
        %1596 = vmatmul.mubr.bf16.gmra.mxu0 %v866
        %v1597 = vpop.f32.mrf.mxu0
        %v1598 = vadd.f32 0.0, %v1597
        %v1599 = vpop.f32.mrf.mxu0
        %v1600 = vadd.f32 0.0, %v1599
        %v1601 = vpop.f32.mrf.mxu0
        %v1602 = vadd.f32 0.0, %v1601
        %v1603 = vpop.f32.mrf.mxu0
        %v1604 = vadd.f32 0.0, %v1603
        %1605 = vdwg.mxu0
        %v1606 = vpack.c.bf16 %v1259, %v1255
        %v1607 = vpack.c.bf16 %v1261, %v1257
        %v1608 = vpack.c.bf16 %v1452, %v1448
        %v1609 = vpack.c.bf16 %v1454, %v1450
        %v1610 = vpack.c.bf16 %v1269, %v1265
        %v1611 = vpack.c.bf16 %v1271, %v1267
        %v1612 = vpack.c.bf16 %v1462, %v1458
        %v1613 = vpack.c.bf16 %v1464, %v1460
        %v1614 = vpack.c.bf16 %v1279, %v1275
        %v1615 = vpack.c.bf16 %v1281, %v1277
        %v1616 = vpack.c.bf16 %v1472, %v1468
        %v1617 = vpack.c.bf16 %v1474, %v1470
        %v1618 = vpack.c.bf16 %v1289, %v1285
        %v1619 = vpack.c.bf16 %v1291, %v1287
        %v1620 = vpack.c.bf16 %v1482, %v1478
        %v1621 = vpack.c.bf16 %v1484, %v1480
        %v1622 = vpack.c.bf16 %v1299, %v1295
        %v1623 = vpack.c.bf16 %v1301, %v1297
        %v1624 = vpack.c.bf16 %v1492, %v1488
        %v1625 = vpack.c.bf16 %v1494, %v1490
        %v1626 = vpack.c.bf16 %v1309, %v1305
        %v1627 = vpack.c.bf16 %v1311, %v1307
        %v1628 = vpack.c.bf16 %v1502, %v1498
        %v1629 = vpack.c.bf16 %v1504, %v1500
        %v1630 = vpack.c.bf16 %v1319, %v1315
        %v1631 = vpack.c.bf16 %v1321, %v1317
        %v1632 = vpack.c.bf16 %v1512, %v1508
        %v1633 = vpack.c.bf16 %v1514, %v1510
        %v1634 = vpack.c.bf16 %v1329, %v1325
        %v1635 = vpack.c.bf16 %v1331, %v1327
        %v1636 = vpack.c.bf16 %v1522, %v1518
        %v1637 = vpack.c.bf16 %v1524, %v1520
        %1639 = vset.pattern.permute.xlu0 0
        %1640 = vperm.xlu0 %1639, %v660
        %v1641 = vpop.permute.xlu0 %1640
        %1644 = vset.pattern.permute.xlu0 0
        %1645 = vperm.xlu0 %1644, %v661
        %v1646 = vpop.permute.xlu0 %1645
        %1649 = vset.pattern.permute.xlu0 0
        %1650 = vperm.xlu0 %1649, %v662
        %v1651 = vpop.permute.xlu0 %1650
        %1654 = vset.pattern.permute.xlu0 0
        %1655 = vperm.xlu0 %1654, %v663
        %v1656 = vpop.permute.xlu0 %1655
        %1659 = vset.pattern.permute.xlu0 0
        %1660 = vperm.xlu0 %1659, %v664
        %v1661 = vpop.permute.xlu0 %1660
        %1664 = vset.pattern.permute.xlu0 0
        %1665 = vperm.xlu0 %1664, %v665
        %v1666 = vpop.permute.xlu0 %1665
        %1669 = vset.pattern.permute.xlu0 0
        %1670 = vperm.xlu0 %1669, %v666
        %v1671 = vpop.permute.xlu0 %1670
        %1674 = vset.pattern.permute.xlu0 0
        %1675 = vperm.xlu0 %1674, %v667
        %v1676 = vpop.permute.xlu0 %1675
        %v1686 = vunpack.c.l.b16 %v652
        %v1687 = vunpack.c.l.b16 %v653
        %v1688 = vunpack.c.l.b16 %v654
        %v1689 = vunpack.c.l.b16 %v655
        %v1690 = vunpack.c.l.b16 %v656
        %v1691 = vunpack.c.l.b16 %v657
        %v1692 = vunpack.c.l.b16 %v658
        %v1693 = vunpack.c.l.b16 %v659
        %v1694 = vpack.c.b16 %v1687, %v1686
        %v1695 = vpack.c.b16 %v1689, %v1688
        %v1696 = vpack.c.b16 %v1691, %v1690
        %v1697 = vpack.c.b16 %v1693, %v1692
        %1702 = vmatprep.subr.bf16.mxu0 %v1635
        %1703 = vmatpush1.bf16.msra.mxu0 %v1634
        %1704 = vmatprep.subr.bf16.mxu0 %v1631
        %1705 = vmatpush1.bf16.msra.mxu0 %v1630
        %1706 = vmatprep.subr.bf16.mxu0 %v1627
        %1707 = vmatpush1.bf16.msra.mxu0 %v1626
        %1708 = vmatprep.subr.bf16.mxu0 %v1623
        %1709 = vmatpush1.bf16.msra.mxu0 %v1622
        %1710 = vmatprep.subr.bf16.mxu0 %v1619
        %1711 = vmatpush1.bf16.msra.mxu0 %v1618
        %1712 = vmatprep.subr.bf16.mxu0 %v1615
        %1713 = vmatpush1.bf16.msra.mxu0 %v1614
        %1714 = vmatprep.subr.bf16.mxu0 %v1611
        %1715 = vmatpush1.bf16.msra.mxu0 %v1610
        %1716 = vmatprep.subr.bf16.mxu0 %v1607
        %1717 = vmatpush1.bf16.msra.mxu0 %v1606
        %1718 = vmatprep.subr.bf16.mxu0 0
        %1719 = vmatpush2.bf16.msra.mxu0 0
        %1720 = vmatprep.subr.bf16.mxu0 0
        %1721 = vmatpush2.bf16.msra.mxu0 0
        %1722 = vmatprep.subr.bf16.mxu0 0
        %1723 = vmatpush2.bf16.msra.mxu0 0
        %1724 = vmatprep.subr.bf16.mxu0 0
        %1725 = vmatpush2.bf16.msra.mxu0 0
        %1726 = vmatprep.subr.bf16.mxu0 0
        %1727 = vmatpush2.bf16.msra.mxu0 0
        %1728 = vmatprep.subr.bf16.mxu0 0
        %1729 = vmatpush2.bf16.msra.mxu0 0
        %1730 = vmatprep.subr.bf16.mxu0 0
        %1731 = vmatpush2.bf16.msra.mxu0 0
        %1732 = vmatprep.subr.bf16.mxu0 0
        %1733 = vmatpush2.bf16.msra.mxu0 0
        %1734 = vmatprep.mubr.bf16.mxu0 0
        %1735 = vmatmul.mubr.bf16.gmra.mxu0 %v1694
        %v1736 = vpop.f32.mrf.mxu0
        %v1737 = vadd.f32 %v1641, %v1736
        %v1738 = vpop.f32.mrf.mxu0
        %v1739 = vadd.f32 %v1641, %v1738
        %v1740 = vpop.f32.mrf.mxu0
        %v1741 = vadd.f32 %v1646, %v1740
        %v1742 = vpop.f32.mrf.mxu0
        %v1743 = vadd.f32 %v1646, %v1742
        %1744 = vmatprep.mubr.bf16.mxu0 0
        %1745 = vmatmul.mubr.bf16.gmra.mxu0 %v1695
        %v1746 = vpop.f32.mrf.mxu0
        %v1747 = vadd.f32 %v1651, %v1746
        %v1748 = vpop.f32.mrf.mxu0
        %v1749 = vadd.f32 %v1651, %v1748
        %v1750 = vpop.f32.mrf.mxu0
        %v1751 = vadd.f32 %v1656, %v1750
        %v1752 = vpop.f32.mrf.mxu0
        %v1753 = vadd.f32 %v1656, %v1752
        %1754 = vmatprep.mubr.bf16.mxu0 0
        %1755 = vmatmul.mubr.bf16.gmra.mxu0 %v1696
        %v1756 = vpop.f32.mrf.mxu0
        %v1757 = vadd.f32 %v1661, %v1756
        %v1758 = vpop.f32.mrf.mxu0
        %v1759 = vadd.f32 %v1661, %v1758
        %v1760 = vpop.f32.mrf.mxu0
        %v1761 = vadd.f32 %v1666, %v1760
        %v1762 = vpop.f32.mrf.mxu0
        %v1763 = vadd.f32 %v1666, %v1762
        %1764 = vmatprep.mubr.bf16.mxu0 0
        %1765 = vmatmul.mubr.bf16.gmra.mxu0 %v1697
        %v1766 = vpop.f32.mrf.mxu0
        %v1767 = vadd.f32 %v1671, %v1766
        %v1768 = vpop.f32.mrf.mxu0
        %v1769 = vadd.f32 %v1671, %v1768
        %v1770 = vpop.f32.mrf.mxu0
        %v1771 = vadd.f32 %v1676, %v1770
        %v1772 = vpop.f32.mrf.mxu0
        %v1773 = vadd.f32 %v1676, %v1772
        %1774 = vdwg.mxu0
        %1775 = vmatprep.subr.bf16.mxu0 %v1637
        %1776 = vmatpush1.bf16.msra.mxu0 %v1636
        %1777 = vmatprep.subr.bf16.mxu0 %v1633
        %1778 = vmatpush1.bf16.msra.mxu0 %v1632
        %1779 = vmatprep.subr.bf16.mxu0 %v1629
        %1780 = vmatpush1.bf16.msra.mxu0 %v1628
        %1781 = vmatprep.subr.bf16.mxu0 %v1625
        %1782 = vmatpush1.bf16.msra.mxu0 %v1624
        %1783 = vmatprep.subr.bf16.mxu0 %v1621
        %1784 = vmatpush1.bf16.msra.mxu0 %v1620
        %1785 = vmatprep.subr.bf16.mxu0 %v1617
        %1786 = vmatpush1.bf16.msra.mxu0 %v1616
        %1787 = vmatprep.subr.bf16.mxu0 %v1613
        %1788 = vmatpush1.bf16.msra.mxu0 %v1612
        %1789 = vmatprep.subr.bf16.mxu0 %v1609
        %1790 = vmatpush1.bf16.msra.mxu0 %v1608
        %1791 = vmatprep.subr.bf16.mxu0 0
        %1792 = vmatpush2.bf16.msra.mxu0 0
        %1793 = vmatprep.subr.bf16.mxu0 0
        %1794 = vmatpush2.bf16.msra.mxu0 0
        %1795 = vmatprep.subr.bf16.mxu0 0
        %1796 = vmatpush2.bf16.msra.mxu0 0
        %1797 = vmatprep.subr.bf16.mxu0 0
        %1798 = vmatpush2.bf16.msra.mxu0 0
        %1799 = vmatprep.subr.bf16.mxu0 0
        %1800 = vmatpush2.bf16.msra.mxu0 0
        %1801 = vmatprep.subr.bf16.mxu0 0
        %1802 = vmatpush2.bf16.msra.mxu0 0
        %1803 = vmatprep.subr.bf16.mxu0 0
        %1804 = vmatpush2.bf16.msra.mxu0 0
        %1805 = vmatprep.subr.bf16.mxu0 0
        %1806 = vmatpush2.bf16.msra.mxu0 0
        %1807 = vmatprep.mubr.bf16.mxu0 0
        %1808 = vmatmul.mubr.bf16.gmra.mxu0 %v1694
        %v1809 = vpop.f32.mrf.mxu0
        %v1810 = vadd.f32 %v1641, %v1809
        %v1811 = vpop.f32.mrf.mxu0
        %v1812 = vadd.f32 %v1641, %v1811
        %v1813 = vpop.f32.mrf.mxu0
        %v1814 = vadd.f32 %v1646, %v1813
        %v1815 = vpop.f32.mrf.mxu0
        %v1816 = vadd.f32 %v1646, %v1815
        %1817 = vmatprep.mubr.bf16.mxu0 0
        %1818 = vmatmul.mubr.bf16.gmra.mxu0 %v1695
        %v1819 = vpop.f32.mrf.mxu0
        %v1820 = vadd.f32 %v1651, %v1819
        %v1821 = vpop.f32.mrf.mxu0
        %v1822 = vadd.f32 %v1651, %v1821
        %v1823 = vpop.f32.mrf.mxu0
        %v1824 = vadd.f32 %v1656, %v1823
        %v1825 = vpop.f32.mrf.mxu0
        %v1826 = vadd.f32 %v1656, %v1825
        %1827 = vmatprep.mubr.bf16.mxu0 0
        %1828 = vmatmul.mubr.bf16.gmra.mxu0 %v1696
        %v1829 = vpop.f32.mrf.mxu0
        %v1830 = vadd.f32 %v1661, %v1829
        %v1831 = vpop.f32.mrf.mxu0
        %v1832 = vadd.f32 %v1661, %v1831
        %v1833 = vpop.f32.mrf.mxu0
        %v1834 = vadd.f32 %v1666, %v1833
        %v1835 = vpop.f32.mrf.mxu0
        %v1836 = vadd.f32 %v1666, %v1835
        %1837 = vmatprep.mubr.bf16.mxu0 0
        %1838 = vmatmul.mubr.bf16.gmra.mxu0 %v1697
        %v1839 = vpop.f32.mrf.mxu0
        %v1840 = vadd.f32 %v1671, %v1839
        %v1841 = vpop.f32.mrf.mxu0
        %v1842 = vadd.f32 %v1671, %v1841
        %v1843 = vpop.f32.mrf.mxu0
        %v1844 = vadd.f32 %v1676, %v1843
        %v1845 = vpop.f32.mrf.mxu0
        %v1846 = vadd.f32 %v1676, %v1845
        %1847 = vdwg.mxu0
        %v1848 = vxor.u32 %v1737, 2147483648
        %v1849 = vxor.u32 %v1739, 2147483648
        %v1850 = vxor.u32 %v1810, 2147483648
        %v1851 = vxor.u32 %v1812, 2147483648
        %v1852 = vxor.u32 %v1741, 2147483648
        %v1853 = vxor.u32 %v1743, 2147483648
        %v1854 = vxor.u32 %v1814, 2147483648
        %v1855 = vxor.u32 %v1816, 2147483648
        %v1856 = vxor.u32 %v1747, 2147483648
        %v1857 = vxor.u32 %v1749, 2147483648
        %v1858 = vxor.u32 %v1820, 2147483648
        %v1859 = vxor.u32 %v1822, 2147483648
        %v1860 = vxor.u32 %v1751, 2147483648
        %v1861 = vxor.u32 %v1753, 2147483648
        %v1862 = vxor.u32 %v1824, 2147483648
        %v1863 = vxor.u32 %v1826, 2147483648
        %v1864 = vxor.u32 %v1757, 2147483648
        %v1865 = vxor.u32 %v1759, 2147483648
        %v1866 = vxor.u32 %v1830, 2147483648
        %v1867 = vxor.u32 %v1832, 2147483648
        %v1868 = vxor.u32 %v1761, 2147483648
        %v1869 = vxor.u32 %v1763, 2147483648
        %v1870 = vxor.u32 %v1834, 2147483648
        %v1871 = vxor.u32 %v1836, 2147483648
        %v1872 = vxor.u32 %v1767, 2147483648
        %v1873 = vxor.u32 %v1769, 2147483648
        %v1874 = vxor.u32 %v1840, 2147483648
        %v1875 = vxor.u32 %v1842, 2147483648
        %v1876 = vxor.u32 %v1771, 2147483648
        %v1877 = vxor.u32 %v1773, 2147483648
        %v1878 = vxor.u32 %v1844, 2147483648
        %v1879 = vxor.u32 %v1846, 2147483648
        %v1880 = vmul.f32 %v1848, 1.442695
        %v1881 = vpow.pop %v1880
        %v1882 = vmul.f32 %v1849, 1.442695
        %v1883 = vpow.pop %v1882
        %v1884 = vmul.f32 %v1850, 1.442695
        %v1885 = vpow.pop %v1884
        %v1886 = vmul.f32 %v1851, 1.442695
        %v1887 = vpow.pop %v1886
        %v1888 = vmul.f32 %v1852, 1.442695
        %v1889 = vpow.pop %v1888
        %v1890 = vmul.f32 %v1853, 1.442695
        %v1891 = vpow.pop %v1890
        %v1892 = vmul.f32 %v1854, 1.442695
        %v1893 = vpow.pop %v1892
        %v1894 = vmul.f32 %v1855, 1.442695
        %v1895 = vpow.pop %v1894
        %v1896 = vmul.f32 %v1856, 1.442695
        %v1897 = vpow.pop %v1896
        %v1898 = vmul.f32 %v1857, 1.442695
        %v1899 = vpow.pop %v1898
        %v1900 = vmul.f32 %v1858, 1.442695
        %v1901 = vpow.pop %v1900
        %v1902 = vmul.f32 %v1859, 1.442695
        %v1903 = vpow.pop %v1902
        %v1904 = vmul.f32 %v1860, 1.442695
        %v1905 = vpow.pop %v1904
        %v1906 = vmul.f32 %v1861, 1.442695
        %v1907 = vpow.pop %v1906
        %v1908 = vmul.f32 %v1862, 1.442695
        %v1909 = vpow.pop %v1908
        %v1910 = vmul.f32 %v1863, 1.442695
        %v1911 = vpow.pop %v1910
        %v1912 = vmul.f32 %v1864, 1.442695
        %v1913 = vpow.pop %v1912
        %v1914 = vmul.f32 %v1865, 1.442695
        %v1915 = vpow.pop %v1914
        %v1916 = vmul.f32 %v1866, 1.442695
        %v1917 = vpow.pop %v1916
        %v1918 = vmul.f32 %v1867, 1.442695
        %v1919 = vpow.pop %v1918
        %v1920 = vmul.f32 %v1868, 1.442695
        %v1921 = vpow.pop %v1920
        %v1922 = vmul.f32 %v1869, 1.442695
        %v1923 = vpow.pop %v1922
        %v1924 = vmul.f32 %v1870, 1.442695
        %v1925 = vpow.pop %v1924
        %v1926 = vmul.f32 %v1871, 1.442695
        %v1927 = vpow.pop %v1926
        %v1928 = vmul.f32 %v1872, 1.442695
        %v1929 = vpow.pop %v1928
        %v1930 = vmul.f32 %v1873, 1.442695
        %v1931 = vpow.pop %v1930
        %v1932 = vmul.f32 %v1874, 1.442695
        %v1933 = vpow.pop %v1932
        %v1934 = vmul.f32 %v1875, 1.442695
        %v1935 = vpow.pop %v1934
        %v1936 = vmul.f32 %v1876, 1.442695
        %v1937 = vpow.pop %v1936
        %v1938 = vmul.f32 %v1877, 1.442695
        %v1939 = vpow.pop %v1938
        %v1940 = vmul.f32 %v1878, 1.442695
        %v1941 = vpow.pop %v1940
        %v1942 = vmul.f32 %v1879, 1.442695
        %v1943 = vpow.pop %v1942
        %v1944 = vadd.f32 %v1881, 1.0
        %v1945 = vadd.f32 %v1883, 1.0
        %v1946 = vadd.f32 %v1885, 1.0
        %v1947 = vadd.f32 %v1887, 1.0
        %v1948 = vadd.f32 %v1889, 1.0
        %v1949 = vadd.f32 %v1891, 1.0
        %v1950 = vadd.f32 %v1893, 1.0
        %v1951 = vadd.f32 %v1895, 1.0
        %v1952 = vadd.f32 %v1897, 1.0
        %v1953 = vadd.f32 %v1899, 1.0
        %v1954 = vadd.f32 %v1901, 1.0
        %v1955 = vadd.f32 %v1903, 1.0
        %v1956 = vadd.f32 %v1905, 1.0
        %v1957 = vadd.f32 %v1907, 1.0
        %v1958 = vadd.f32 %v1909, 1.0
        %v1959 = vadd.f32 %v1911, 1.0
        %v1960 = vadd.f32 %v1913, 1.0
        %v1961 = vadd.f32 %v1915, 1.0
        %v1962 = vadd.f32 %v1917, 1.0
        %v1963 = vadd.f32 %v1919, 1.0
        %v1964 = vadd.f32 %v1921, 1.0
        %v1965 = vadd.f32 %v1923, 1.0
        %v1966 = vadd.f32 %v1925, 1.0
        %v1967 = vadd.f32 %v1927, 1.0
        %v1968 = vadd.f32 %v1929, 1.0
        %v1969 = vadd.f32 %v1931, 1.0
        %v1970 = vadd.f32 %v1933, 1.0
        %v1971 = vadd.f32 %v1935, 1.0
        %v1972 = vadd.f32 %v1937, 1.0
        %v1973 = vadd.f32 %v1939, 1.0
        %v1974 = vadd.f32 %v1941, 1.0
        %v1975 = vadd.f32 %v1943, 1.0
        %v1976 = vrcp.pop %v1944
        %v1977 = vmul.f32 1.0, %v1976
        %v1978 = vrcp.pop %v1945
        %v1979 = vmul.f32 1.0, %v1978
        %v1980 = vrcp.pop %v1946
        %v1981 = vmul.f32 1.0, %v1980
        %v1982 = vrcp.pop %v1947
        %v1983 = vmul.f32 1.0, %v1982
        %v1984 = vrcp.pop %v1948
        %v1985 = vmul.f32 1.0, %v1984
        %v1986 = vrcp.pop %v1949
        %v1987 = vmul.f32 1.0, %v1986
        %v1988 = vrcp.pop %v1950
        %v1989 = vmul.f32 1.0, %v1988
        %v1990 = vrcp.pop %v1951
        %v1991 = vmul.f32 1.0, %v1990
        %v1992 = vrcp.pop %v1952
        %v1993 = vmul.f32 1.0, %v1992
        %v1994 = vrcp.pop %v1953
        %v1995 = vmul.f32 1.0, %v1994
        %v1996 = vrcp.pop %v1954
        %v1997 = vmul.f32 1.0, %v1996
        %v1998 = vrcp.pop %v1955
        %v1999 = vmul.f32 1.0, %v1998
        %v2000 = vrcp.pop %v1956
        %v2001 = vmul.f32 1.0, %v2000
        %v2002 = vrcp.pop %v1957
        %v2003 = vmul.f32 1.0, %v2002
        %v2004 = vrcp.pop %v1958
        %v2005 = vmul.f32 1.0, %v2004
        %v2006 = vrcp.pop %v1959
        %v2007 = vmul.f32 1.0, %v2006
        %v2008 = vrcp.pop %v1960
        %v2009 = vmul.f32 1.0, %v2008
        %v2010 = vrcp.pop %v1961
        %v2011 = vmul.f32 1.0, %v2010
        %v2012 = vrcp.pop %v1962
        %v2013 = vmul.f32 1.0, %v2012
        %v2014 = vrcp.pop %v1963
        %v2015 = vmul.f32 1.0, %v2014
        %v2016 = vrcp.pop %v1964
        %v2017 = vmul.f32 1.0, %v2016
        %v2018 = vrcp.pop %v1965
        %v2019 = vmul.f32 1.0, %v2018
        %v2020 = vrcp.pop %v1966
        %v2021 = vmul.f32 1.0, %v2020
        %v2022 = vrcp.pop %v1967
        %v2023 = vmul.f32 1.0, %v2022
        %v2024 = vrcp.pop %v1968
        %v2025 = vmul.f32 1.0, %v2024
        %v2026 = vrcp.pop %v1969
        %v2027 = vmul.f32 1.0, %v2026
        %v2028 = vrcp.pop %v1970
        %v2029 = vmul.f32 1.0, %v2028
        %v2030 = vrcp.pop %v1971
        %v2031 = vmul.f32 1.0, %v2030
        %v2032 = vrcp.pop %v1972
        %v2033 = vmul.f32 1.0, %v2032
        %v2034 = vrcp.pop %v1973
        %v2035 = vmul.f32 1.0, %v2034
        %v2036 = vrcp.pop %v1974
        %v2037 = vmul.f32 1.0, %v2036
        %v2038 = vrcp.pop %v1975
        %v2039 = vmul.f32 1.0, %v2038
        %v2040 = vmul.f32 %v1737, %v1977
        %v2041 = vmul.f32 %v1739, %v1979
        %v2042 = vmul.f32 %v1810, %v1981
        %v2043 = vmul.f32 %v1812, %v1983
        %v2044 = vmul.f32 %v1741, %v1985
        %v2045 = vmul.f32 %v1743, %v1987
        %v2046 = vmul.f32 %v1814, %v1989
        %v2047 = vmul.f32 %v1816, %v1991
        %v2048 = vmul.f32 %v1747, %v1993
        %v2049 = vmul.f32 %v1749, %v1995
        %v2050 = vmul.f32 %v1820, %v1997
        %v2051 = vmul.f32 %v1822, %v1999
        %v2052 = vmul.f32 %v1751, %v2001
        %v2053 = vmul.f32 %v1753, %v2003
        %v2054 = vmul.f32 %v1824, %v2005
        %v2055 = vmul.f32 %v1826, %v2007
        %v2056 = vmul.f32 %v1757, %v2009
        %v2057 = vmul.f32 %v1759, %v2011
        %v2058 = vmul.f32 %v1830, %v2013
        %v2059 = vmul.f32 %v1832, %v2015
        %v2060 = vmul.f32 %v1761, %v2017
        %v2061 = vmul.f32 %v1763, %v2019
        %v2062 = vmul.f32 %v1834, %v2021
        %v2063 = vmul.f32 %v1836, %v2023
        %v2064 = vmul.f32 %v1767, %v2025
        %v2065 = vmul.f32 %v1769, %v2027
        %v2066 = vmul.f32 %v1840, %v2029
        %v2067 = vmul.f32 %v1842, %v2031
        %v2068 = vmul.f32 %v1771, %v2033
        %v2069 = vmul.f32 %v1773, %v2035
        %v2070 = vmul.f32 %v1844, %v2037
        %v2071 = vmul.f32 %v1846, %v2039
        %v2072 = vpack.c.bf16 %v2044, %v2040
        %v2073 = vpack.c.bf16 %v2045, %v2041
        %v2074 = vpack.c.bf16 %v2046, %v2042
        %v2075 = vpack.c.bf16 %v2047, %v2043
        %v2076 = vpack.c.bf16 %v2052, %v2048
        %v2077 = vpack.c.bf16 %v2053, %v2049
        %v2078 = vpack.c.bf16 %v2054, %v2050
        %v2079 = vpack.c.bf16 %v2055, %v2051
        %v2080 = vpack.c.bf16 %v2060, %v2056
        %v2081 = vpack.c.bf16 %v2061, %v2057
        %v2082 = vpack.c.bf16 %v2062, %v2058
        %v2083 = vpack.c.bf16 %v2063, %v2059
        %v2084 = vpack.c.bf16 %v2068, %v2064
        %v2085 = vpack.c.bf16 %v2069, %v2065
        %v2086 = vpack.c.bf16 %v2070, %v2066
        %v2087 = vpack.c.bf16 %v2071, %v2067
        %2089 = vset.pattern.permute.xlu0 0
        %2090 = vperm.xlu0 %2089, %v672
        %v2091 = vpop.permute.xlu0 %2090
        %2094 = vset.pattern.permute.xlu0 0
        %2095 = vperm.xlu0 %2094, %v673
        %v2096 = vpop.permute.xlu0 %2095
        %2099 = vset.pattern.permute.xlu0 0
        %2100 = vperm.xlu0 %2099, %v674
        %v2101 = vpop.permute.xlu0 %2100
        %2104 = vset.pattern.permute.xlu0 0
        %2105 = vperm.xlu0 %2104, %v675
        %v2106 = vpop.permute.xlu0 %2105
        %v2112 = vunpack.c.l.b16 %v668
        %v2113 = vunpack.c.l.b16 %v669
        %v2114 = vunpack.c.l.b16 %v670
        %v2115 = vunpack.c.l.b16 %v671
        %v2116 = vpack.c.b16 %v2113, %v2112
        %v2117 = vpack.c.b16 %v2115, %v2114
        %vm2118 = vcmask 523264
        %v2120 = vsel %vm2118, %v2116, 0
        %v2123 = vsel %vm2118, %v2117, 0
        %2125 = vmatprep.subr.bf16.mxu0 0
        %2126 = vmatpush1.bf16.msra.mxu0 0
        %2127 = vmatprep.subr.bf16.mxu0 0
        %2128 = vmatpush1.bf16.msra.mxu0 0
        %2129 = vmatprep.subr.bf16.mxu0 0
        %2130 = vmatpush1.bf16.msra.mxu0 0
        %2131 = vmatprep.subr.bf16.mxu0 0
        %2132 = vmatpush1.bf16.msra.mxu0 0
        %2133 = vmatprep.subr.bf16.mxu0 %v2085
        %2134 = vmatpush1.bf16.msra.mxu0 %v2084
        %2135 = vmatprep.subr.bf16.mxu0 %v2081
        %2136 = vmatpush1.bf16.msra.mxu0 %v2080
        %2137 = vmatprep.subr.bf16.mxu0 %v2077
        %2138 = vmatpush1.bf16.msra.mxu0 %v2076
        %2139 = vmatprep.subr.bf16.mxu0 %v2073
        %2140 = vmatpush1.bf16.msra.mxu0 %v2072
        %2141 = vmatprep.subr.bf16.mxu0 0
        %2142 = vmatpush2.bf16.msra.mxu0 0
        %2143 = vmatprep.subr.bf16.mxu0 0
        %2144 = vmatpush2.bf16.msra.mxu0 0
        %2145 = vmatprep.subr.bf16.mxu0 0
        %2146 = vmatpush2.bf16.msra.mxu0 0
        %2147 = vmatprep.subr.bf16.mxu0 0
        %2148 = vmatpush2.bf16.msra.mxu0 0
        %2149 = vmatprep.subr.bf16.mxu0 0
        %2150 = vmatpush2.bf16.msra.mxu0 0
        %2151 = vmatprep.subr.bf16.mxu0 0
        %2152 = vmatpush2.bf16.msra.mxu0 0
        %2153 = vmatprep.subr.bf16.mxu0 0
        %2154 = vmatpush2.bf16.msra.mxu0 0
        %2155 = vmatprep.subr.bf16.mxu0 0
        %2156 = vmatpush2.bf16.msra.mxu0 0
        %2157 = vmatprep.mubr.bf16.mxu0 0
        %2158 = vmatmul.mubr.bf16.gmra.mxu0 %v2120
        %v2159 = vpop.f32.mrf.mxu0
        %v2160 = vadd.f32 %v2091, %v2159
        %v2161 = vpop.f32.mrf.mxu0
        %v2162 = vadd.f32 %v2091, %v2161
        %v2163 = vpop.f32.mrf.mxu0
        %v2164 = vadd.f32 %v2096, %v2163
        %v2165 = vpop.f32.mrf.mxu0
        %v2166 = vadd.f32 %v2096, %v2165
        %2167 = vmatprep.mubr.bf16.mxu0 0
        %2168 = vmatmul.mubr.bf16.gmra.mxu0 %v2123
        %v2169 = vpop.f32.mrf.mxu0
        %v2170 = vadd.f32 %v2101, %v2169
        %v2171 = vpop.f32.mrf.mxu0
        %v2172 = vadd.f32 %v2101, %v2171
        %v2173 = vpop.f32.mrf.mxu0
        %v2174 = vadd.f32 %v2106, %v2173
        %v2175 = vpop.f32.mrf.mxu0
        %v2176 = vadd.f32 %v2106, %v2175
        %2177 = vdwg.mxu0
        %2178 = vmatprep.subr.bf16.mxu0 0
        %2179 = vmatpush1.bf16.msra.mxu0 0
        %2180 = vmatprep.subr.bf16.mxu0 0
        %2181 = vmatpush1.bf16.msra.mxu0 0
        %2182 = vmatprep.subr.bf16.mxu0 0
        %2183 = vmatpush1.bf16.msra.mxu0 0
        %2184 = vmatprep.subr.bf16.mxu0 0
        %2185 = vmatpush1.bf16.msra.mxu0 0
        %2186 = vmatprep.subr.bf16.mxu0 %v2087
        %2187 = vmatpush1.bf16.msra.mxu0 %v2086
        %2188 = vmatprep.subr.bf16.mxu0 %v2083
        %2189 = vmatpush1.bf16.msra.mxu0 %v2082
        %2190 = vmatprep.subr.bf16.mxu0 %v2079
        %2191 = vmatpush1.bf16.msra.mxu0 %v2078
        %2192 = vmatprep.subr.bf16.mxu0 %v2075
        %2193 = vmatpush1.bf16.msra.mxu0 %v2074
        %2194 = vmatprep.subr.bf16.mxu0 0
        %2195 = vmatpush2.bf16.msra.mxu0 0
        %2196 = vmatprep.subr.bf16.mxu0 0
        %2197 = vmatpush2.bf16.msra.mxu0 0
        %2198 = vmatprep.subr.bf16.mxu0 0
        %2199 = vmatpush2.bf16.msra.mxu0 0
        %2200 = vmatprep.subr.bf16.mxu0 0
        %2201 = vmatpush2.bf16.msra.mxu0 0
        %2202 = vmatprep.subr.bf16.mxu0 0
        %2203 = vmatpush2.bf16.msra.mxu0 0
        %2204 = vmatprep.subr.bf16.mxu0 0
        %2205 = vmatpush2.bf16.msra.mxu0 0
        %2206 = vmatprep.subr.bf16.mxu0 0
        %2207 = vmatpush2.bf16.msra.mxu0 0
        %2208 = vmatprep.subr.bf16.mxu0 0
        %2209 = vmatpush2.bf16.msra.mxu0 0
        %2210 = vmatprep.mubr.bf16.mxu0 0
        %2211 = vmatmul.mubr.bf16.gmra.mxu0 %v2120
        %v2212 = vpop.f32.mrf.mxu0
        %v2213 = vadd.f32 %v2091, %v2212
        %v2214 = vpop.f32.mrf.mxu0
        %v2215 = vadd.f32 %v2091, %v2214
        %v2216 = vpop.f32.mrf.mxu0
        %v2217 = vadd.f32 %v2096, %v2216
        %v2218 = vpop.f32.mrf.mxu0
        %v2219 = vadd.f32 %v2096, %v2218
        %2220 = vmatprep.mubr.bf16.mxu0 0
        %2221 = vmatmul.mubr.bf16.gmra.mxu0 %v2123
        %v2222 = vpop.f32.mrf.mxu0
        %v2223 = vadd.f32 %v2101, %v2222
        %v2224 = vpop.f32.mrf.mxu0
        %v2225 = vadd.f32 %v2101, %v2224
        %v2226 = vpop.f32.mrf.mxu0
        %v2227 = vadd.f32 %v2106, %v2226
        %v2228 = vpop.f32.mrf.mxu0
        %v2229 = vadd.f32 %v2106, %v2228
        %2230 = vdwg.mxu0
        %v2231 = vxor.u32 %v2160, 2147483648
        %v2232 = vxor.u32 %v2162, 2147483648
        %v2233 = vxor.u32 %v2213, 2147483648
        %v2234 = vxor.u32 %v2215, 2147483648
        %v2235 = vxor.u32 %v2164, 2147483648
        %v2236 = vxor.u32 %v2166, 2147483648
        %v2237 = vxor.u32 %v2217, 2147483648
        %v2238 = vxor.u32 %v2219, 2147483648
        %v2239 = vxor.u32 %v2170, 2147483648
        %v2240 = vxor.u32 %v2172, 2147483648
        %v2241 = vxor.u32 %v2223, 2147483648
        %v2242 = vxor.u32 %v2225, 2147483648
        %v2243 = vxor.u32 %v2174, 2147483648
        %v2244 = vxor.u32 %v2176, 2147483648
        %v2245 = vxor.u32 %v2227, 2147483648
        %v2246 = vxor.u32 %v2229, 2147483648
        %v2247 = vmul.f32 %v2231, 1.442695
        %v2248 = vpow.pop %v2247
        %v2249 = vmul.f32 %v2232, 1.442695
        %v2250 = vpow.pop %v2249
        %v2251 = vmul.f32 %v2233, 1.442695
        %v2252 = vpow.pop %v2251
        %v2253 = vmul.f32 %v2234, 1.442695
        %v2254 = vpow.pop %v2253
        %v2255 = vmul.f32 %v2235, 1.442695
        %v2256 = vpow.pop %v2255
        %v2257 = vmul.f32 %v2236, 1.442695
        %v2258 = vpow.pop %v2257
        %v2259 = vmul.f32 %v2237, 1.442695
        %v2260 = vpow.pop %v2259
        %v2261 = vmul.f32 %v2238, 1.442695
        %v2262 = vpow.pop %v2261
        %v2263 = vmul.f32 %v2239, 1.442695
        %v2264 = vpow.pop %v2263
        %v2265 = vmul.f32 %v2240, 1.442695
        %v2266 = vpow.pop %v2265
        %v2267 = vmul.f32 %v2241, 1.442695
        %v2268 = vpow.pop %v2267
        %v2269 = vmul.f32 %v2242, 1.442695
        %v2270 = vpow.pop %v2269
        %v2271 = vmul.f32 %v2243, 1.442695
        %v2272 = vpow.pop %v2271
        %v2273 = vmul.f32 %v2244, 1.442695
        %v2274 = vpow.pop %v2273
        %v2275 = vmul.f32 %v2245, 1.442695
        %v2276 = vpow.pop %v2275
        %v2277 = vmul.f32 %v2246, 1.442695
        %v2278 = vpow.pop %v2277
        %v2279 = vadd.f32 %v2248, 1.0
        %v2280 = vadd.f32 %v2250, 1.0
        %v2281 = vadd.f32 %v2252, 1.0
        %v2282 = vadd.f32 %v2254, 1.0
        %v2283 = vadd.f32 %v2256, 1.0
        %v2284 = vadd.f32 %v2258, 1.0
        %v2285 = vadd.f32 %v2260, 1.0
        %v2286 = vadd.f32 %v2262, 1.0
        %v2287 = vadd.f32 %v2264, 1.0
        %v2288 = vadd.f32 %v2266, 1.0
        %v2289 = vadd.f32 %v2268, 1.0
        %v2290 = vadd.f32 %v2270, 1.0
        %v2291 = vadd.f32 %v2272, 1.0
        %v2292 = vadd.f32 %v2274, 1.0
        %v2293 = vadd.f32 %v2276, 1.0
        %v2294 = vadd.f32 %v2278, 1.0
        %v2295 = vrcp.pop %v2279
        %v2296 = vmul.f32 1.0, %v2295
        %v2297 = vrcp.pop %v2280
        %v2298 = vmul.f32 1.0, %v2297
        %v2299 = vrcp.pop %v2281
        %v2300 = vmul.f32 1.0, %v2299
        %v2301 = vrcp.pop %v2282
        %v2302 = vmul.f32 1.0, %v2301
        %v2303 = vrcp.pop %v2283
        %v2304 = vmul.f32 1.0, %v2303
        %v2305 = vrcp.pop %v2284
        %v2306 = vmul.f32 1.0, %v2305
        %v2307 = vrcp.pop %v2285
        %v2308 = vmul.f32 1.0, %v2307
        %v2309 = vrcp.pop %v2286
        %v2310 = vmul.f32 1.0, %v2309
        %v2311 = vrcp.pop %v2287
        %v2312 = vmul.f32 1.0, %v2311
        %v2313 = vrcp.pop %v2288
        %v2314 = vmul.f32 1.0, %v2313
        %v2315 = vrcp.pop %v2289
        %v2316 = vmul.f32 1.0, %v2315
        %v2317 = vrcp.pop %v2290
        %v2318 = vmul.f32 1.0, %v2317
        %v2319 = vrcp.pop %v2291
        %v2320 = vmul.f32 1.0, %v2319
        %v2321 = vrcp.pop %v2292
        %v2322 = vmul.f32 1.0, %v2321
        %v2323 = vrcp.pop %v2293
        %v2324 = vmul.f32 1.0, %v2323
        %v2325 = vrcp.pop %v2294
        %v2326 = vmul.f32 1.0, %v2325
        %v2327 = vmul.f32 %v2160, %v2296
        %v2328 = vmul.f32 %v2162, %v2298
        %v2329 = vmul.f32 %v2213, %v2300
        %v2330 = vmul.f32 %v2215, %v2302
        %v2331 = vmul.f32 %v2164, %v2304
        %v2332 = vmul.f32 %v2166, %v2306
        %v2333 = vmul.f32 %v2217, %v2308
        %v2334 = vmul.f32 %v2219, %v2310
        %v2335 = vmul.f32 %v2170, %v2312
        %v2336 = vmul.f32 %v2172, %v2314
        %v2337 = vmul.f32 %v2223, %v2316
        %v2338 = vmul.f32 %v2225, %v2318
        %v2339 = vmul.f32 %v2174, %v2320
        %v2340 = vmul.f32 %v2176, %v2322
        %v2341 = vmul.f32 %v2227, %v2324
        %v2342 = vmul.f32 %v2229, %v2326
        %v2343 = vpack.c.bf16 %v2331, %v2327
        %v2344 = vpack.c.bf16 %v2332, %v2328
        %v2345 = vpack.c.bf16 %v2333, %v2329
        %v2346 = vpack.c.bf16 %v2334, %v2330
        %v2347 = vpack.c.bf16 %v2339, %v2335
        %v2348 = vpack.c.bf16 %v2340, %v2336
        %v2349 = vpack.c.bf16 %v2341, %v2337
        %v2350 = vpack.c.bf16 %v2342, %v2338
        %2352 = vset.pattern.permute.xlu0 0
        %2353 = vperm.xlu0 %2352, %v692
        %v2354 = vpop.permute.xlu0 %2353
        %2357 = vset.pattern.permute.xlu0 0
        %2358 = vperm.xlu0 %2357, %v693
        %v2359 = vpop.permute.xlu0 %2358
        %2362 = vset.pattern.permute.xlu0 0
        %2363 = vperm.xlu0 %2362, %v694
        %v2364 = vpop.permute.xlu0 %2363
        %2367 = vset.pattern.permute.xlu0 0
        %2368 = vperm.xlu0 %2367, %v695
        %v2369 = vpop.permute.xlu0 %2368
        %2372 = vset.pattern.permute.xlu0 0
        %2373 = vperm.xlu0 %2372, %v696
        %v2374 = vpop.permute.xlu0 %2373
        %2377 = vset.pattern.permute.xlu0 0
        %2378 = vperm.xlu0 %2377, %v697
        %v2379 = vpop.permute.xlu0 %2378
        %2382 = vset.pattern.permute.xlu0 0
        %2383 = vperm.xlu0 %2382, %v698
        %v2384 = vpop.permute.xlu0 %2383
        %2387 = vset.pattern.permute.xlu0 0
        %2388 = vperm.xlu0 %2387, %v699
        %v2389 = vpop.permute.xlu0 %2388
        %2392 = vset.pattern.permute.xlu0 0
        %2393 = vperm.xlu0 %2392, %v700
        %v2394 = vpop.permute.xlu0 %2393
        %2397 = vset.pattern.permute.xlu0 0
        %2398 = vperm.xlu0 %2397, %v701
        %v2399 = vpop.permute.xlu0 %2398
        %2402 = vset.pattern.permute.xlu0 0
        %2403 = vperm.xlu0 %2402, %v702
        %v2404 = vpop.permute.xlu0 %2403
        %2407 = vset.pattern.permute.xlu0 0
        %2408 = vperm.xlu0 %2407, %v703
        %v2409 = vpop.permute.xlu0 %2408
        %2412 = vset.pattern.permute.xlu0 0
        %2413 = vperm.xlu0 %2412, %v704
        %v2414 = vpop.permute.xlu0 %2413
        %2417 = vset.pattern.permute.xlu0 0
        %2418 = vperm.xlu0 %2417, %v705
        %v2419 = vpop.permute.xlu0 %2418
        %2422 = vset.pattern.permute.xlu0 0
        %2423 = vperm.xlu0 %2422, %v706
        %v2424 = vpop.permute.xlu0 %2423
        %2427 = vset.pattern.permute.xlu0 0
        %2428 = vperm.xlu0 %2427, %v707
        %v2429 = vpop.permute.xlu0 %2428
        %v2447 = vunpack.c.l.b16 %v676
        %v2448 = vunpack.c.l.b16 %v677
        %v2449 = vunpack.c.l.b16 %v678
        %v2450 = vunpack.c.l.b16 %v679
        %v2451 = vunpack.c.l.b16 %v680
        %v2452 = vunpack.c.l.b16 %v681
        %v2453 = vunpack.c.l.b16 %v682
        %v2454 = vunpack.c.l.b16 %v683
        %v2455 = vunpack.c.l.b16 %v684
        %v2456 = vunpack.c.l.b16 %v685
        %v2457 = vunpack.c.l.b16 %v686
        %v2458 = vunpack.c.l.b16 %v687
        %v2459 = vunpack.c.l.b16 %v688
        %v2460 = vunpack.c.l.b16 %v689
        %v2461 = vunpack.c.l.b16 %v690
        %v2462 = vunpack.c.l.b16 %v691
        %v2463 = vpack.c.b16 %v2448, %v2447
        %v2464 = vpack.c.b16 %v2450, %v2449
        %v2465 = vpack.c.b16 %v2452, %v2451
        %v2466 = vpack.c.b16 %v2454, %v2453
        %v2467 = vpack.c.b16 %v2456, %v2455
        %v2468 = vpack.c.b16 %v2458, %v2457
        %v2469 = vpack.c.b16 %v2460, %v2459
        %v2470 = vpack.c.b16 %v2462, %v2461
        %vm2471 = vcmask 261120
        %v2473 = vsel %vm2471, %v2463, 0
        %v2476 = vsel %vm2471, %v2464, 0
        %v2479 = vsel %vm2471, %v2465, 0
        %v2482 = vsel %vm2471, %v2466, 0
        %v2485 = vsel %vm2471, %v2467, 0
        %v2488 = vsel %vm2471, %v2468, 0
        %v2491 = vsel %vm2471, %v2469, 0
        %v2494 = vsel %vm2471, %v2470, 0
        %2496 = vmatprep.subr.bf16.mxu0 0
        %2497 = vmatpush1.bf16.msra.mxu0 0
        %2498 = vmatprep.subr.bf16.mxu0 0
        %2499 = vmatpush1.bf16.msra.mxu0 0
        %2500 = vmatprep.subr.bf16.mxu0 0
        %2501 = vmatpush1.bf16.msra.mxu0 0
        %2502 = vmatprep.subr.bf16.mxu0 0
        %2503 = vmatpush1.bf16.msra.mxu0 0
        %2504 = vmatprep.subr.bf16.mxu0 0
        %2505 = vmatpush1.bf16.msra.mxu0 0
        %2506 = vmatprep.subr.bf16.mxu0 0
        %2507 = vmatpush1.bf16.msra.mxu0 0
        %2508 = vmatprep.subr.bf16.mxu0 %v2348
        %2509 = vmatpush1.bf16.msra.mxu0 %v2347
        %2510 = vmatprep.subr.bf16.mxu0 %v2344
        %2511 = vmatpush1.bf16.msra.mxu0 %v2343
        %2512 = vmatprep.subr.bf16.mxu0 0
        %2513 = vmatpush2.bf16.msra.mxu0 0
        %2514 = vmatprep.subr.bf16.mxu0 0
        %2515 = vmatpush2.bf16.msra.mxu0 0
        %2516 = vmatprep.subr.bf16.mxu0 0
        %2517 = vmatpush2.bf16.msra.mxu0 0
        %2518 = vmatprep.subr.bf16.mxu0 0
        %2519 = vmatpush2.bf16.msra.mxu0 0
        %2520 = vmatprep.subr.bf16.mxu0 0
        %2521 = vmatpush2.bf16.msra.mxu0 0
        %2522 = vmatprep.subr.bf16.mxu0 0
        %2523 = vmatpush2.bf16.msra.mxu0 0
        %2524 = vmatprep.subr.bf16.mxu0 0
        %2525 = vmatpush2.bf16.msra.mxu0 0
        %2526 = vmatprep.subr.bf16.mxu0 0
        %2527 = vmatpush2.bf16.msra.mxu0 0
        %2528 = vmatprep.mubr.bf16.mxu0 0
        %2529 = vmatmul.mubr.bf16.gmra.mxu0 %v2473
        %v2530 = vpop.f32.mrf.mxu0
        %v2531 = vadd.f32 %v2354, %v2530
        %v2532 = vpop.f32.mrf.mxu0
        %v2533 = vadd.f32 %v2354, %v2532
        %v2534 = vpop.f32.mrf.mxu0
        %v2535 = vadd.f32 %v2359, %v2534
        %v2536 = vpop.f32.mrf.mxu0
        %v2537 = vadd.f32 %v2359, %v2536
        %2538 = vmatprep.mubr.bf16.mxu0 0
        %2539 = vmatmul.mubr.bf16.gmra.mxu0 %v2476
        %v2540 = vpop.f32.mrf.mxu0
        %v2541 = vadd.f32 %v2364, %v2540
        %v2542 = vpop.f32.mrf.mxu0
        %v2543 = vadd.f32 %v2364, %v2542
        %v2544 = vpop.f32.mrf.mxu0
        %v2545 = vadd.f32 %v2369, %v2544
        %v2546 = vpop.f32.mrf.mxu0
        %v2547 = vadd.f32 %v2369, %v2546
        %2548 = vmatprep.mubr.bf16.mxu0 0
        %2549 = vmatmul.mubr.bf16.gmra.mxu0 %v2479
        %v2550 = vpop.f32.mrf.mxu0
        %v2551 = vadd.f32 %v2374, %v2550
        %v2552 = vpop.f32.mrf.mxu0
        %v2553 = vadd.f32 %v2374, %v2552
        %v2554 = vpop.f32.mrf.mxu0
        %v2555 = vadd.f32 %v2379, %v2554
        %v2556 = vpop.f32.mrf.mxu0
        %v2557 = vadd.f32 %v2379, %v2556
        %2558 = vmatprep.mubr.bf16.mxu0 0
        %2559 = vmatmul.mubr.bf16.gmra.mxu0 %v2482
        %v2560 = vpop.f32.mrf.mxu0
        %v2561 = vadd.f32 %v2384, %v2560
        %v2562 = vpop.f32.mrf.mxu0
        %v2563 = vadd.f32 %v2384, %v2562
        %v2564 = vpop.f32.mrf.mxu0
        %v2565 = vadd.f32 %v2389, %v2564
        %v2566 = vpop.f32.mrf.mxu0
        %v2567 = vadd.f32 %v2389, %v2566
        %2568 = vmatprep.mubr.bf16.mxu0 0
        %2569 = vmatmul.mubr.bf16.gmra.mxu0 %v2485
        %v2570 = vpop.f32.mrf.mxu0
        %v2571 = vadd.f32 %v2394, %v2570
        %v2572 = vpop.f32.mrf.mxu0
        %v2573 = vadd.f32 %v2394, %v2572
        %v2574 = vpop.f32.mrf.mxu0
        %v2575 = vadd.f32 %v2399, %v2574
        %v2576 = vpop.f32.mrf.mxu0
        %v2577 = vadd.f32 %v2399, %v2576
        %2578 = vmatprep.mubr.bf16.mxu0 0
        %2579 = vmatmul.mubr.bf16.gmra.mxu0 %v2488
        %v2580 = vpop.f32.mrf.mxu0
        %v2581 = vadd.f32 %v2404, %v2580
        %v2582 = vpop.f32.mrf.mxu0
        %v2583 = vadd.f32 %v2404, %v2582
        %v2584 = vpop.f32.mrf.mxu0
        %v2585 = vadd.f32 %v2409, %v2584
        %v2586 = vpop.f32.mrf.mxu0
        %v2587 = vadd.f32 %v2409, %v2586
        %2588 = vmatprep.mubr.bf16.mxu0 0
        %2589 = vmatmul.mubr.bf16.gmra.mxu0 %v2491
        %v2590 = vpop.f32.mrf.mxu0
        %v2591 = vadd.f32 %v2414, %v2590
        %v2592 = vpop.f32.mrf.mxu0
        %v2593 = vadd.f32 %v2414, %v2592
        %v2594 = vpop.f32.mrf.mxu0
        %v2595 = vadd.f32 %v2419, %v2594
        %v2596 = vpop.f32.mrf.mxu0
        %v2597 = vadd.f32 %v2419, %v2596
        %2598 = vmatprep.mubr.bf16.mxu0 0
        %2599 = vmatmul.mubr.bf16.gmra.mxu0 %v2494
        %v2600 = vpop.f32.mrf.mxu0
        %v2601 = vadd.f32 %v2424, %v2600
        %v2602 = vpop.f32.mrf.mxu0
        %v2603 = vadd.f32 %v2424, %v2602
        %v2604 = vpop.f32.mrf.mxu0
        %v2605 = vadd.f32 %v2429, %v2604
        %v2606 = vpop.f32.mrf.mxu0
        %v2607 = vadd.f32 %v2429, %v2606
        %2608 = vdwg.mxu0
        %2609 = vmatprep.subr.bf16.mxu0 0
        %2610 = vmatpush1.bf16.msra.mxu0 0
        %2611 = vmatprep.subr.bf16.mxu0 0
        %2612 = vmatpush1.bf16.msra.mxu0 0
        %2613 = vmatprep.subr.bf16.mxu0 0
        %2614 = vmatpush1.bf16.msra.mxu0 0
        %2615 = vmatprep.subr.bf16.mxu0 0
        %2616 = vmatpush1.bf16.msra.mxu0 0
        %2617 = vmatprep.subr.bf16.mxu0 0
        %2618 = vmatpush1.bf16.msra.mxu0 0
        %2619 = vmatprep.subr.bf16.mxu0 0
        %2620 = vmatpush1.bf16.msra.mxu0 0
        %2621 = vmatprep.subr.bf16.mxu0 %v2350
        %2622 = vmatpush1.bf16.msra.mxu0 %v2349
        %2623 = vmatprep.subr.bf16.mxu0 %v2346
        %2624 = vmatpush1.bf16.msra.mxu0 %v2345
        %2625 = vmatprep.subr.bf16.mxu0 0
        %2626 = vmatpush2.bf16.msra.mxu0 0
        %2627 = vmatprep.subr.bf16.mxu0 0
        %2628 = vmatpush2.bf16.msra.mxu0 0
        %2629 = vmatprep.subr.bf16.mxu0 0
        %2630 = vmatpush2.bf16.msra.mxu0 0
        %2631 = vmatprep.subr.bf16.mxu0 0
        %2632 = vmatpush2.bf16.msra.mxu0 0
        %2633 = vmatprep.subr.bf16.mxu0 0
        %2634 = vmatpush2.bf16.msra.mxu0 0
        %2635 = vmatprep.subr.bf16.mxu0 0
        %2636 = vmatpush2.bf16.msra.mxu0 0
        %2637 = vmatprep.subr.bf16.mxu0 0
        %2638 = vmatpush2.bf16.msra.mxu0 0
        %2639 = vmatprep.subr.bf16.mxu0 0
        %2640 = vmatpush2.bf16.msra.mxu0 0
        %2641 = vmatprep.mubr.bf16.mxu0 0
        %2642 = vmatmul.mubr.bf16.gmra.mxu0 %v2473
        %v2643 = vpop.f32.mrf.mxu0
        %v2644 = vadd.f32 %v2354, %v2643
        %v2645 = vpop.f32.mrf.mxu0
        %v2646 = vadd.f32 %v2354, %v2645
        %v2647 = vpop.f32.mrf.mxu0
        %v2648 = vadd.f32 %v2359, %v2647
        %v2649 = vpop.f32.mrf.mxu0
        %v2650 = vadd.f32 %v2359, %v2649
        %2651 = vmatprep.mubr.bf16.mxu0 0
        %2652 = vmatmul.mubr.bf16.gmra.mxu0 %v2476
        %v2653 = vpop.f32.mrf.mxu0
        %v2654 = vadd.f32 %v2364, %v2653
        %v2655 = vpop.f32.mrf.mxu0
        %v2656 = vadd.f32 %v2364, %v2655
        %v2657 = vpop.f32.mrf.mxu0
        %v2658 = vadd.f32 %v2369, %v2657
        %v2659 = vpop.f32.mrf.mxu0
        %v2660 = vadd.f32 %v2369, %v2659
        %2661 = vmatprep.mubr.bf16.mxu0 0
        %2662 = vmatmul.mubr.bf16.gmra.mxu0 %v2479
        %v2663 = vpop.f32.mrf.mxu0
        %v2664 = vadd.f32 %v2374, %v2663
        %v2665 = vpop.f32.mrf.mxu0
        %v2666 = vadd.f32 %v2374, %v2665
        %v2667 = vpop.f32.mrf.mxu0
        %v2668 = vadd.f32 %v2379, %v2667
        %v2669 = vpop.f32.mrf.mxu0
        %v2670 = vadd.f32 %v2379, %v2669
        %2671 = vmatprep.mubr.bf16.mxu0 0
        %2672 = vmatmul.mubr.bf16.gmra.mxu0 %v2482
        %v2673 = vpop.f32.mrf.mxu0
        %v2674 = vadd.f32 %v2384, %v2673
        %v2675 = vpop.f32.mrf.mxu0
        %v2676 = vadd.f32 %v2384, %v2675
        %v2677 = vpop.f32.mrf.mxu0
        %v2678 = vadd.f32 %v2389, %v2677
        %v2679 = vpop.f32.mrf.mxu0
        %v2680 = vadd.f32 %v2389, %v2679
        %2681 = vmatprep.mubr.bf16.mxu0 0
        %2682 = vmatmul.mubr.bf16.gmra.mxu0 %v2485
        %v2683 = vpop.f32.mrf.mxu0
        %v2684 = vadd.f32 %v2394, %v2683
        %v2685 = vpop.f32.mrf.mxu0
        %v2686 = vadd.f32 %v2394, %v2685
        %v2687 = vpop.f32.mrf.mxu0
        %v2688 = vadd.f32 %v2399, %v2687
        %v2689 = vpop.f32.mrf.mxu0
        %v2690 = vadd.f32 %v2399, %v2689
        %2691 = vmatprep.mubr.bf16.mxu0 0
        %2692 = vmatmul.mubr.bf16.gmra.mxu0 %v2488
        %v2693 = vpop.f32.mrf.mxu0
        %v2694 = vadd.f32 %v2404, %v2693
        %v2695 = vpop.f32.mrf.mxu0
        %v2696 = vadd.f32 %v2404, %v2695
        %v2697 = vpop.f32.mrf.mxu0
        %v2698 = vadd.f32 %v2409, %v2697
        %v2699 = vpop.f32.mrf.mxu0
        %v2700 = vadd.f32 %v2409, %v2699
        %2701 = vmatprep.mubr.bf16.mxu0 0
        %2702 = vmatmul.mubr.bf16.gmra.mxu0 %v2491
        %v2703 = vpop.f32.mrf.mxu0
        %v2704 = vadd.f32 %v2414, %v2703
        %v2705 = vpop.f32.mrf.mxu0
        %v2706 = vadd.f32 %v2414, %v2705
        %v2707 = vpop.f32.mrf.mxu0
        %v2708 = vadd.f32 %v2419, %v2707
        %v2709 = vpop.f32.mrf.mxu0
        %v2710 = vadd.f32 %v2419, %v2709
        %2711 = vmatprep.mubr.bf16.mxu0 0
        %2712 = vmatmul.mubr.bf16.gmra.mxu0 %v2494
        %v2713 = vpop.f32.mrf.mxu0
        %v2714 = vadd.f32 %v2424, %v2713
        %v2715 = vpop.f32.mrf.mxu0
        %v2716 = vadd.f32 %v2424, %v2715
        %v2717 = vpop.f32.mrf.mxu0
        %v2718 = vadd.f32 %v2429, %v2717
        %v2719 = vpop.f32.mrf.mxu0
        %v2720 = vadd.f32 %v2429, %v2719
        %2721 = vdwg.mxu0
        %2723 = vset.pattern.permute.xlu0 0
        %2724 = vperm.xlu0 %2723, %v636
        %v2725 = vpop.permute.xlu0 %2724
        %2728 = vset.pattern.permute.xlu0 0
        %2729 = vperm.xlu0 %2728, %v637
        %v2730 = vpop.permute.xlu0 %2729
        %2733 = vset.pattern.permute.xlu0 0
        %2734 = vperm.xlu0 %2733, %v638
        %v2735 = vpop.permute.xlu0 %2734
        %2738 = vset.pattern.permute.xlu0 0
        %2739 = vperm.xlu0 %2738, %v639
        %v2740 = vpop.permute.xlu0 %2739
        %2743 = vset.pattern.permute.xlu0 0
        %2744 = vperm.xlu0 %2743, %v640
        %v2745 = vpop.permute.xlu0 %2744
        %2748 = vset.pattern.permute.xlu0 0
        %2749 = vperm.xlu0 %2748, %v641
        %v2750 = vpop.permute.xlu0 %2749
        %2753 = vset.pattern.permute.xlu0 0
        %2754 = vperm.xlu0 %2753, %v642
        %v2755 = vpop.permute.xlu0 %2754
        %2758 = vset.pattern.permute.xlu0 0
        %2759 = vperm.xlu0 %2758, %v643
        %v2760 = vpop.permute.xlu0 %2759
        %2763 = vset.pattern.permute.xlu0 0
        %2764 = vperm.xlu0 %2763, %v644
        %v2765 = vpop.permute.xlu0 %2764
        %2768 = vset.pattern.permute.xlu0 0
        %2769 = vperm.xlu0 %2768, %v645
        %v2770 = vpop.permute.xlu0 %2769
        %2773 = vset.pattern.permute.xlu0 0
        %2774 = vperm.xlu0 %2773, %v646
        %v2775 = vpop.permute.xlu0 %2774
        %2778 = vset.pattern.permute.xlu0 0
        %2779 = vperm.xlu0 %2778, %v647
        %v2780 = vpop.permute.xlu0 %2779
        %2783 = vset.pattern.permute.xlu0 0
        %2784 = vperm.xlu0 %2783, %v648
        %v2785 = vpop.permute.xlu0 %2784
        %2788 = vset.pattern.permute.xlu0 0
        %2789 = vperm.xlu0 %2788, %v649
        %v2790 = vpop.permute.xlu0 %2789
        %2793 = vset.pattern.permute.xlu0 0
        %2794 = vperm.xlu0 %2793, %v650
        %v2795 = vpop.permute.xlu0 %2794
        %2798 = vset.pattern.permute.xlu0 0
        %2799 = vperm.xlu0 %2798, %v651
        %v2800 = vpop.permute.xlu0 %2799
        %v2802 = vmul.f32 %v2725, %v572
        %v2803 = vmul.f32 %v2725, %v573
        %v2804 = vmul.f32 %v2725, %v574
        %v2805 = vmul.f32 %v2725, %v575
        %v2806 = vmul.f32 %v2730, %v576
        %v2807 = vmul.f32 %v2730, %v577
        %v2808 = vmul.f32 %v2730, %v578
        %v2809 = vmul.f32 %v2730, %v579
        %v2810 = vmul.f32 %v2735, %v580
        %v2811 = vmul.f32 %v2735, %v581
        %v2812 = vmul.f32 %v2735, %v582
        %v2813 = vmul.f32 %v2735, %v583
        %v2814 = vmul.f32 %v2740, %v584
        %v2815 = vmul.f32 %v2740, %v585
        %v2816 = vmul.f32 %v2740, %v586
        %v2817 = vmul.f32 %v2740, %v587
        %v2818 = vmul.f32 %v2745, %v588
        %v2819 = vmul.f32 %v2745, %v589
        %v2820 = vmul.f32 %v2745, %v590
        %v2821 = vmul.f32 %v2745, %v591
        %v2822 = vmul.f32 %v2750, %v592
        %v2823 = vmul.f32 %v2750, %v593
        %v2824 = vmul.f32 %v2750, %v594
        %v2825 = vmul.f32 %v2750, %v595
        %v2826 = vmul.f32 %v2755, %v596
        %v2827 = vmul.f32 %v2755, %v597
        %v2828 = vmul.f32 %v2755, %v598
        %v2829 = vmul.f32 %v2755, %v599
        %v2830 = vmul.f32 %v2760, %v600
        %v2831 = vmul.f32 %v2760, %v601
        %v2832 = vmul.f32 %v2760, %v602
        %v2833 = vmul.f32 %v2760, %v603
        %v2834 = vmul.f32 %v2765, %v604
        %v2835 = vmul.f32 %v2765, %v605
        %v2836 = vmul.f32 %v2765, %v606
        %v2837 = vmul.f32 %v2765, %v607
        %v2838 = vmul.f32 %v2770, %v608
        %v2839 = vmul.f32 %v2770, %v609
        %v2840 = vmul.f32 %v2770, %v610
        %v2841 = vmul.f32 %v2770, %v611
        %v2842 = vmul.f32 %v2775, %v612
        %v2843 = vmul.f32 %v2775, %v613
        %v2844 = vmul.f32 %v2775, %v614
        %v2845 = vmul.f32 %v2775, %v615
        %v2846 = vmul.f32 %v2780, %v616
        %v2847 = vmul.f32 %v2780, %v617
        %v2848 = vmul.f32 %v2780, %v618
        %v2849 = vmul.f32 %v2780, %v619
        %v2850 = vmul.f32 %v2785, %v620
        %v2851 = vmul.f32 %v2785, %v621
        %v2852 = vmul.f32 %v2785, %v622
        %v2853 = vmul.f32 %v2785, %v623
        %v2854 = vmul.f32 %v2790, %v624
        %v2855 = vmul.f32 %v2790, %v625
        %v2856 = vmul.f32 %v2790, %v626
        %v2857 = vmul.f32 %v2790, %v627
        %v2858 = vmul.f32 %v2795, %v628
        %v2859 = vmul.f32 %v2795, %v629
        %v2860 = vmul.f32 %v2795, %v630
        %v2861 = vmul.f32 %v2795, %v631
        %v2862 = vmul.f32 %v2800, %v632
        %v2863 = vmul.f32 %v2800, %v633
        %v2864 = vmul.f32 %v2800, %v634
        %v2865 = vmul.f32 %v2800, %v635
        %v2866 = vadd.f32 %v2802, %v2531
        %v2867 = vadd.f32 %v2803, %v2533
        %v2868 = vadd.f32 %v2804, %v2644
        %v2869 = vadd.f32 %v2805, %v2646
        %v2870 = vadd.f32 %v2806, %v2535
        %v2871 = vadd.f32 %v2807, %v2537
        %v2872 = vadd.f32 %v2808, %v2648
        %v2873 = vadd.f32 %v2809, %v2650
        %v2874 = vadd.f32 %v2810, %v2541
        %v2875 = vadd.f32 %v2811, %v2543
        %v2876 = vadd.f32 %v2812, %v2654
        %v2877 = vadd.f32 %v2813, %v2656
        %v2878 = vadd.f32 %v2814, %v2545
        %v2879 = vadd.f32 %v2815, %v2547
        %v2880 = vadd.f32 %v2816, %v2658
        %v2881 = vadd.f32 %v2817, %v2660
        %v2882 = vadd.f32 %v2818, %v2551
        %v2883 = vadd.f32 %v2819, %v2553
        %v2884 = vadd.f32 %v2820, %v2664
        %v2885 = vadd.f32 %v2821, %v2666
        %v2886 = vadd.f32 %v2822, %v2555
        %v2887 = vadd.f32 %v2823, %v2557
        %v2888 = vadd.f32 %v2824, %v2668
        %v2889 = vadd.f32 %v2825, %v2670
        %v2890 = vadd.f32 %v2826, %v2561
        %v2891 = vadd.f32 %v2827, %v2563
        %v2892 = vadd.f32 %v2828, %v2674
        %v2893 = vadd.f32 %v2829, %v2676
        %v2894 = vadd.f32 %v2830, %v2565
        %v2895 = vadd.f32 %v2831, %v2567
        %v2896 = vadd.f32 %v2832, %v2678
        %v2897 = vadd.f32 %v2833, %v2680
        %v2898 = vadd.f32 %v2834, %v2571
        %v2899 = vadd.f32 %v2835, %v2573
        %v2900 = vadd.f32 %v2836, %v2684
        %v2901 = vadd.f32 %v2837, %v2686
        %v2902 = vadd.f32 %v2838, %v2575
        %v2903 = vadd.f32 %v2839, %v2577
        %v2904 = vadd.f32 %v2840, %v2688
        %v2905 = vadd.f32 %v2841, %v2690
        %v2906 = vadd.f32 %v2842, %v2581
        %v2907 = vadd.f32 %v2843, %v2583
        %v2908 = vadd.f32 %v2844, %v2694
        %v2909 = vadd.f32 %v2845, %v2696
        %v2910 = vadd.f32 %v2846, %v2585
        %v2911 = vadd.f32 %v2847, %v2587
        %v2912 = vadd.f32 %v2848, %v2698
        %v2913 = vadd.f32 %v2849, %v2700
        %v2914 = vadd.f32 %v2850, %v2591
        %v2915 = vadd.f32 %v2851, %v2593
        %v2916 = vadd.f32 %v2852, %v2704
        %v2917 = vadd.f32 %v2853, %v2706
        %v2918 = vadd.f32 %v2854, %v2595
        %v2919 = vadd.f32 %v2855, %v2597
        %v2920 = vadd.f32 %v2856, %v2708
        %v2921 = vadd.f32 %v2857, %v2710
        %v2922 = vadd.f32 %v2858, %v2601
        %v2923 = vadd.f32 %v2859, %v2603
        %v2924 = vadd.f32 %v2860, %v2714
        %v2925 = vadd.f32 %v2861, %v2716
        %v2926 = vadd.f32 %v2862, %v2605
        %v2927 = vadd.f32 %v2863, %v2607
        %v2928 = vadd.f32 %v2864, %v2718
        %v2929 = vadd.f32 %v2865, %v2720
        %v2930 = vpack.c.bf16 %v2870, %v2866
        %v2931 = vpack.c.bf16 %v2871, %v2867
        %v2932 = vpack.c.bf16 %v2872, %v2868
        %v2933 = vpack.c.bf16 %v2873, %v2869
        %v2934 = vpack.c.bf16 %v2878, %v2874
        %v2935 = vpack.c.bf16 %v2879, %v2875
        %v2936 = vpack.c.bf16 %v2880, %v2876
        %v2937 = vpack.c.bf16 %v2881, %v2877
        %v2938 = vpack.c.bf16 %v2886, %v2882
        %v2939 = vpack.c.bf16 %v2887, %v2883
        %v2940 = vpack.c.bf16 %v2888, %v2884
        %v2941 = vpack.c.bf16 %v2889, %v2885
        %v2942 = vpack.c.bf16 %v2894, %v2890
        %v2943 = vpack.c.bf16 %v2895, %v2891
        %v2944 = vpack.c.bf16 %v2896, %v2892
        %v2945 = vpack.c.bf16 %v2897, %v2893
        %v2946 = vpack.c.bf16 %v2902, %v2898
        %v2947 = vpack.c.bf16 %v2903, %v2899
        %v2948 = vpack.c.bf16 %v2904, %v2900
        %v2949 = vpack.c.bf16 %v2905, %v2901
        %v2950 = vpack.c.bf16 %v2910, %v2906
        %v2951 = vpack.c.bf16 %v2911, %v2907
        %v2952 = vpack.c.bf16 %v2912, %v2908
        %v2953 = vpack.c.bf16 %v2913, %v2909
        %v2954 = vpack.c.bf16 %v2918, %v2914
        %v2955 = vpack.c.bf16 %v2919, %v2915
        %v2956 = vpack.c.bf16 %v2920, %v2916
        %v2957 = vpack.c.bf16 %v2921, %v2917
        %v2958 = vpack.c.bf16 %v2926, %v2922
        %v2959 = vpack.c.bf16 %v2927, %v2923
        %v2960 = vpack.c.bf16 %v2928, %v2924
        %v2961 = vpack.c.bf16 %v2929, %v2925
        %2963 = vset.pattern.permute.xlu0 0
        %2964 = vperm.xlu0 %2963, %v724
        %v2965 = vpop.permute.xlu0 %2964
        %2968 = vset.pattern.permute.xlu0 0
        %2969 = vperm.xlu0 %2968, %v725
        %v2970 = vpop.permute.xlu0 %2969
        %2973 = vset.pattern.permute.xlu0 0
        %2974 = vperm.xlu0 %2973, %v726
        %v2975 = vpop.permute.xlu0 %2974
        %2978 = vset.pattern.permute.xlu0 0
        %2979 = vperm.xlu0 %2978, %v727
        %v2980 = vpop.permute.xlu0 %2979
        %2983 = vset.pattern.permute.xlu0 0
        %2984 = vperm.xlu0 %2983, %v728
        %v2985 = vpop.permute.xlu0 %2984
        %2988 = vset.pattern.permute.xlu0 0
        %2989 = vperm.xlu0 %2988, %v729
        %v2990 = vpop.permute.xlu0 %2989
        %2993 = vset.pattern.permute.xlu0 0
        %2994 = vperm.xlu0 %2993, %v730
        %v2995 = vpop.permute.xlu0 %2994
        %2998 = vset.pattern.permute.xlu0 0
        %2999 = vperm.xlu0 %2998, %v731
        %v3000 = vpop.permute.xlu0 %2999
        %3003 = vset.pattern.permute.xlu0 0
        %3004 = vperm.xlu0 %3003, %v732
        %v3005 = vpop.permute.xlu0 %3004
        %3008 = vset.pattern.permute.xlu0 0
        %3009 = vperm.xlu0 %3008, %v733
        %v3010 = vpop.permute.xlu0 %3009
        %3013 = vset.pattern.permute.xlu0 0
        %3014 = vperm.xlu0 %3013, %v734
        %v3015 = vpop.permute.xlu0 %3014
        %3018 = vset.pattern.permute.xlu0 0
        %3019 = vperm.xlu0 %3018, %v735
        %v3020 = vpop.permute.xlu0 %3019
        %3023 = vset.pattern.permute.xlu0 0
        %3024 = vperm.xlu0 %3023, %v736
        %v3025 = vpop.permute.xlu0 %3024
        %3028 = vset.pattern.permute.xlu0 0
        %3029 = vperm.xlu0 %3028, %v737
        %v3030 = vpop.permute.xlu0 %3029
        %3033 = vset.pattern.permute.xlu0 0
        %3034 = vperm.xlu0 %3033, %v738
        %v3035 = vpop.permute.xlu0 %3034
        %3038 = vset.pattern.permute.xlu0 0
        %3039 = vperm.xlu0 %3038, %v739
        %v3040 = vpop.permute.xlu0 %3039
        %v3058 = vunpack.c.l.b16 %v708
        %v3059 = vunpack.c.l.b16 %v709
        %v3060 = vunpack.c.l.b16 %v710
        %v3061 = vunpack.c.l.b16 %v711
        %v3062 = vunpack.c.l.b16 %v712
        %v3063 = vunpack.c.l.b16 %v713
        %v3064 = vunpack.c.l.b16 %v714
        %v3065 = vunpack.c.l.b16 %v715
        %v3066 = vunpack.c.l.b16 %v716
        %v3067 = vunpack.c.l.b16 %v717
        %v3068 = vunpack.c.l.b16 %v718
        %v3069 = vunpack.c.l.b16 %v719
        %v3070 = vunpack.c.l.b16 %v720
        %v3071 = vunpack.c.l.b16 %v721
        %v3072 = vunpack.c.l.b16 %v722
        %v3073 = vunpack.c.l.b16 %v723
        %v3074 = vpack.c.b16 %v3059, %v3058
        %v3075 = vpack.c.b16 %v3061, %v3060
        %v3076 = vpack.c.b16 %v3063, %v3062
        %v3077 = vpack.c.b16 %v3065, %v3064
        %v3078 = vpack.c.b16 %v3067, %v3066
        %v3079 = vpack.c.b16 %v3069, %v3068
        %v3080 = vpack.c.b16 %v3071, %v3070
        %v3081 = vpack.c.b16 %v3073, %v3072
        %3090 = vmatprep.subr.bf16.mxu0 %v2959
        %3091 = vmatpush1.bf16.msra.mxu0 %v2958
        %3092 = vmatprep.subr.bf16.mxu0 %v2955
        %3093 = vmatpush1.bf16.msra.mxu0 %v2954
        %3094 = vmatprep.subr.bf16.mxu0 %v2951
        %3095 = vmatpush1.bf16.msra.mxu0 %v2950
        %3096 = vmatprep.subr.bf16.mxu0 %v2947
        %3097 = vmatpush1.bf16.msra.mxu0 %v2946
        %3098 = vmatprep.subr.bf16.mxu0 %v2943
        %3099 = vmatpush1.bf16.msra.mxu0 %v2942
        %3100 = vmatprep.subr.bf16.mxu0 %v2939
        %3101 = vmatpush1.bf16.msra.mxu0 %v2938
        %3102 = vmatprep.subr.bf16.mxu0 %v2935
        %3103 = vmatpush1.bf16.msra.mxu0 %v2934
        %3104 = vmatprep.subr.bf16.mxu0 %v2931
        %3105 = vmatpush1.bf16.msra.mxu0 %v2930
        %3106 = vmatprep.subr.bf16.mxu0 0
        %3107 = vmatpush2.bf16.msra.mxu0 0
        %3108 = vmatprep.subr.bf16.mxu0 0
        %3109 = vmatpush2.bf16.msra.mxu0 0
        %3110 = vmatprep.subr.bf16.mxu0 0
        %3111 = vmatpush2.bf16.msra.mxu0 0
        %3112 = vmatprep.subr.bf16.mxu0 0
        %3113 = vmatpush2.bf16.msra.mxu0 0
        %3114 = vmatprep.subr.bf16.mxu0 0
        %3115 = vmatpush2.bf16.msra.mxu0 0
        %3116 = vmatprep.subr.bf16.mxu0 0
        %3117 = vmatpush2.bf16.msra.mxu0 0
        %3118 = vmatprep.subr.bf16.mxu0 0
        %3119 = vmatpush2.bf16.msra.mxu0 0
        %3120 = vmatprep.subr.bf16.mxu0 0
        %3121 = vmatpush2.bf16.msra.mxu0 0
        %3122 = vmatprep.mubr.bf16.mxu0 0
        %3123 = vmatmul.mubr.bf16.gmra.mxu0 %v3074
        %v3124 = vpop.f32.mrf.mxu0
        %v3125 = vadd.f32 %v2965, %v3124
        %v3126 = vpop.f32.mrf.mxu0
        %v3127 = vadd.f32 %v2965, %v3126
        %v3128 = vpop.f32.mrf.mxu0
        %v3129 = vadd.f32 %v2970, %v3128
        %v3130 = vpop.f32.mrf.mxu0
        %v3131 = vadd.f32 %v2970, %v3130
        %3132 = vmatprep.mubr.bf16.mxu0 0
        %3133 = vmatmul.mubr.bf16.gmra.mxu0 %v3075
        %v3134 = vpop.f32.mrf.mxu0
        %v3135 = vadd.f32 %v2975, %v3134
        %v3136 = vpop.f32.mrf.mxu0
        %v3137 = vadd.f32 %v2975, %v3136
        %v3138 = vpop.f32.mrf.mxu0
        %v3139 = vadd.f32 %v2980, %v3138
        %v3140 = vpop.f32.mrf.mxu0
        %v3141 = vadd.f32 %v2980, %v3140
        %3142 = vmatprep.mubr.bf16.mxu0 0
        %3143 = vmatmul.mubr.bf16.gmra.mxu0 %v3076
        %v3144 = vpop.f32.mrf.mxu0
        %v3145 = vadd.f32 %v2985, %v3144
        %v3146 = vpop.f32.mrf.mxu0
        %v3147 = vadd.f32 %v2985, %v3146
        %v3148 = vpop.f32.mrf.mxu0
        %v3149 = vadd.f32 %v2990, %v3148
        %v3150 = vpop.f32.mrf.mxu0
        %v3151 = vadd.f32 %v2990, %v3150
        %3152 = vmatprep.mubr.bf16.mxu0 0
        %3153 = vmatmul.mubr.bf16.gmra.mxu0 %v3077
        %v3154 = vpop.f32.mrf.mxu0
        %v3155 = vadd.f32 %v2995, %v3154
        %v3156 = vpop.f32.mrf.mxu0
        %v3157 = vadd.f32 %v2995, %v3156
        %v3158 = vpop.f32.mrf.mxu0
        %v3159 = vadd.f32 %v3000, %v3158
        %v3160 = vpop.f32.mrf.mxu0
        %v3161 = vadd.f32 %v3000, %v3160
        %3162 = vmatprep.mubr.bf16.mxu0 0
        %3163 = vmatmul.mubr.bf16.gmra.mxu0 %v3078
        %v3164 = vpop.f32.mrf.mxu0
        %v3165 = vadd.f32 %v3005, %v3164
        %v3166 = vpop.f32.mrf.mxu0
        %v3167 = vadd.f32 %v3005, %v3166
        %v3168 = vpop.f32.mrf.mxu0
        %v3169 = vadd.f32 %v3010, %v3168
        %v3170 = vpop.f32.mrf.mxu0
        %v3171 = vadd.f32 %v3010, %v3170
        %3172 = vmatprep.mubr.bf16.mxu0 0
        %3173 = vmatmul.mubr.bf16.gmra.mxu0 %v3079
        %v3174 = vpop.f32.mrf.mxu0
        %v3175 = vadd.f32 %v3015, %v3174
        %v3176 = vpop.f32.mrf.mxu0
        %v3177 = vadd.f32 %v3015, %v3176
        %v3178 = vpop.f32.mrf.mxu0
        %v3179 = vadd.f32 %v3020, %v3178
        %v3180 = vpop.f32.mrf.mxu0
        %v3181 = vadd.f32 %v3020, %v3180
        %3182 = vmatprep.mubr.bf16.mxu0 0
        %3183 = vmatmul.mubr.bf16.gmra.mxu0 %v3080
        %v3184 = vpop.f32.mrf.mxu0
        %v3185 = vadd.f32 %v3025, %v3184
        %v3186 = vpop.f32.mrf.mxu0
        %v3187 = vadd.f32 %v3025, %v3186
        %v3188 = vpop.f32.mrf.mxu0
        %v3189 = vadd.f32 %v3030, %v3188
        %v3190 = vpop.f32.mrf.mxu0
        %v3191 = vadd.f32 %v3030, %v3190
        %3192 = vmatprep.mubr.bf16.mxu0 0
        %3193 = vmatmul.mubr.bf16.gmra.mxu0 %v3081
        %v3194 = vpop.f32.mrf.mxu0
        %v3195 = vadd.f32 %v3035, %v3194
        %v3196 = vpop.f32.mrf.mxu0
        %v3197 = vadd.f32 %v3035, %v3196
        %v3198 = vpop.f32.mrf.mxu0
        %v3199 = vadd.f32 %v3040, %v3198
        %v3200 = vpop.f32.mrf.mxu0
        %v3201 = vadd.f32 %v3040, %v3200
        %3202 = vdwg.mxu0
        %3203 = vmatprep.subr.bf16.mxu0 %v2961
        %3204 = vmatpush1.bf16.msra.mxu0 %v2960
        %3205 = vmatprep.subr.bf16.mxu0 %v2957
        %3206 = vmatpush1.bf16.msra.mxu0 %v2956
        %3207 = vmatprep.subr.bf16.mxu0 %v2953
        %3208 = vmatpush1.bf16.msra.mxu0 %v2952
        %3209 = vmatprep.subr.bf16.mxu0 %v2949
        %3210 = vmatpush1.bf16.msra.mxu0 %v2948
        %3211 = vmatprep.subr.bf16.mxu0 %v2945
        %3212 = vmatpush1.bf16.msra.mxu0 %v2944
        %3213 = vmatprep.subr.bf16.mxu0 %v2941
        %3214 = vmatpush1.bf16.msra.mxu0 %v2940
        %3215 = vmatprep.subr.bf16.mxu0 %v2937
        %3216 = vmatpush1.bf16.msra.mxu0 %v2936
        %3217 = vmatprep.subr.bf16.mxu0 %v2933
        %3218 = vmatpush1.bf16.msra.mxu0 %v2932
        %3219 = vmatprep.subr.bf16.mxu0 0
        %3220 = vmatpush2.bf16.msra.mxu0 0
        %3221 = vmatprep.subr.bf16.mxu0 0
        %3222 = vmatpush2.bf16.msra.mxu0 0
        %3223 = vmatprep.subr.bf16.mxu0 0
        %3224 = vmatpush2.bf16.msra.mxu0 0
        %3225 = vmatprep.subr.bf16.mxu0 0
        %3226 = vmatpush2.bf16.msra.mxu0 0
        %3227 = vmatprep.subr.bf16.mxu0 0
        %3228 = vmatpush2.bf16.msra.mxu0 0
        %3229 = vmatprep.subr.bf16.mxu0 0
        %3230 = vmatpush2.bf16.msra.mxu0 0
        %3231 = vmatprep.subr.bf16.mxu0 0
        %3232 = vmatpush2.bf16.msra.mxu0 0
        %3233 = vmatprep.subr.bf16.mxu0 0
        %3234 = vmatpush2.bf16.msra.mxu0 0
        %3235 = vmatprep.mubr.bf16.mxu0 0
        %3236 = vmatmul.mubr.bf16.gmra.mxu0 %v3074
        %v3237 = vpop.f32.mrf.mxu0
        %v3238 = vadd.f32 %v2965, %v3237
        %v3239 = vpop.f32.mrf.mxu0
        %v3240 = vadd.f32 %v2965, %v3239
        %v3241 = vpop.f32.mrf.mxu0
        %v3242 = vadd.f32 %v2970, %v3241
        %v3243 = vpop.f32.mrf.mxu0
        %v3244 = vadd.f32 %v2970, %v3243
        %3245 = vmatprep.mubr.bf16.mxu0 0
        %3246 = vmatmul.mubr.bf16.gmra.mxu0 %v3075
        %v3247 = vpop.f32.mrf.mxu0
        %v3248 = vadd.f32 %v2975, %v3247
        %v3249 = vpop.f32.mrf.mxu0
        %v3250 = vadd.f32 %v2975, %v3249
        %v3251 = vpop.f32.mrf.mxu0
        %v3252 = vadd.f32 %v2980, %v3251
        %v3253 = vpop.f32.mrf.mxu0
        %v3254 = vadd.f32 %v2980, %v3253
        %3255 = vmatprep.mubr.bf16.mxu0 0
        %3256 = vmatmul.mubr.bf16.gmra.mxu0 %v3076
        %v3257 = vpop.f32.mrf.mxu0
        %v3258 = vadd.f32 %v2985, %v3257
        %v3259 = vpop.f32.mrf.mxu0
        %v3260 = vadd.f32 %v2985, %v3259
        %v3261 = vpop.f32.mrf.mxu0
        %v3262 = vadd.f32 %v2990, %v3261
        %v3263 = vpop.f32.mrf.mxu0
        %v3264 = vadd.f32 %v2990, %v3263
        %3265 = vmatprep.mubr.bf16.mxu0 0
        %3266 = vmatmul.mubr.bf16.gmra.mxu0 %v3077
        %v3267 = vpop.f32.mrf.mxu0
        %v3268 = vadd.f32 %v2995, %v3267
        %v3269 = vpop.f32.mrf.mxu0
        %v3270 = vadd.f32 %v2995, %v3269
        %v3271 = vpop.f32.mrf.mxu0
        %v3272 = vadd.f32 %v3000, %v3271
        %v3273 = vpop.f32.mrf.mxu0
        %v3274 = vadd.f32 %v3000, %v3273
        %3275 = vmatprep.mubr.bf16.mxu0 0
        %3276 = vmatmul.mubr.bf16.gmra.mxu0 %v3078
        %v3277 = vpop.f32.mrf.mxu0
        %v3278 = vadd.f32 %v3005, %v3277
        %v3279 = vpop.f32.mrf.mxu0
        %v3280 = vadd.f32 %v3005, %v3279
        %v3281 = vpop.f32.mrf.mxu0
        %v3282 = vadd.f32 %v3010, %v3281
        %v3283 = vpop.f32.mrf.mxu0
        %v3284 = vadd.f32 %v3010, %v3283
        %3285 = vmatprep.mubr.bf16.mxu0 0
        %3286 = vmatmul.mubr.bf16.gmra.mxu0 %v3079
        %v3287 = vpop.f32.mrf.mxu0
        %v3288 = vadd.f32 %v3015, %v3287
        %v3289 = vpop.f32.mrf.mxu0
        %v3290 = vadd.f32 %v3015, %v3289
        %v3291 = vpop.f32.mrf.mxu0
        %v3292 = vadd.f32 %v3020, %v3291
        %v3293 = vpop.f32.mrf.mxu0
        %v3294 = vadd.f32 %v3020, %v3293
        %3295 = vmatprep.mubr.bf16.mxu0 0
        %3296 = vmatmul.mubr.bf16.gmra.mxu0 %v3080
        %v3297 = vpop.f32.mrf.mxu0
        %v3298 = vadd.f32 %v3025, %v3297
        %v3299 = vpop.f32.mrf.mxu0
        %v3300 = vadd.f32 %v3025, %v3299
        %v3301 = vpop.f32.mrf.mxu0
        %v3302 = vadd.f32 %v3030, %v3301
        %v3303 = vpop.f32.mrf.mxu0
        %v3304 = vadd.f32 %v3030, %v3303
        %3305 = vmatprep.mubr.bf16.mxu0 0
        %3306 = vmatmul.mubr.bf16.gmra.mxu0 %v3081
        %v3307 = vpop.f32.mrf.mxu0
        %v3308 = vadd.f32 %v3035, %v3307
        %v3309 = vpop.f32.mrf.mxu0
        %v3310 = vadd.f32 %v3035, %v3309
        %v3311 = vpop.f32.mrf.mxu0
        %v3312 = vadd.f32 %v3040, %v3311
        %v3313 = vpop.f32.mrf.mxu0
        %v3314 = vadd.f32 %v3040, %v3313
        %3315 = vdwg.mxu0
        %v3316 = vmax.f32 %v3125, %v3129
        %v3317 = vmax.f32 %v3316, %v3135
        %v3318 = vmax.f32 %v3317, %v3139
        %v3319 = vmax.f32 %v3318, %v3145
        %v3320 = vmax.f32 %v3319, %v3149
        %v3321 = vmax.f32 %v3320, %v3155
        %v3322 = vmax.f32 %v3321, %v3159
        %v3323 = vmax.f32 %v3322, %v3165
        %v3324 = vmax.f32 %v3323, %v3169
        %v3325 = vmax.f32 %v3324, %v3175
        %v3326 = vmax.f32 %v3325, %v3179
        %v3327 = vmax.f32 %v3326, %v3185
        %v3328 = vmax.f32 %v3327, %v3189
        %v3329 = vmax.f32 %v3328, %v3195
        %v3330 = vmax.f32 %v3329, %v3199
        %v3331 = vrot.slane %v3330, 4
        %v3332 = vmax.f32 %v3330, %v3331
        %v3333 = vrot.slane %v3332, 2
        %v3334 = vmax.f32 %v3332, %v3333
        %v3335 = vrot.slane %v3334, 1
        %v3336 = vmax.f32 %v3334, %v3335
        %v3337 = vmax.f32 %v3127, %v3131
        %v3338 = vmax.f32 %v3337, %v3137
        %v3339 = vmax.f32 %v3338, %v3141
        %v3340 = vmax.f32 %v3339, %v3147
        %v3341 = vmax.f32 %v3340, %v3151
        %v3342 = vmax.f32 %v3341, %v3157
        %v3343 = vmax.f32 %v3342, %v3161
        %v3344 = vmax.f32 %v3343, %v3167
        %v3345 = vmax.f32 %v3344, %v3171
        %v3346 = vmax.f32 %v3345, %v3177
        %v3347 = vmax.f32 %v3346, %v3181
        %v3348 = vmax.f32 %v3347, %v3187
        %v3349 = vmax.f32 %v3348, %v3191
        %v3350 = vmax.f32 %v3349, %v3197
        %v3351 = vmax.f32 %v3350, %v3201
        %v3352 = vrot.slane %v3351, 4
        %v3353 = vmax.f32 %v3351, %v3352
        %v3354 = vrot.slane %v3353, 2
        %v3355 = vmax.f32 %v3353, %v3354
        %v3356 = vrot.slane %v3355, 1
        %v3357 = vmax.f32 %v3355, %v3356
        %v3358 = vmax.f32 %v3238, %v3242
        %v3359 = vmax.f32 %v3358, %v3248
        %v3360 = vmax.f32 %v3359, %v3252
        %v3361 = vmax.f32 %v3360, %v3258
        %v3362 = vmax.f32 %v3361, %v3262
        %v3363 = vmax.f32 %v3362, %v3268
        %v3364 = vmax.f32 %v3363, %v3272
        %v3365 = vmax.f32 %v3364, %v3278
        %v3366 = vmax.f32 %v3365, %v3282
        %v3367 = vmax.f32 %v3366, %v3288
        %v3368 = vmax.f32 %v3367, %v3292
        %v3369 = vmax.f32 %v3368, %v3298
        %v3370 = vmax.f32 %v3369, %v3302
        %v3371 = vmax.f32 %v3370, %v3308
        %v3372 = vmax.f32 %v3371, %v3312
        %v3373 = vrot.slane %v3372, 4
        %v3374 = vmax.f32 %v3372, %v3373
        %v3375 = vrot.slane %v3374, 2
        %v3376 = vmax.f32 %v3374, %v3375
        %v3377 = vrot.slane %v3376, 1
        %v3378 = vmax.f32 %v3376, %v3377
        %v3379 = vmax.f32 %v3240, %v3244
        %v3380 = vmax.f32 %v3379, %v3250
        %v3381 = vmax.f32 %v3380, %v3254
        %v3382 = vmax.f32 %v3381, %v3260
        %v3383 = vmax.f32 %v3382, %v3264
        %v3384 = vmax.f32 %v3383, %v3270
        %v3385 = vmax.f32 %v3384, %v3274
        %v3386 = vmax.f32 %v3385, %v3280
        %v3387 = vmax.f32 %v3386, %v3284
        %v3388 = vmax.f32 %v3387, %v3290
        %v3389 = vmax.f32 %v3388, %v3294
        %v3390 = vmax.f32 %v3389, %v3300
        %v3391 = vmax.f32 %v3390, %v3304
        %v3392 = vmax.f32 %v3391, %v3310
        %v3393 = vmax.f32 %v3392, %v3314
        %v3394 = vrot.slane %v3393, 4
        %v3395 = vmax.f32 %v3393, %v3394
        %v3396 = vrot.slane %v3395, 2
        %v3397 = vmax.f32 %v3395, %v3396
        %v3398 = vrot.slane %v3397, 1
        %v3399 = vmax.f32 %v3397, %v3398
        %v3400 = vsub.f32 %v3125, %v3336
        %v3401 = vsub.f32 %v3127, %v3357
        %v3402 = vsub.f32 %v3238, %v3378
        %v3403 = vsub.f32 %v3240, %v3399
        %v3404 = vsub.f32 %v3129, %v3336
        %v3405 = vsub.f32 %v3131, %v3357
        %v3406 = vsub.f32 %v3242, %v3378
        %v3407 = vsub.f32 %v3244, %v3399
        %v3408 = vsub.f32 %v3135, %v3336
        %v3409 = vsub.f32 %v3137, %v3357
        %v3410 = vsub.f32 %v3248, %v3378
        %v3411 = vsub.f32 %v3250, %v3399
        %v3412 = vsub.f32 %v3139, %v3336
        %v3413 = vsub.f32 %v3141, %v3357
        %v3414 = vsub.f32 %v3252, %v3378
        %v3415 = vsub.f32 %v3254, %v3399
        %v3416 = vsub.f32 %v3145, %v3336
        %v3417 = vsub.f32 %v3147, %v3357
        %v3418 = vsub.f32 %v3258, %v3378
        %v3419 = vsub.f32 %v3260, %v3399
        %v3420 = vsub.f32 %v3149, %v3336
        %v3421 = vsub.f32 %v3151, %v3357
        %v3422 = vsub.f32 %v3262, %v3378
        %v3423 = vsub.f32 %v3264, %v3399
        %v3424 = vsub.f32 %v3155, %v3336
        %v3425 = vsub.f32 %v3157, %v3357
        %v3426 = vsub.f32 %v3268, %v3378
        %v3427 = vsub.f32 %v3270, %v3399
        %v3428 = vsub.f32 %v3159, %v3336
        %v3429 = vsub.f32 %v3161, %v3357
        %v3430 = vsub.f32 %v3272, %v3378
        %v3431 = vsub.f32 %v3274, %v3399
        %v3432 = vsub.f32 %v3165, %v3336
        %v3433 = vsub.f32 %v3167, %v3357
        %v3434 = vsub.f32 %v3278, %v3378
        %v3435 = vsub.f32 %v3280, %v3399
        %v3436 = vsub.f32 %v3169, %v3336
        %v3437 = vsub.f32 %v3171, %v3357
        %v3438 = vsub.f32 %v3282, %v3378
        %v3439 = vsub.f32 %v3284, %v3399
        %v3440 = vsub.f32 %v3175, %v3336
        %v3441 = vsub.f32 %v3177, %v3357
        %v3442 = vsub.f32 %v3288, %v3378
        %v3443 = vsub.f32 %v3290, %v3399
        %v3444 = vsub.f32 %v3179, %v3336
        %v3445 = vsub.f32 %v3181, %v3357
        %v3446 = vsub.f32 %v3292, %v3378
        %v3447 = vsub.f32 %v3294, %v3399
        %v3448 = vsub.f32 %v3185, %v3336
        %v3449 = vsub.f32 %v3187, %v3357
        %v3450 = vsub.f32 %v3298, %v3378
        %v3451 = vsub.f32 %v3300, %v3399
        %v3452 = vsub.f32 %v3189, %v3336
        %v3453 = vsub.f32 %v3191, %v3357
        %v3454 = vsub.f32 %v3302, %v3378
        %v3455 = vsub.f32 %v3304, %v3399
        %v3456 = vsub.f32 %v3195, %v3336
        %v3457 = vsub.f32 %v3197, %v3357
        %v3458 = vsub.f32 %v3308, %v3378
        %v3459 = vsub.f32 %v3310, %v3399
        %v3460 = vsub.f32 %v3199, %v3336
        %v3461 = vsub.f32 %v3201, %v3357
        %v3462 = vsub.f32 %v3312, %v3378
        %v3463 = vsub.f32 %v3314, %v3399
        %v3464 = vmul.f32 %v3400, 1.442695
        %v3465 = vpow.pop %v3464
        %v3466 = vmul.f32 %v3401, 1.442695
        %v3467 = vpow.pop %v3466
        %v3468 = vmul.f32 %v3402, 1.442695
        %v3469 = vpow.pop %v3468
        %v3470 = vmul.f32 %v3403, 1.442695
        %v3471 = vpow.pop %v3470
        %v3472 = vmul.f32 %v3404, 1.442695
        %v3473 = vpow.pop %v3472
        %v3474 = vmul.f32 %v3405, 1.442695
        %v3475 = vpow.pop %v3474
        %v3476 = vmul.f32 %v3406, 1.442695
        %v3477 = vpow.pop %v3476
        %v3478 = vmul.f32 %v3407, 1.442695
        %v3479 = vpow.pop %v3478
        %v3480 = vmul.f32 %v3408, 1.442695
        %v3481 = vpow.pop %v3480
        %v3482 = vmul.f32 %v3409, 1.442695
        %v3483 = vpow.pop %v3482
        %v3484 = vmul.f32 %v3410, 1.442695
        %v3485 = vpow.pop %v3484
        %v3486 = vmul.f32 %v3411, 1.442695
        %v3487 = vpow.pop %v3486
        %v3488 = vmul.f32 %v3412, 1.442695
        %v3489 = vpow.pop %v3488
        %v3490 = vmul.f32 %v3413, 1.442695
        %v3491 = vpow.pop %v3490
        %v3492 = vmul.f32 %v3414, 1.442695
        %v3493 = vpow.pop %v3492
        %v3494 = vmul.f32 %v3415, 1.442695
        %v3495 = vpow.pop %v3494
        %v3496 = vmul.f32 %v3416, 1.442695
        %v3497 = vpow.pop %v3496
        %v3498 = vmul.f32 %v3417, 1.442695
        %v3499 = vpow.pop %v3498
        %v3500 = vmul.f32 %v3418, 1.442695
        %v3501 = vpow.pop %v3500
        %v3502 = vmul.f32 %v3419, 1.442695
        %v3503 = vpow.pop %v3502
        %v3504 = vmul.f32 %v3420, 1.442695
        %v3505 = vpow.pop %v3504
        %v3506 = vmul.f32 %v3421, 1.442695
        %v3507 = vpow.pop %v3506
        %v3508 = vmul.f32 %v3422, 1.442695
        %v3509 = vpow.pop %v3508
        %v3510 = vmul.f32 %v3423, 1.442695
        %v3511 = vpow.pop %v3510
        %v3512 = vmul.f32 %v3424, 1.442695
        %v3513 = vpow.pop %v3512
        %v3514 = vmul.f32 %v3425, 1.442695
        %v3515 = vpow.pop %v3514
        %v3516 = vmul.f32 %v3426, 1.442695
        %v3517 = vpow.pop %v3516
        %v3518 = vmul.f32 %v3427, 1.442695
        %v3519 = vpow.pop %v3518
        %v3520 = vmul.f32 %v3428, 1.442695
        %v3521 = vpow.pop %v3520
        %v3522 = vmul.f32 %v3429, 1.442695
        %v3523 = vpow.pop %v3522
        %v3524 = vmul.f32 %v3430, 1.442695
        %v3525 = vpow.pop %v3524
        %v3526 = vmul.f32 %v3431, 1.442695
        %v3527 = vpow.pop %v3526
        %v3528 = vmul.f32 %v3432, 1.442695
        %v3529 = vpow.pop %v3528
        %v3530 = vmul.f32 %v3433, 1.442695
        %v3531 = vpow.pop %v3530
        %v3532 = vmul.f32 %v3434, 1.442695
        %v3533 = vpow.pop %v3532
        %v3534 = vmul.f32 %v3435, 1.442695
        %v3535 = vpow.pop %v3534
        %v3536 = vmul.f32 %v3436, 1.442695
        %v3537 = vpow.pop %v3536
        %v3538 = vmul.f32 %v3437, 1.442695
        %v3539 = vpow.pop %v3538
        %v3540 = vmul.f32 %v3438, 1.442695
        %v3541 = vpow.pop %v3540
        %v3542 = vmul.f32 %v3439, 1.442695
        %v3543 = vpow.pop %v3542
        %v3544 = vmul.f32 %v3440, 1.442695
        %v3545 = vpow.pop %v3544
        %v3546 = vmul.f32 %v3441, 1.442695
        %v3547 = vpow.pop %v3546
        %v3548 = vmul.f32 %v3442, 1.442695
        %v3549 = vpow.pop %v3548
        %v3550 = vmul.f32 %v3443, 1.442695
        %v3551 = vpow.pop %v3550
        %v3552 = vmul.f32 %v3444, 1.442695
        %v3553 = vpow.pop %v3552
        %v3554 = vmul.f32 %v3445, 1.442695
        %v3555 = vpow.pop %v3554
        %v3556 = vmul.f32 %v3446, 1.442695
        %v3557 = vpow.pop %v3556
        %v3558 = vmul.f32 %v3447, 1.442695
        %v3559 = vpow.pop %v3558
        %v3560 = vmul.f32 %v3448, 1.442695
        %v3561 = vpow.pop %v3560
        %v3562 = vmul.f32 %v3449, 1.442695
        %v3563 = vpow.pop %v3562
        %v3564 = vmul.f32 %v3450, 1.442695
        %v3565 = vpow.pop %v3564
        %v3566 = vmul.f32 %v3451, 1.442695
        %v3567 = vpow.pop %v3566
        %v3568 = vmul.f32 %v3452, 1.442695
        %v3569 = vpow.pop %v3568
        %v3570 = vmul.f32 %v3453, 1.442695
        %v3571 = vpow.pop %v3570
        %v3572 = vmul.f32 %v3454, 1.442695
        %v3573 = vpow.pop %v3572
        %v3574 = vmul.f32 %v3455, 1.442695
        %v3575 = vpow.pop %v3574
        %v3576 = vmul.f32 %v3456, 1.442695
        %v3577 = vpow.pop %v3576
        %v3578 = vmul.f32 %v3457, 1.442695
        %v3579 = vpow.pop %v3578
        %v3580 = vmul.f32 %v3458, 1.442695
        %v3581 = vpow.pop %v3580
        %v3582 = vmul.f32 %v3459, 1.442695
        %v3583 = vpow.pop %v3582
        %v3584 = vmul.f32 %v3460, 1.442695
        %v3585 = vpow.pop %v3584
        %v3586 = vmul.f32 %v3461, 1.442695
        %v3587 = vpow.pop %v3586
        %v3588 = vmul.f32 %v3462, 1.442695
        %v3589 = vpow.pop %v3588
        %v3590 = vmul.f32 %v3463, 1.442695
        %v3591 = vpow.pop %v3590
        %v3592 = vadd.f32 %v3465, %v3473
        %v3593 = vadd.f32 %v3592, %v3481
        %v3594 = vadd.f32 %v3593, %v3489
        %v3595 = vadd.f32 %v3594, %v3497
        %v3596 = vadd.f32 %v3595, %v3505
        %v3597 = vadd.f32 %v3596, %v3513
        %v3598 = vadd.f32 %v3597, %v3521
        %v3599 = vadd.f32 %v3598, %v3529
        %v3600 = vadd.f32 %v3599, %v3537
        %v3601 = vadd.f32 %v3600, %v3545
        %v3602 = vadd.f32 %v3601, %v3553
        %v3603 = vadd.f32 %v3602, %v3561
        %v3604 = vadd.f32 %v3603, %v3569
        %v3605 = vadd.f32 %v3604, %v3577
        %v3606 = vadd.f32 %v3605, %v3585
        %v3607 = vrot.slane %v3606, 4
        %v3608 = vadd.f32 %v3606, %v3607
        %v3609 = vrot.slane %v3608, 2
        %v3610 = vadd.f32 %v3608, %v3609
        %v3611 = vrot.slane %v3610, 1
        %v3612 = vadd.f32 %v3610, %v3611
        %v3613 = vadd.f32 %v3467, %v3475
        %v3614 = vadd.f32 %v3613, %v3483
        %v3615 = vadd.f32 %v3614, %v3491
        %v3616 = vadd.f32 %v3615, %v3499
        %v3617 = vadd.f32 %v3616, %v3507
        %v3618 = vadd.f32 %v3617, %v3515
        %v3619 = vadd.f32 %v3618, %v3523
        %v3620 = vadd.f32 %v3619, %v3531
        %v3621 = vadd.f32 %v3620, %v3539
        %v3622 = vadd.f32 %v3621, %v3547
        %v3623 = vadd.f32 %v3622, %v3555
        %v3624 = vadd.f32 %v3623, %v3563
        %v3625 = vadd.f32 %v3624, %v3571
        %v3626 = vadd.f32 %v3625, %v3579
        %v3627 = vadd.f32 %v3626, %v3587
        %v3628 = vrot.slane %v3627, 4
        %v3629 = vadd.f32 %v3627, %v3628
        %v3630 = vrot.slane %v3629, 2
        %v3631 = vadd.f32 %v3629, %v3630
        %v3632 = vrot.slane %v3631, 1
        %v3633 = vadd.f32 %v3631, %v3632
        %v3634 = vadd.f32 %v3469, %v3477
        %v3635 = vadd.f32 %v3634, %v3485
        %v3636 = vadd.f32 %v3635, %v3493
        %v3637 = vadd.f32 %v3636, %v3501
        %v3638 = vadd.f32 %v3637, %v3509
        %v3639 = vadd.f32 %v3638, %v3517
        %v3640 = vadd.f32 %v3639, %v3525
        %v3641 = vadd.f32 %v3640, %v3533
        %v3642 = vadd.f32 %v3641, %v3541
        %v3643 = vadd.f32 %v3642, %v3549
        %v3644 = vadd.f32 %v3643, %v3557
        %v3645 = vadd.f32 %v3644, %v3565
        %v3646 = vadd.f32 %v3645, %v3573
        %v3647 = vadd.f32 %v3646, %v3581
        %v3648 = vadd.f32 %v3647, %v3589
        %v3649 = vrot.slane %v3648, 4
        %v3650 = vadd.f32 %v3648, %v3649
        %v3651 = vrot.slane %v3650, 2
        %v3652 = vadd.f32 %v3650, %v3651
        %v3653 = vrot.slane %v3652, 1
        %v3654 = vadd.f32 %v3652, %v3653
        %v3655 = vadd.f32 %v3471, %v3479
        %v3656 = vadd.f32 %v3655, %v3487
        %v3657 = vadd.f32 %v3656, %v3495
        %v3658 = vadd.f32 %v3657, %v3503
        %v3659 = vadd.f32 %v3658, %v3511
        %v3660 = vadd.f32 %v3659, %v3519
        %v3661 = vadd.f32 %v3660, %v3527
        %v3662 = vadd.f32 %v3661, %v3535
        %v3663 = vadd.f32 %v3662, %v3543
        %v3664 = vadd.f32 %v3663, %v3551
        %v3665 = vadd.f32 %v3664, %v3559
        %v3666 = vadd.f32 %v3665, %v3567
        %v3667 = vadd.f32 %v3666, %v3575
        %v3668 = vadd.f32 %v3667, %v3583
        %v3669 = vadd.f32 %v3668, %v3591
        %v3670 = vrot.slane %v3669, 4
        %v3671 = vadd.f32 %v3669, %v3670
        %v3672 = vrot.slane %v3671, 2
        %v3673 = vadd.f32 %v3671, %v3672
        %v3674 = vrot.slane %v3673, 1
        %v3675 = vadd.f32 %v3673, %v3674
        %v3676 = vrcp.pop %v3612
        %v3677 = vrcp.pop %v3633
        %v3678 = vrcp.pop %v3654
        %v3679 = vrcp.pop %v3675
        %v3680 = vmul.f32 %v3465, %v3676
        %v3681 = vmul.f32 %v3467, %v3677
        %v3682 = vmul.f32 %v3469, %v3678
        %v3683 = vmul.f32 %v3471, %v3679
        %v3684 = vmul.f32 %v3473, %v3676
        %v3685 = vmul.f32 %v3475, %v3677
        %v3686 = vmul.f32 %v3477, %v3678
        %v3687 = vmul.f32 %v3479, %v3679
        %v3688 = vmul.f32 %v3481, %v3676
        %v3689 = vmul.f32 %v3483, %v3677
        %v3690 = vmul.f32 %v3485, %v3678
        %v3691 = vmul.f32 %v3487, %v3679
        %v3692 = vmul.f32 %v3489, %v3676
        %v3693 = vmul.f32 %v3491, %v3677
        %v3694 = vmul.f32 %v3493, %v3678
        %v3695 = vmul.f32 %v3495, %v3679
        %v3696 = vmul.f32 %v3497, %v3676
        %v3697 = vmul.f32 %v3499, %v3677
        %v3698 = vmul.f32 %v3501, %v3678
        %v3699 = vmul.f32 %v3503, %v3679
        %v3700 = vmul.f32 %v3505, %v3676
        %v3701 = vmul.f32 %v3507, %v3677
        %v3702 = vmul.f32 %v3509, %v3678
        %v3703 = vmul.f32 %v3511, %v3679
        %v3704 = vmul.f32 %v3513, %v3676
        %v3705 = vmul.f32 %v3515, %v3677
        %v3706 = vmul.f32 %v3517, %v3678
        %v3707 = vmul.f32 %v3519, %v3679
        %v3708 = vmul.f32 %v3521, %v3676
        %v3709 = vmul.f32 %v3523, %v3677
        %v3710 = vmul.f32 %v3525, %v3678
        %v3711 = vmul.f32 %v3527, %v3679
        %v3712 = vmul.f32 %v3529, %v3676
        %v3713 = vmul.f32 %v3531, %v3677
        %v3714 = vmul.f32 %v3533, %v3678
        %v3715 = vmul.f32 %v3535, %v3679
        %v3716 = vmul.f32 %v3537, %v3676
        %v3717 = vmul.f32 %v3539, %v3677
        %v3718 = vmul.f32 %v3541, %v3678
        %v3719 = vmul.f32 %v3543, %v3679
        %v3720 = vmul.f32 %v3545, %v3676
        %v3721 = vmul.f32 %v3547, %v3677
        %v3722 = vmul.f32 %v3549, %v3678
        %v3723 = vmul.f32 %v3551, %v3679
        %v3724 = vmul.f32 %v3553, %v3676
        %v3725 = vmul.f32 %v3555, %v3677
        %v3726 = vmul.f32 %v3557, %v3678
        %v3727 = vmul.f32 %v3559, %v3679
        %v3728 = vmul.f32 %v3561, %v3676
        %v3729 = vmul.f32 %v3563, %v3677
        %v3730 = vmul.f32 %v3565, %v3678
        %v3731 = vmul.f32 %v3567, %v3679
        %v3732 = vmul.f32 %v3569, %v3676
        %v3733 = vmul.f32 %v3571, %v3677
        %v3734 = vmul.f32 %v3573, %v3678
        %v3735 = vmul.f32 %v3575, %v3679
        %v3736 = vmul.f32 %v3577, %v3676
        %v3737 = vmul.f32 %v3579, %v3677
        %v3738 = vmul.f32 %v3581, %v3678
        %v3739 = vmul.f32 %v3583, %v3679
        %v3740 = vmul.f32 %v3585, %v3676
        %v3741 = vmul.f32 %v3587, %v3677
        %v3742 = vmul.f32 %v3589, %v3678
        %v3743 = vmul.f32 %v3591, %v3679
        %v3744 = vmul.f32 %v1255, %v3680
        %v3745 = vmul.f32 %v1257, %v3681
        %v3746 = vmul.f32 %v1448, %v3682
        %v3747 = vmul.f32 %v1450, %v3683
        %v3748 = vmul.f32 %v1259, %v3684
        %v3749 = vmul.f32 %v1261, %v3685
        %v3750 = vmul.f32 %v1452, %v3686
        %v3751 = vmul.f32 %v1454, %v3687
        %v3752 = vmul.f32 %v1265, %v3688
        %v3753 = vmul.f32 %v1267, %v3689
        %v3754 = vmul.f32 %v1458, %v3690
        %v3755 = vmul.f32 %v1460, %v3691
        %v3756 = vmul.f32 %v1269, %v3692
        %v3757 = vmul.f32 %v1271, %v3693
        %v3758 = vmul.f32 %v1462, %v3694
        %v3759 = vmul.f32 %v1464, %v3695
        %v3760 = vmul.f32 %v1275, %v3696
        %v3761 = vmul.f32 %v1277, %v3697
        %v3762 = vmul.f32 %v1468, %v3698
        %v3763 = vmul.f32 %v1470, %v3699
        %v3764 = vmul.f32 %v1279, %v3700
        %v3765 = vmul.f32 %v1281, %v3701
        %v3766 = vmul.f32 %v1472, %v3702
        %v3767 = vmul.f32 %v1474, %v3703
        %v3768 = vmul.f32 %v1285, %v3704
        %v3769 = vmul.f32 %v1287, %v3705
        %v3770 = vmul.f32 %v1478, %v3706
        %v3771 = vmul.f32 %v1480, %v3707
        %v3772 = vmul.f32 %v1289, %v3708
        %v3773 = vmul.f32 %v1291, %v3709
        %v3774 = vmul.f32 %v1482, %v3710
        %v3775 = vmul.f32 %v1484, %v3711
        %v3776 = vmul.f32 %v1295, %v3712
        %v3777 = vmul.f32 %v1297, %v3713
        %v3778 = vmul.f32 %v1488, %v3714
        %v3779 = vmul.f32 %v1490, %v3715
        %v3780 = vmul.f32 %v1299, %v3716
        %v3781 = vmul.f32 %v1301, %v3717
        %v3782 = vmul.f32 %v1492, %v3718
        %v3783 = vmul.f32 %v1494, %v3719
        %v3784 = vmul.f32 %v1305, %v3720
        %v3785 = vmul.f32 %v1307, %v3721
        %v3786 = vmul.f32 %v1498, %v3722
        %v3787 = vmul.f32 %v1500, %v3723
        %v3788 = vmul.f32 %v1309, %v3724
        %v3789 = vmul.f32 %v1311, %v3725
        %v3790 = vmul.f32 %v1502, %v3726
        %v3791 = vmul.f32 %v1504, %v3727
        %v3792 = vmul.f32 %v1315, %v3728
        %v3793 = vmul.f32 %v1317, %v3729
        %v3794 = vmul.f32 %v1508, %v3730
        %v3795 = vmul.f32 %v1510, %v3731
        %v3796 = vmul.f32 %v1319, %v3732
        %v3797 = vmul.f32 %v1321, %v3733
        %v3798 = vmul.f32 %v1512, %v3734
        %v3799 = vmul.f32 %v1514, %v3735
        %v3800 = vmul.f32 %v1325, %v3736
        %v3801 = vmul.f32 %v1327, %v3737
        %v3802 = vmul.f32 %v1518, %v3738
        %v3803 = vmul.f32 %v1520, %v3739
        %v3804 = vmul.f32 %v1329, %v3740
        %v3805 = vmul.f32 %v1331, %v3741
        %v3806 = vmul.f32 %v1522, %v3742
        %v3807 = vmul.f32 %v1524, %v3743
        %v3808 = vadd.f32 %v3744, %v3748
        %v3809 = vadd.f32 %v3808, %v3752
        %v3810 = vadd.f32 %v3809, %v3756
        %v3811 = vadd.f32 %v3810, %v3760
        %v3812 = vadd.f32 %v3811, %v3764
        %v3813 = vadd.f32 %v3812, %v3768
        %v3814 = vadd.f32 %v3813, %v3772
        %v3815 = vadd.f32 %v3814, %v3776
        %v3816 = vadd.f32 %v3815, %v3780
        %v3817 = vadd.f32 %v3816, %v3784
        %v3818 = vadd.f32 %v3817, %v3788
        %v3819 = vadd.f32 %v3818, %v3792
        %v3820 = vadd.f32 %v3819, %v3796
        %v3821 = vadd.f32 %v3820, %v3800
        %v3822 = vadd.f32 %v3821, %v3804
        %v3823 = vrot.slane %v3822, 4
        %v3824 = vadd.f32 %v3822, %v3823
        %v3825 = vrot.slane %v3824, 2
        %v3826 = vadd.f32 %v3824, %v3825
        %v3827 = vrot.slane %v3826, 1
        %v3828 = vadd.f32 %v3826, %v3827
        %v3829 = vadd.f32 %v3745, %v3749
        %v3830 = vadd.f32 %v3829, %v3753
        %v3831 = vadd.f32 %v3830, %v3757
        %v3832 = vadd.f32 %v3831, %v3761
        %v3833 = vadd.f32 %v3832, %v3765
        %v3834 = vadd.f32 %v3833, %v3769
        %v3835 = vadd.f32 %v3834, %v3773
        %v3836 = vadd.f32 %v3835, %v3777
        %v3837 = vadd.f32 %v3836, %v3781
        %v3838 = vadd.f32 %v3837, %v3785
        %v3839 = vadd.f32 %v3838, %v3789
        %v3840 = vadd.f32 %v3839, %v3793
        %v3841 = vadd.f32 %v3840, %v3797
        %v3842 = vadd.f32 %v3841, %v3801
        %v3843 = vadd.f32 %v3842, %v3805
        %v3844 = vrot.slane %v3843, 4
        %v3845 = vadd.f32 %v3843, %v3844
        %v3846 = vrot.slane %v3845, 2
        %v3847 = vadd.f32 %v3845, %v3846
        %v3848 = vrot.slane %v3847, 1
        %v3849 = vadd.f32 %v3847, %v3848
        %v3850 = vadd.f32 %v3746, %v3750
        %v3851 = vadd.f32 %v3850, %v3754
        %v3852 = vadd.f32 %v3851, %v3758
        %v3853 = vadd.f32 %v3852, %v3762
        %v3854 = vadd.f32 %v3853, %v3766
        %v3855 = vadd.f32 %v3854, %v3770
        %v3856 = vadd.f32 %v3855, %v3774
        %v3857 = vadd.f32 %v3856, %v3778
        %v3858 = vadd.f32 %v3857, %v3782
        %v3859 = vadd.f32 %v3858, %v3786
        %v3860 = vadd.f32 %v3859, %v3790
        %v3861 = vadd.f32 %v3860, %v3794
        %v3862 = vadd.f32 %v3861, %v3798
        %v3863 = vadd.f32 %v3862, %v3802
        %v3864 = vadd.f32 %v3863, %v3806
        %v3865 = vrot.slane %v3864, 4
        %v3866 = vadd.f32 %v3864, %v3865
        %v3867 = vrot.slane %v3866, 2
        %v3868 = vadd.f32 %v3866, %v3867
        %v3869 = vrot.slane %v3868, 1
        %v3870 = vadd.f32 %v3868, %v3869
        %v3871 = vadd.f32 %v3747, %v3751
        %v3872 = vadd.f32 %v3871, %v3755
        %v3873 = vadd.f32 %v3872, %v3759
        %v3874 = vadd.f32 %v3873, %v3763
        %v3875 = vadd.f32 %v3874, %v3767
        %v3876 = vadd.f32 %v3875, %v3771
        %v3877 = vadd.f32 %v3876, %v3775
        %v3878 = vadd.f32 %v3877, %v3779
        %v3879 = vadd.f32 %v3878, %v3783
        %v3880 = vadd.f32 %v3879, %v3787
        %v3881 = vadd.f32 %v3880, %v3791
        %v3882 = vadd.f32 %v3881, %v3795
        %v3883 = vadd.f32 %v3882, %v3799
        %v3884 = vadd.f32 %v3883, %v3803
        %v3885 = vadd.f32 %v3884, %v3807
        %v3886 = vrot.slane %v3885, 4
        %v3887 = vadd.f32 %v3885, %v3886
        %v3888 = vrot.slane %v3887, 2
        %v3889 = vadd.f32 %v3887, %v3888
        %v3890 = vrot.slane %v3889, 1
        %v3891 = vadd.f32 %v3889, %v3890
        %v3896 = vcombine.low %v3828, %v3849
        %v3897 = vcombine.low %v3870, %v3891
        %v3899 = vunpack.c.l.s4 1966171168
        %v3900 = vunpack.c.0.s8 %v3899
        %v3901 = vlaneseq
        %v3902 = vshrl.u32 %v3901, 7
        %v3903 = vsub.s32 %v3900, %v3902
        %v3904 = vrot.slane %v3896, %v3903
        %v3906 = vunpack.c.l.s4 1966171168
        %v3907 = vunpack.c.0.s8 %v3906
        %v3908 = vlaneseq
        %v3909 = vshrl.u32 %v3908, 7
        %v3910 = vsub.s32 %v3907, %v3909
        %v3911 = vrot.slane %v3897, %v3910
        %v3912 = vcombine.low %v3904, %v3911
        %v3914 = vunpack.c.l.s4 1966171168
        %v3915 = vunpack.c.0.s8 %v3914
        %v3916 = vlaneseq
        %v3917 = vshrl.u32 %v3916, 7
        %v3918 = vsub.s32 %v3915, %v3917
        %v3919 = vrot.slane %v3912, %v3918
        %v3921 = vlaneseq
        %vm3922 = vcmp.ge.s32.totalorder %v3921, 0
        %vm3923 = vcmp.lt.s32.totalorder %v3921, 512
        %vm3924 = vmand %vm3922, %vm3923
        %3925 = vst.msk [vmem:[%s471] ss:$2 sm:$0xf] %vm3924, %v3919
        %v3926 = vpack.c.bf16 %v1339, %v1335
        %v3927 = vpack.c.bf16 %v1341, %v1337
        %v3928 = vpack.c.bf16 %v1532, %v1528
        %v3929 = vpack.c.bf16 %v1534, %v1530
        %v3930 = vpack.c.bf16 %v1349, %v1345
        %v3931 = vpack.c.bf16 %v1351, %v1347
        %v3932 = vpack.c.bf16 %v1542, %v1538
        %v3933 = vpack.c.bf16 %v1544, %v1540
        %v3934 = vpack.c.bf16 %v1359, %v1355
        %v3935 = vpack.c.bf16 %v1361, %v1357
        %v3936 = vpack.c.bf16 %v1552, %v1548
        %v3937 = vpack.c.bf16 %v1554, %v1550
        %v3938 = vpack.c.bf16 %v1369, %v1365
        %v3939 = vpack.c.bf16 %v1371, %v1367
        %v3940 = vpack.c.bf16 %v1562, %v1558
        %v3941 = vpack.c.bf16 %v1564, %v1560
        %v3942 = vpack.c.bf16 %v1379, %v1375
        %v3943 = vpack.c.bf16 %v1381, %v1377
        %v3944 = vpack.c.bf16 %v1572, %v1568
        %v3945 = vpack.c.bf16 %v1574, %v1570
        %v3946 = vpack.c.bf16 %v1389, %v1385
        %v3947 = vpack.c.bf16 %v1391, %v1387
        %v3948 = vpack.c.bf16 %v1582, %v1578
        %v3949 = vpack.c.bf16 %v1584, %v1580
        %v3950 = vpack.c.bf16 %v1399, %v1395
        %v3951 = vpack.c.bf16 %v1401, %v1397
        %v3952 = vpack.c.bf16 %v1592, %v1588
        %v3953 = vpack.c.bf16 %v1594, %v1590
        %v3954 = vpack.c.bf16 %v1409, %v1405
        %v3955 = vpack.c.bf16 %v1411, %v1407
        %v3956 = vpack.c.bf16 %v1602, %v1598
        %v3957 = vpack.c.bf16 %v1604, %v1600
        %3958 = vmatprep.subr.bf16.mxu0 %v3955
        %3959 = vmatpush1.bf16.msra.mxu0 %v3954
        %3960 = vmatprep.subr.bf16.mxu0 %v3951
        %3961 = vmatpush1.bf16.msra.mxu0 %v3950
        %3962 = vmatprep.subr.bf16.mxu0 %v3947
        %3963 = vmatpush1.bf16.msra.mxu0 %v3946
        %3964 = vmatprep.subr.bf16.mxu0 %v3943
        %3965 = vmatpush1.bf16.msra.mxu0 %v3942
        %3966 = vmatprep.subr.bf16.mxu0 %v3939
        %3967 = vmatpush1.bf16.msra.mxu0 %v3938
        %3968 = vmatprep.subr.bf16.mxu0 %v3935
        %3969 = vmatpush1.bf16.msra.mxu0 %v3934
        %3970 = vmatprep.subr.bf16.mxu0 %v3931
        %3971 = vmatpush1.bf16.msra.mxu0 %v3930
        %3972 = vmatprep.subr.bf16.mxu0 %v3927
        %3973 = vmatpush1.bf16.msra.mxu0 %v3926
        %3974 = vmatprep.subr.bf16.mxu0 0
        %3975 = vmatpush2.bf16.msra.mxu0 0
        %3976 = vmatprep.subr.bf16.mxu0 0
        %3977 = vmatpush2.bf16.msra.mxu0 0
        %3978 = vmatprep.subr.bf16.mxu0 0
        %3979 = vmatpush2.bf16.msra.mxu0 0
        %3980 = vmatprep.subr.bf16.mxu0 0
        %3981 = vmatpush2.bf16.msra.mxu0 0
        %3982 = vmatprep.subr.bf16.mxu0 0
        %3983 = vmatpush2.bf16.msra.mxu0 0
        %3984 = vmatprep.subr.bf16.mxu0 0
        %3985 = vmatpush2.bf16.msra.mxu0 0
        %3986 = vmatprep.subr.bf16.mxu0 0
        %3987 = vmatpush2.bf16.msra.mxu0 0
        %3988 = vmatprep.subr.bf16.mxu0 0
        %3989 = vmatpush2.bf16.msra.mxu0 0
        %3990 = vmatprep.mubr.bf16.mxu0 0
        %3991 = vmatmul.mubr.bf16.gmra.mxu0 %v1694
        %v3992 = vpop.f32.mrf.mxu0
        %v3993 = vadd.f32 %v1641, %v3992
        %v3994 = vpop.f32.mrf.mxu0
        %v3995 = vadd.f32 %v1641, %v3994
        %v3996 = vpop.f32.mrf.mxu0
        %v3997 = vadd.f32 %v1646, %v3996
        %v3998 = vpop.f32.mrf.mxu0
        %v3999 = vadd.f32 %v1646, %v3998
        %4000 = vmatprep.mubr.bf16.mxu0 0
        %4001 = vmatmul.mubr.bf16.gmra.mxu0 %v1695
        %v4002 = vpop.f32.mrf.mxu0
        %v4003 = vadd.f32 %v1651, %v4002
        %v4004 = vpop.f32.mrf.mxu0
        %v4005 = vadd.f32 %v1651, %v4004
        %v4006 = vpop.f32.mrf.mxu0
        %v4007 = vadd.f32 %v1656, %v4006
        %v4008 = vpop.f32.mrf.mxu0
        %v4009 = vadd.f32 %v1656, %v4008
        %4010 = vmatprep.mubr.bf16.mxu0 0
        %4011 = vmatmul.mubr.bf16.gmra.mxu0 %v1696
        %v4012 = vpop.f32.mrf.mxu0
        %v4013 = vadd.f32 %v1661, %v4012
        %v4014 = vpop.f32.mrf.mxu0
        %v4015 = vadd.f32 %v1661, %v4014
        %v4016 = vpop.f32.mrf.mxu0
        %v4017 = vadd.f32 %v1666, %v4016
        %v4018 = vpop.f32.mrf.mxu0
        %v4019 = vadd.f32 %v1666, %v4018
        %4020 = vmatprep.mubr.bf16.mxu0 0
        %4021 = vmatmul.mubr.bf16.gmra.mxu0 %v1697
        %v4022 = vpop.f32.mrf.mxu0
        %v4023 = vadd.f32 %v1671, %v4022
        %v4024 = vpop.f32.mrf.mxu0
        %v4025 = vadd.f32 %v1671, %v4024
        %v4026 = vpop.f32.mrf.mxu0
        %v4027 = vadd.f32 %v1676, %v4026
        %v4028 = vpop.f32.mrf.mxu0
        %v4029 = vadd.f32 %v1676, %v4028
        %4030 = vdwg.mxu0
        %4031 = vmatprep.subr.bf16.mxu0 %v3957
        %4032 = vmatpush1.bf16.msra.mxu0 %v3956
        %4033 = vmatprep.subr.bf16.mxu0 %v3953
        %4034 = vmatpush1.bf16.msra.mxu0 %v3952
        %4035 = vmatprep.subr.bf16.mxu0 %v3949
        %4036 = vmatpush1.bf16.msra.mxu0 %v3948
        %4037 = vmatprep.subr.bf16.mxu0 %v3945
        %4038 = vmatpush1.bf16.msra.mxu0 %v3944
        %4039 = vmatprep.subr.bf16.mxu0 %v3941
        %4040 = vmatpush1.bf16.msra.mxu0 %v3940
        %4041 = vmatprep.subr.bf16.mxu0 %v3937
        %4042 = vmatpush1.bf16.msra.mxu0 %v3936
        %4043 = vmatprep.subr.bf16.mxu0 %v3933
        %4044 = vmatpush1.bf16.msra.mxu0 %v3932
        %4045 = vmatprep.subr.bf16.mxu0 %v3929
        %4046 = vmatpush1.bf16.msra.mxu0 %v3928
        %4047 = vmatprep.subr.bf16.mxu0 0
        %4048 = vmatpush2.bf16.msra.mxu0 0
        %4049 = vmatprep.subr.bf16.mxu0 0
        %4050 = vmatpush2.bf16.msra.mxu0 0
        %4051 = vmatprep.subr.bf16.mxu0 0
        %4052 = vmatpush2.bf16.msra.mxu0 0
        %4053 = vmatprep.subr.bf16.mxu0 0
        %4054 = vmatpush2.bf16.msra.mxu0 0
        %4055 = vmatprep.subr.bf16.mxu0 0
        %4056 = vmatpush2.bf16.msra.mxu0 0
        %4057 = vmatprep.subr.bf16.mxu0 0
        %4058 = vmatpush2.bf16.msra.mxu0 0
        %4059 = vmatprep.subr.bf16.mxu0 0
        %4060 = vmatpush2.bf16.msra.mxu0 0
        %4061 = vmatprep.subr.bf16.mxu0 0
        %4062 = vmatpush2.bf16.msra.mxu0 0
        %4063 = vmatprep.mubr.bf16.mxu0 0
        %4064 = vmatmul.mubr.bf16.gmra.mxu0 %v1694
        %v4065 = vpop.f32.mrf.mxu0
        %v4066 = vadd.f32 %v1641, %v4065
        %v4067 = vpop.f32.mrf.mxu0
        %v4068 = vadd.f32 %v1641, %v4067
        %v4069 = vpop.f32.mrf.mxu0
        %v4070 = vadd.f32 %v1646, %v4069
        %v4071 = vpop.f32.mrf.mxu0
        %v4072 = vadd.f32 %v1646, %v4071
        %4073 = vmatprep.mubr.bf16.mxu0 0
        %4074 = vmatmul.mubr.bf16.gmra.mxu0 %v1695
        %v4075 = vpop.f32.mrf.mxu0
        %v4076 = vadd.f32 %v1651, %v4075
        %v4077 = vpop.f32.mrf.mxu0
        %v4078 = vadd.f32 %v1651, %v4077
        %v4079 = vpop.f32.mrf.mxu0
        %v4080 = vadd.f32 %v1656, %v4079
        %v4081 = vpop.f32.mrf.mxu0
        %v4082 = vadd.f32 %v1656, %v4081
        %4083 = vmatprep.mubr.bf16.mxu0 0
        %4084 = vmatmul.mubr.bf16.gmra.mxu0 %v1696
        %v4085 = vpop.f32.mrf.mxu0
        %v4086 = vadd.f32 %v1661, %v4085
        %v4087 = vpop.f32.mrf.mxu0
        %v4088 = vadd.f32 %v1661, %v4087
        %v4089 = vpop.f32.mrf.mxu0
        %v4090 = vadd.f32 %v1666, %v4089
        %v4091 = vpop.f32.mrf.mxu0
        %v4092 = vadd.f32 %v1666, %v4091
        %4093 = vmatprep.mubr.bf16.mxu0 0
        %4094 = vmatmul.mubr.bf16.gmra.mxu0 %v1697
        %v4095 = vpop.f32.mrf.mxu0
        %v4096 = vadd.f32 %v1671, %v4095
        %v4097 = vpop.f32.mrf.mxu0
        %v4098 = vadd.f32 %v1671, %v4097
        %v4099 = vpop.f32.mrf.mxu0
        %v4100 = vadd.f32 %v1676, %v4099
        %v4101 = vpop.f32.mrf.mxu0
        %v4102 = vadd.f32 %v1676, %v4101
        %4103 = vdwg.mxu0
        %v4104 = vxor.u32 %v3993, 2147483648
        %v4105 = vxor.u32 %v3995, 2147483648
        %v4106 = vxor.u32 %v4066, 2147483648
        %v4107 = vxor.u32 %v4068, 2147483648
        %v4108 = vxor.u32 %v3997, 2147483648
        %v4109 = vxor.u32 %v3999, 2147483648
        %v4110 = vxor.u32 %v4070, 2147483648
        %v4111 = vxor.u32 %v4072, 2147483648
        %v4112 = vxor.u32 %v4003, 2147483648
        %v4113 = vxor.u32 %v4005, 2147483648
        %v4114 = vxor.u32 %v4076, 2147483648
        %v4115 = vxor.u32 %v4078, 2147483648
        %v4116 = vxor.u32 %v4007, 2147483648
        %v4117 = vxor.u32 %v4009, 2147483648
        %v4118 = vxor.u32 %v4080, 2147483648
        %v4119 = vxor.u32 %v4082, 2147483648
        %v4120 = vxor.u32 %v4013, 2147483648
        %v4121 = vxor.u32 %v4015, 2147483648
        %v4122 = vxor.u32 %v4086, 2147483648
        %v4123 = vxor.u32 %v4088, 2147483648
        %v4124 = vxor.u32 %v4017, 2147483648
        %v4125 = vxor.u32 %v4019, 2147483648
        %v4126 = vxor.u32 %v4090, 2147483648
        %v4127 = vxor.u32 %v4092, 2147483648
        %v4128 = vxor.u32 %v4023, 2147483648
        %v4129 = vxor.u32 %v4025, 2147483648
        %v4130 = vxor.u32 %v4096, 2147483648
        %v4131 = vxor.u32 %v4098, 2147483648
        %v4132 = vxor.u32 %v4027, 2147483648
        %v4133 = vxor.u32 %v4029, 2147483648
        %v4134 = vxor.u32 %v4100, 2147483648
        %v4135 = vxor.u32 %v4102, 2147483648
        %v4136 = vmul.f32 %v4104, 1.442695
        %v4137 = vpow.pop %v4136
        %v4138 = vmul.f32 %v4105, 1.442695
        %v4139 = vpow.pop %v4138
        %v4140 = vmul.f32 %v4106, 1.442695
        %v4141 = vpow.pop %v4140
        %v4142 = vmul.f32 %v4107, 1.442695
        %v4143 = vpow.pop %v4142
        %v4144 = vmul.f32 %v4108, 1.442695
        %v4145 = vpow.pop %v4144
        %v4146 = vmul.f32 %v4109, 1.442695
        %v4147 = vpow.pop %v4146
        %v4148 = vmul.f32 %v4110, 1.442695
        %v4149 = vpow.pop %v4148
        %v4150 = vmul.f32 %v4111, 1.442695
        %v4151 = vpow.pop %v4150
        %v4152 = vmul.f32 %v4112, 1.442695
        %v4153 = vpow.pop %v4152
        %v4154 = vmul.f32 %v4113, 1.442695
        %v4155 = vpow.pop %v4154
        %v4156 = vmul.f32 %v4114, 1.442695
        %v4157 = vpow.pop %v4156
        %v4158 = vmul.f32 %v4115, 1.442695
        %v4159 = vpow.pop %v4158
        %v4160 = vmul.f32 %v4116, 1.442695
        %v4161 = vpow.pop %v4160
        %v4162 = vmul.f32 %v4117, 1.442695
        %v4163 = vpow.pop %v4162
        %v4164 = vmul.f32 %v4118, 1.442695
        %v4165 = vpow.pop %v4164
        %v4166 = vmul.f32 %v4119, 1.442695
        %v4167 = vpow.pop %v4166
        %v4168 = vmul.f32 %v4120, 1.442695
        %v4169 = vpow.pop %v4168
        %v4170 = vmul.f32 %v4121, 1.442695
        %v4171 = vpow.pop %v4170
        %v4172 = vmul.f32 %v4122, 1.442695
        %v4173 = vpow.pop %v4172
        %v4174 = vmul.f32 %v4123, 1.442695
        %v4175 = vpow.pop %v4174
        %v4176 = vmul.f32 %v4124, 1.442695
        %v4177 = vpow.pop %v4176
        %v4178 = vmul.f32 %v4125, 1.442695
        %v4179 = vpow.pop %v4178
        %v4180 = vmul.f32 %v4126, 1.442695
        %v4181 = vpow.pop %v4180
        %v4182 = vmul.f32 %v4127, 1.442695
        %v4183 = vpow.pop %v4182
        %v4184 = vmul.f32 %v4128, 1.442695
        %v4185 = vpow.pop %v4184
        %v4186 = vmul.f32 %v4129, 1.442695
        %v4187 = vpow.pop %v4186
        %v4188 = vmul.f32 %v4130, 1.442695
        %v4189 = vpow.pop %v4188
        %v4190 = vmul.f32 %v4131, 1.442695
        %v4191 = vpow.pop %v4190
        %v4192 = vmul.f32 %v4132, 1.442695
        %v4193 = vpow.pop %v4192
        %v4194 = vmul.f32 %v4133, 1.442695
        %v4195 = vpow.pop %v4194
        %v4196 = vmul.f32 %v4134, 1.442695
        %v4197 = vpow.pop %v4196
        %v4198 = vmul.f32 %v4135, 1.442695
        %v4199 = vpow.pop %v4198
        %v4200 = vadd.f32 %v4137, 1.0
        %v4201 = vadd.f32 %v4139, 1.0
        %v4202 = vadd.f32 %v4141, 1.0
        %v4203 = vadd.f32 %v4143, 1.0
        %v4204 = vadd.f32 %v4145, 1.0
        %v4205 = vadd.f32 %v4147, 1.0
        %v4206 = vadd.f32 %v4149, 1.0
        %v4207 = vadd.f32 %v4151, 1.0
        %v4208 = vadd.f32 %v4153, 1.0
        %v4209 = vadd.f32 %v4155, 1.0
        %v4210 = vadd.f32 %v4157, 1.0
        %v4211 = vadd.f32 %v4159, 1.0
        %v4212 = vadd.f32 %v4161, 1.0
        %v4213 = vadd.f32 %v4163, 1.0
        %v4214 = vadd.f32 %v4165, 1.0
        %v4215 = vadd.f32 %v4167, 1.0
        %v4216 = vadd.f32 %v4169, 1.0
        %v4217 = vadd.f32 %v4171, 1.0
        %v4218 = vadd.f32 %v4173, 1.0
        %v4219 = vadd.f32 %v4175, 1.0
        %v4220 = vadd.f32 %v4177, 1.0
        %v4221 = vadd.f32 %v4179, 1.0
        %v4222 = vadd.f32 %v4181, 1.0
        %v4223 = vadd.f32 %v4183, 1.0
        %v4224 = vadd.f32 %v4185, 1.0
        %v4225 = vadd.f32 %v4187, 1.0
        %v4226 = vadd.f32 %v4189, 1.0
        %v4227 = vadd.f32 %v4191, 1.0
        %v4228 = vadd.f32 %v4193, 1.0
        %v4229 = vadd.f32 %v4195, 1.0
        %v4230 = vadd.f32 %v4197, 1.0
        %v4231 = vadd.f32 %v4199, 1.0
        %v4232 = vrcp.pop %v4200
        %v4233 = vmul.f32 1.0, %v4232
        %v4234 = vrcp.pop %v4201
        %v4235 = vmul.f32 1.0, %v4234
        %v4236 = vrcp.pop %v4202
        %v4237 = vmul.f32 1.0, %v4236
        %v4238 = vrcp.pop %v4203
        %v4239 = vmul.f32 1.0, %v4238
        %v4240 = vrcp.pop %v4204
        %v4241 = vmul.f32 1.0, %v4240
        %v4242 = vrcp.pop %v4205
        %v4243 = vmul.f32 1.0, %v4242
        %v4244 = vrcp.pop %v4206
        %v4245 = vmul.f32 1.0, %v4244
        %v4246 = vrcp.pop %v4207
        %v4247 = vmul.f32 1.0, %v4246
        %v4248 = vrcp.pop %v4208
        %v4249 = vmul.f32 1.0, %v4248
        %v4250 = vrcp.pop %v4209
        %v4251 = vmul.f32 1.0, %v4250
        %v4252 = vrcp.pop %v4210
        %v4253 = vmul.f32 1.0, %v4252
        %v4254 = vrcp.pop %v4211
        %v4255 = vmul.f32 1.0, %v4254
        %v4256 = vrcp.pop %v4212
        %v4257 = vmul.f32 1.0, %v4256
        %v4258 = vrcp.pop %v4213
        %v4259 = vmul.f32 1.0, %v4258
        %v4260 = vrcp.pop %v4214
        %v4261 = vmul.f32 1.0, %v4260
        %v4262 = vrcp.pop %v4215
        %v4263 = vmul.f32 1.0, %v4262
        %v4264 = vrcp.pop %v4216
        %v4265 = vmul.f32 1.0, %v4264
        %v4266 = vrcp.pop %v4217
        %v4267 = vmul.f32 1.0, %v4266
        %v4268 = vrcp.pop %v4218
        %v4269 = vmul.f32 1.0, %v4268
        %v4270 = vrcp.pop %v4219
        %v4271 = vmul.f32 1.0, %v4270
        %v4272 = vrcp.pop %v4220
        %v4273 = vmul.f32 1.0, %v4272
        %v4274 = vrcp.pop %v4221
        %v4275 = vmul.f32 1.0, %v4274
        %v4276 = vrcp.pop %v4222
        %v4277 = vmul.f32 1.0, %v4276
        %v4278 = vrcp.pop %v4223
        %v4279 = vmul.f32 1.0, %v4278
        %v4280 = vrcp.pop %v4224
        %v4281 = vmul.f32 1.0, %v4280
        %v4282 = vrcp.pop %v4225
        %v4283 = vmul.f32 1.0, %v4282
        %v4284 = vrcp.pop %v4226
        %v4285 = vmul.f32 1.0, %v4284
        %v4286 = vrcp.pop %v4227
        %v4287 = vmul.f32 1.0, %v4286
        %v4288 = vrcp.pop %v4228
        %v4289 = vmul.f32 1.0, %v4288
        %v4290 = vrcp.pop %v4229
        %v4291 = vmul.f32 1.0, %v4290
        %v4292 = vrcp.pop %v4230
        %v4293 = vmul.f32 1.0, %v4292
        %v4294 = vrcp.pop %v4231
        %v4295 = vmul.f32 1.0, %v4294
        %v4296 = vmul.f32 %v3993, %v4233
        %v4297 = vmul.f32 %v3995, %v4235
        %v4298 = vmul.f32 %v4066, %v4237
        %v4299 = vmul.f32 %v4068, %v4239
        %v4300 = vmul.f32 %v3997, %v4241
        %v4301 = vmul.f32 %v3999, %v4243
        %v4302 = vmul.f32 %v4070, %v4245
        %v4303 = vmul.f32 %v4072, %v4247
        %v4304 = vmul.f32 %v4003, %v4249
        %v4305 = vmul.f32 %v4005, %v4251
        %v4306 = vmul.f32 %v4076, %v4253
        %v4307 = vmul.f32 %v4078, %v4255
        %v4308 = vmul.f32 %v4007, %v4257
        %v4309 = vmul.f32 %v4009, %v4259
        %v4310 = vmul.f32 %v4080, %v4261
        %v4311 = vmul.f32 %v4082, %v4263
        %v4312 = vmul.f32 %v4013, %v4265
        %v4313 = vmul.f32 %v4015, %v4267
        %v4314 = vmul.f32 %v4086, %v4269
        %v4315 = vmul.f32 %v4088, %v4271
        %v4316 = vmul.f32 %v4017, %v4273
        %v4317 = vmul.f32 %v4019, %v4275
        %v4318 = vmul.f32 %v4090, %v4277
        %v4319 = vmul.f32 %v4092, %v4279
        %v4320 = vmul.f32 %v4023, %v4281
        %v4321 = vmul.f32 %v4025, %v4283
        %v4322 = vmul.f32 %v4096, %v4285
        %v4323 = vmul.f32 %v4098, %v4287
        %v4324 = vmul.f32 %v4027, %v4289
        %v4325 = vmul.f32 %v4029, %v4291
        %v4326 = vmul.f32 %v4100, %v4293
        %v4327 = vmul.f32 %v4102, %v4295
        %v4328 = vpack.c.bf16 %v4300, %v4296
        %v4329 = vpack.c.bf16 %v4301, %v4297
        %v4330 = vpack.c.bf16 %v4302, %v4298
        %v4331 = vpack.c.bf16 %v4303, %v4299
        %v4332 = vpack.c.bf16 %v4308, %v4304
        %v4333 = vpack.c.bf16 %v4309, %v4305
        %v4334 = vpack.c.bf16 %v4310, %v4306
        %v4335 = vpack.c.bf16 %v4311, %v4307
        %v4336 = vpack.c.bf16 %v4316, %v4312
        %v4337 = vpack.c.bf16 %v4317, %v4313
        %v4338 = vpack.c.bf16 %v4318, %v4314
        %v4339 = vpack.c.bf16 %v4319, %v4315
        %v4340 = vpack.c.bf16 %v4324, %v4320
        %v4341 = vpack.c.bf16 %v4325, %v4321
        %v4342 = vpack.c.bf16 %v4326, %v4322
        %v4343 = vpack.c.bf16 %v4327, %v4323
        %4344 = vmatprep.subr.bf16.mxu0 0
        %4345 = vmatpush1.bf16.msra.mxu0 0
        %4346 = vmatprep.subr.bf16.mxu0 0
        %4347 = vmatpush1.bf16.msra.mxu0 0
        %4348 = vmatprep.subr.bf16.mxu0 0
        %4349 = vmatpush1.bf16.msra.mxu0 0
        %4350 = vmatprep.subr.bf16.mxu0 0
        %4351 = vmatpush1.bf16.msra.mxu0 0
        %4352 = vmatprep.subr.bf16.mxu0 %v4341
        %4353 = vmatpush1.bf16.msra.mxu0 %v4340
        %4354 = vmatprep.subr.bf16.mxu0 %v4337
        %4355 = vmatpush1.bf16.msra.mxu0 %v4336
        %4356 = vmatprep.subr.bf16.mxu0 %v4333
        %4357 = vmatpush1.bf16.msra.mxu0 %v4332
        %4358 = vmatprep.subr.bf16.mxu0 %v4329
        %4359 = vmatpush1.bf16.msra.mxu0 %v4328
        %4360 = vmatprep.subr.bf16.mxu0 0
        %4361 = vmatpush2.bf16.msra.mxu0 0
        %4362 = vmatprep.subr.bf16.mxu0 0
        %4363 = vmatpush2.bf16.msra.mxu0 0
        %4364 = vmatprep.subr.bf16.mxu0 0
        %4365 = vmatpush2.bf16.msra.mxu0 0
        %4366 = vmatprep.subr.bf16.mxu0 0
        %4367 = vmatpush2.bf16.msra.mxu0 0
        %4368 = vmatprep.subr.bf16.mxu0 0
        %4369 = vmatpush2.bf16.msra.mxu0 0
        %4370 = vmatprep.subr.bf16.mxu0 0
        %4371 = vmatpush2.bf16.msra.mxu0 0
        %4372 = vmatprep.subr.bf16.mxu0 0
        %4373 = vmatpush2.bf16.msra.mxu0 0
        %4374 = vmatprep.subr.bf16.mxu0 0
        %4375 = vmatpush2.bf16.msra.mxu0 0
        %4376 = vmatprep.mubr.bf16.mxu0 0
        %4377 = vmatmul.mubr.bf16.gmra.mxu0 %v2120
        %v4378 = vpop.f32.mrf.mxu0
        %v4379 = vadd.f32 %v2091, %v4378
        %v4380 = vpop.f32.mrf.mxu0
        %v4381 = vadd.f32 %v2091, %v4380
        %v4382 = vpop.f32.mrf.mxu0
        %v4383 = vadd.f32 %v2096, %v4382
        %v4384 = vpop.f32.mrf.mxu0
        %v4385 = vadd.f32 %v2096, %v4384
        %4386 = vmatprep.mubr.bf16.mxu0 0
        %4387 = vmatmul.mubr.bf16.gmra.mxu0 %v2123
        %v4388 = vpop.f32.mrf.mxu0
        %v4389 = vadd.f32 %v2101, %v4388
        %v4390 = vpop.f32.mrf.mxu0
        %v4391 = vadd.f32 %v2101, %v4390
        %v4392 = vpop.f32.mrf.mxu0
        %v4393 = vadd.f32 %v2106, %v4392
        %v4394 = vpop.f32.mrf.mxu0
        %v4395 = vadd.f32 %v2106, %v4394
        %4396 = vdwg.mxu0
        %4397 = vmatprep.subr.bf16.mxu0 0
        %4398 = vmatpush1.bf16.msra.mxu0 0
        %4399 = vmatprep.subr.bf16.mxu0 0
        %4400 = vmatpush1.bf16.msra.mxu0 0
        %4401 = vmatprep.subr.bf16.mxu0 0
        %4402 = vmatpush1.bf16.msra.mxu0 0
        %4403 = vmatprep.subr.bf16.mxu0 0
        %4404 = vmatpush1.bf16.msra.mxu0 0
        %4405 = vmatprep.subr.bf16.mxu0 %v4343
        %4406 = vmatpush1.bf16.msra.mxu0 %v4342
        %4407 = vmatprep.subr.bf16.mxu0 %v4339
        %4408 = vmatpush1.bf16.msra.mxu0 %v4338
        %4409 = vmatprep.subr.bf16.mxu0 %v4335
        %4410 = vmatpush1.bf16.msra.mxu0 %v4334
        %4411 = vmatprep.subr.bf16.mxu0 %v4331
        %4412 = vmatpush1.bf16.msra.mxu0 %v4330
        %4413 = vmatprep.subr.bf16.mxu0 0
        %4414 = vmatpush2.bf16.msra.mxu0 0
        %4415 = vmatprep.subr.bf16.mxu0 0
        %4416 = vmatpush2.bf16.msra.mxu0 0
        %4417 = vmatprep.subr.bf16.mxu0 0
        %4418 = vmatpush2.bf16.msra.mxu0 0
        %4419 = vmatprep.subr.bf16.mxu0 0
        %4420 = vmatpush2.bf16.msra.mxu0 0
        %4421 = vmatprep.subr.bf16.mxu0 0
        %4422 = vmatpush2.bf16.msra.mxu0 0
        %4423 = vmatprep.subr.bf16.mxu0 0
        %4424 = vmatpush2.bf16.msra.mxu0 0
        %4425 = vmatprep.subr.bf16.mxu0 0
        %4426 = vmatpush2.bf16.msra.mxu0 0
        %4427 = vmatprep.subr.bf16.mxu0 0
        %4428 = vmatpush2.bf16.msra.mxu0 0
        %4429 = vmatprep.mubr.bf16.mxu0 0
        %4430 = vmatmul.mubr.bf16.gmra.mxu0 %v2120
        %v4431 = vpop.f32.mrf.mxu0
        %v4432 = vadd.f32 %v2091, %v4431
        %v4433 = vpop.f32.mrf.mxu0
        %v4434 = vadd.f32 %v2091, %v4433
        %v4435 = vpop.f32.mrf.mxu0
        %v4436 = vadd.f32 %v2096, %v4435
        %v4437 = vpop.f32.mrf.mxu0
        %v4438 = vadd.f32 %v2096, %v4437
        %4439 = vmatprep.mubr.bf16.mxu0 0
        %4440 = vmatmul.mubr.bf16.gmra.mxu0 %v2123
        %v4441 = vpop.f32.mrf.mxu0
        %v4442 = vadd.f32 %v2101, %v4441
        %v4443 = vpop.f32.mrf.mxu0
        %v4444 = vadd.f32 %v2101, %v4443
        %v4445 = vpop.f32.mrf.mxu0
        %v4446 = vadd.f32 %v2106, %v4445
        %v4447 = vpop.f32.mrf.mxu0
        %v4448 = vadd.f32 %v2106, %v4447
        %4449 = vdwg.mxu0
        %v4450 = vxor.u32 %v4379, 2147483648
        %v4451 = vxor.u32 %v4381, 2147483648
        %v4452 = vxor.u32 %v4432, 2147483648
        %v4453 = vxor.u32 %v4434, 2147483648
        %v4454 = vxor.u32 %v4383, 2147483648
        %v4455 = vxor.u32 %v4385, 2147483648
        %v4456 = vxor.u32 %v4436, 2147483648
        %v4457 = vxor.u32 %v4438, 2147483648
        %v4458 = vxor.u32 %v4389, 2147483648
        %v4459 = vxor.u32 %v4391, 2147483648
        %v4460 = vxor.u32 %v4442, 2147483648
        %v4461 = vxor.u32 %v4444, 2147483648
        %v4462 = vxor.u32 %v4393, 2147483648
        %v4463 = vxor.u32 %v4395, 2147483648
        %v4464 = vxor.u32 %v4446, 2147483648
        %v4465 = vxor.u32 %v4448, 2147483648
        %v4466 = vmul.f32 %v4450, 1.442695
        %v4467 = vpow.pop %v4466
        %v4468 = vmul.f32 %v4451, 1.442695
        %v4469 = vpow.pop %v4468
        %v4470 = vmul.f32 %v4452, 1.442695
        %v4471 = vpow.pop %v4470
        %v4472 = vmul.f32 %v4453, 1.442695
        %v4473 = vpow.pop %v4472
        %v4474 = vmul.f32 %v4454, 1.442695
        %v4475 = vpow.pop %v4474
        %v4476 = vmul.f32 %v4455, 1.442695
        %v4477 = vpow.pop %v4476
        %v4478 = vmul.f32 %v4456, 1.442695
        %v4479 = vpow.pop %v4478
        %v4480 = vmul.f32 %v4457, 1.442695
        %v4481 = vpow.pop %v4480
        %v4482 = vmul.f32 %v4458, 1.442695
        %v4483 = vpow.pop %v4482
        %v4484 = vmul.f32 %v4459, 1.442695
        %v4485 = vpow.pop %v4484
        %v4486 = vmul.f32 %v4460, 1.442695
        %v4487 = vpow.pop %v4486
        %v4488 = vmul.f32 %v4461, 1.442695
        %v4489 = vpow.pop %v4488
        %v4490 = vmul.f32 %v4462, 1.442695
        %v4491 = vpow.pop %v4490
        %v4492 = vmul.f32 %v4463, 1.442695
        %v4493 = vpow.pop %v4492
        %v4494 = vmul.f32 %v4464, 1.442695
        %v4495 = vpow.pop %v4494
        %v4496 = vmul.f32 %v4465, 1.442695
        %v4497 = vpow.pop %v4496
        %v4498 = vadd.f32 %v4467, 1.0
        %v4499 = vadd.f32 %v4469, 1.0
        %v4500 = vadd.f32 %v4471, 1.0
        %v4501 = vadd.f32 %v4473, 1.0
        %v4502 = vadd.f32 %v4475, 1.0
        %v4503 = vadd.f32 %v4477, 1.0
        %v4504 = vadd.f32 %v4479, 1.0
        %v4505 = vadd.f32 %v4481, 1.0
        %v4506 = vadd.f32 %v4483, 1.0
        %v4507 = vadd.f32 %v4485, 1.0
        %v4508 = vadd.f32 %v4487, 1.0
        %v4509 = vadd.f32 %v4489, 1.0
        %v4510 = vadd.f32 %v4491, 1.0
        %v4511 = vadd.f32 %v4493, 1.0
        %v4512 = vadd.f32 %v4495, 1.0
        %v4513 = vadd.f32 %v4497, 1.0
        %v4514 = vrcp.pop %v4498
        %v4515 = vmul.f32 1.0, %v4514
        %v4516 = vrcp.pop %v4499
        %v4517 = vmul.f32 1.0, %v4516
        %v4518 = vrcp.pop %v4500
        %v4519 = vmul.f32 1.0, %v4518
        %v4520 = vrcp.pop %v4501
        %v4521 = vmul.f32 1.0, %v4520
        %v4522 = vrcp.pop %v4502
        %v4523 = vmul.f32 1.0, %v4522
        %v4524 = vrcp.pop %v4503
        %v4525 = vmul.f32 1.0, %v4524
        %v4526 = vrcp.pop %v4504
        %v4527 = vmul.f32 1.0, %v4526
        %v4528 = vrcp.pop %v4505
        %v4529 = vmul.f32 1.0, %v4528
        %v4530 = vrcp.pop %v4506
        %v4531 = vmul.f32 1.0, %v4530
        %v4532 = vrcp.pop %v4507
        %v4533 = vmul.f32 1.0, %v4532
        %v4534 = vrcp.pop %v4508
        %v4535 = vmul.f32 1.0, %v4534
        %v4536 = vrcp.pop %v4509
        %v4537 = vmul.f32 1.0, %v4536
        %v4538 = vrcp.pop %v4510
        %v4539 = vmul.f32 1.0, %v4538
        %v4540 = vrcp.pop %v4511
        %v4541 = vmul.f32 1.0, %v4540
        %v4542 = vrcp.pop %v4512
        %v4543 = vmul.f32 1.0, %v4542
        %v4544 = vrcp.pop %v4513
        %v4545 = vmul.f32 1.0, %v4544
        %v4546 = vmul.f32 %v4379, %v4515
        %v4547 = vmul.f32 %v4381, %v4517
        %v4548 = vmul.f32 %v4432, %v4519
        %v4549 = vmul.f32 %v4434, %v4521
        %v4550 = vmul.f32 %v4383, %v4523
        %v4551 = vmul.f32 %v4385, %v4525
        %v4552 = vmul.f32 %v4436, %v4527
        %v4553 = vmul.f32 %v4438, %v4529
        %v4554 = vmul.f32 %v4389, %v4531
        %v4555 = vmul.f32 %v4391, %v4533
        %v4556 = vmul.f32 %v4442, %v4535
        %v4557 = vmul.f32 %v4444, %v4537
        %v4558 = vmul.f32 %v4393, %v4539
        %v4559 = vmul.f32 %v4395, %v4541
        %v4560 = vmul.f32 %v4446, %v4543
        %v4561 = vmul.f32 %v4448, %v4545
        %v4562 = vpack.c.bf16 %v4550, %v4546
        %v4563 = vpack.c.bf16 %v4551, %v4547
        %v4564 = vpack.c.bf16 %v4552, %v4548
        %v4565 = vpack.c.bf16 %v4553, %v4549
        %v4566 = vpack.c.bf16 %v4558, %v4554
        %v4567 = vpack.c.bf16 %v4559, %v4555
        %v4568 = vpack.c.bf16 %v4560, %v4556
        %v4569 = vpack.c.bf16 %v4561, %v4557
        %4570 = vmatprep.subr.bf16.mxu0 0
        %4571 = vmatpush1.bf16.msra.mxu0 0
        %4572 = vmatprep.subr.bf16.mxu0 0
        %4573 = vmatpush1.bf16.msra.mxu0 0
        %4574 = vmatprep.subr.bf16.mxu0 0
        %4575 = vmatpush1.bf16.msra.mxu0 0
        %4576 = vmatprep.subr.bf16.mxu0 0
        %4577 = vmatpush1.bf16.msra.mxu0 0
        %4578 = vmatprep.subr.bf16.mxu0 0
        %4579 = vmatpush1.bf16.msra.mxu0 0
        %4580 = vmatprep.subr.bf16.mxu0 0
        %4581 = vmatpush1.bf16.msra.mxu0 0
        %4582 = vmatprep.subr.bf16.mxu0 %v4567
        %4583 = vmatpush1.bf16.msra.mxu0 %v4566
        %4584 = vmatprep.subr.bf16.mxu0 %v4563
        %4585 = vmatpush1.bf16.msra.mxu0 %v4562
        %4586 = vmatprep.subr.bf16.mxu0 0
        %4587 = vmatpush2.bf16.msra.mxu0 0
        %4588 = vmatprep.subr.bf16.mxu0 0
        %4589 = vmatpush2.bf16.msra.mxu0 0
        %4590 = vmatprep.subr.bf16.mxu0 0
        %4591 = vmatpush2.bf16.msra.mxu0 0
        %4592 = vmatprep.subr.bf16.mxu0 0
        %4593 = vmatpush2.bf16.msra.mxu0 0
        %4594 = vmatprep.subr.bf16.mxu0 0
        %4595 = vmatpush2.bf16.msra.mxu0 0
        %4596 = vmatprep.subr.bf16.mxu0 0
        %4597 = vmatpush2.bf16.msra.mxu0 0
        %4598 = vmatprep.subr.bf16.mxu0 0
        %4599 = vmatpush2.bf16.msra.mxu0 0
        %4600 = vmatprep.subr.bf16.mxu0 0
        %4601 = vmatpush2.bf16.msra.mxu0 0
        %4602 = vmatprep.mubr.bf16.mxu0 0
        %4603 = vmatmul.mubr.bf16.gmra.mxu0 %v2473
        %v4604 = vpop.f32.mrf.mxu0
        %v4605 = vadd.f32 %v2354, %v4604
        %v4606 = vpop.f32.mrf.mxu0
        %v4607 = vadd.f32 %v2354, %v4606
        %v4608 = vpop.f32.mrf.mxu0
        %v4609 = vadd.f32 %v2359, %v4608
        %v4610 = vpop.f32.mrf.mxu0
        %v4611 = vadd.f32 %v2359, %v4610
        %4612 = vmatprep.mubr.bf16.mxu0 0
        %4613 = vmatmul.mubr.bf16.gmra.mxu0 %v2476
        %v4614 = vpop.f32.mrf.mxu0
        %v4615 = vadd.f32 %v2364, %v4614
        %v4616 = vpop.f32.mrf.mxu0
        %v4617 = vadd.f32 %v2364, %v4616
        %v4618 = vpop.f32.mrf.mxu0
        %v4619 = vadd.f32 %v2369, %v4618
        %v4620 = vpop.f32.mrf.mxu0
        %v4621 = vadd.f32 %v2369, %v4620
        %4622 = vmatprep.mubr.bf16.mxu0 0
        %4623 = vmatmul.mubr.bf16.gmra.mxu0 %v2479
        %v4624 = vpop.f32.mrf.mxu0
        %v4625 = vadd.f32 %v2374, %v4624
        %v4626 = vpop.f32.mrf.mxu0
        %v4627 = vadd.f32 %v2374, %v4626
        %v4628 = vpop.f32.mrf.mxu0
        %v4629 = vadd.f32 %v2379, %v4628
        %v4630 = vpop.f32.mrf.mxu0
        %v4631 = vadd.f32 %v2379, %v4630
        %4632 = vmatprep.mubr.bf16.mxu0 0
        %4633 = vmatmul.mubr.bf16.gmra.mxu0 %v2482
        %v4634 = vpop.f32.mrf.mxu0
        %v4635 = vadd.f32 %v2384, %v4634
        %v4636 = vpop.f32.mrf.mxu0
        %v4637 = vadd.f32 %v2384, %v4636
        %v4638 = vpop.f32.mrf.mxu0
        %v4639 = vadd.f32 %v2389, %v4638
        %v4640 = vpop.f32.mrf.mxu0
        %v4641 = vadd.f32 %v2389, %v4640
        %4642 = vmatprep.mubr.bf16.mxu0 0
        %4643 = vmatmul.mubr.bf16.gmra.mxu0 %v2485
        %v4644 = vpop.f32.mrf.mxu0
        %v4645 = vadd.f32 %v2394, %v4644
        %v4646 = vpop.f32.mrf.mxu0
        %v4647 = vadd.f32 %v2394, %v4646
        %v4648 = vpop.f32.mrf.mxu0
        %v4649 = vadd.f32 %v2399, %v4648
        %v4650 = vpop.f32.mrf.mxu0
        %v4651 = vadd.f32 %v2399, %v4650
        %4652 = vmatprep.mubr.bf16.mxu0 0
        %4653 = vmatmul.mubr.bf16.gmra.mxu0 %v2488
        %v4654 = vpop.f32.mrf.mxu0
        %v4655 = vadd.f32 %v2404, %v4654
        %v4656 = vpop.f32.mrf.mxu0
        %v4657 = vadd.f32 %v2404, %v4656
        %v4658 = vpop.f32.mrf.mxu0
        %v4659 = vadd.f32 %v2409, %v4658
        %v4660 = vpop.f32.mrf.mxu0
        %v4661 = vadd.f32 %v2409, %v4660
        %4662 = vmatprep.mubr.bf16.mxu0 0
        %4663 = vmatmul.mubr.bf16.gmra.mxu0 %v2491
        %v4664 = vpop.f32.mrf.mxu0
        %v4665 = vadd.f32 %v2414, %v4664
        %v4666 = vpop.f32.mrf.mxu0
        %v4667 = vadd.f32 %v2414, %v4666
        %v4668 = vpop.f32.mrf.mxu0
        %v4669 = vadd.f32 %v2419, %v4668
        %v4670 = vpop.f32.mrf.mxu0
        %v4671 = vadd.f32 %v2419, %v4670
        %4672 = vmatprep.mubr.bf16.mxu0 0
        %4673 = vmatmul.mubr.bf16.gmra.mxu0 %v2494
        %v4674 = vpop.f32.mrf.mxu0
        %v4675 = vadd.f32 %v2424, %v4674
        %v4676 = vpop.f32.mrf.mxu0
        %v4677 = vadd.f32 %v2424, %v4676
        %v4678 = vpop.f32.mrf.mxu0
        %v4679 = vadd.f32 %v2429, %v4678
        %v4680 = vpop.f32.mrf.mxu0
        %v4681 = vadd.f32 %v2429, %v4680
        %4682 = vdwg.mxu0
        %4683 = vmatprep.subr.bf16.mxu0 0
        %4684 = vmatpush1.bf16.msra.mxu0 0
        %4685 = vmatprep.subr.bf16.mxu0 0
        %4686 = vmatpush1.bf16.msra.mxu0 0
        %4687 = vmatprep.subr.bf16.mxu0 0
        %4688 = vmatpush1.bf16.msra.mxu0 0
        %4689 = vmatprep.subr.bf16.mxu0 0
        %4690 = vmatpush1.bf16.msra.mxu0 0
        %4691 = vmatprep.subr.bf16.mxu0 0
        %4692 = vmatpush1.bf16.msra.mxu0 0
        %4693 = vmatprep.subr.bf16.mxu0 0
        %4694 = vmatpush1.bf16.msra.mxu0 0
        %4695 = vmatprep.subr.bf16.mxu0 %v4569
        %4696 = vmatpush1.bf16.msra.mxu0 %v4568
        %4697 = vmatprep.subr.bf16.mxu0 %v4565
        %4698 = vmatpush1.bf16.msra.mxu0 %v4564
        %4699 = vmatprep.subr.bf16.mxu0 0
        %4700 = vmatpush2.bf16.msra.mxu0 0
        %4701 = vmatprep.subr.bf16.mxu0 0
        %4702 = vmatpush2.bf16.msra.mxu0 0
        %4703 = vmatprep.subr.bf16.mxu0 0
        %4704 = vmatpush2.bf16.msra.mxu0 0
        %4705 = vmatprep.subr.bf16.mxu0 0
        %4706 = vmatpush2.bf16.msra.mxu0 0
        %4707 = vmatprep.subr.bf16.mxu0 0
        %4708 = vmatpush2.bf16.msra.mxu0 0
        %4709 = vmatprep.subr.bf16.mxu0 0
        %4710 = vmatpush2.bf16.msra.mxu0 0
        %4711 = vmatprep.subr.bf16.mxu0 0
        %4712 = vmatpush2.bf16.msra.mxu0 0
        %4713 = vmatprep.subr.bf16.mxu0 0
        %4714 = vmatpush2.bf16.msra.mxu0 0
        %4715 = vmatprep.mubr.bf16.mxu0 0
        %4716 = vmatmul.mubr.bf16.gmra.mxu0 %v2473
        %v4717 = vpop.f32.mrf.mxu0
        %v4718 = vadd.f32 %v2354, %v4717
        %v4719 = vpop.f32.mrf.mxu0
        %v4720 = vadd.f32 %v2354, %v4719
        %v4721 = vpop.f32.mrf.mxu0
        %v4722 = vadd.f32 %v2359, %v4721
        %v4723 = vpop.f32.mrf.mxu0
        %v4724 = vadd.f32 %v2359, %v4723
        %4725 = vmatprep.mubr.bf16.mxu0 0
        %4726 = vmatmul.mubr.bf16.gmra.mxu0 %v2476
        %v4727 = vpop.f32.mrf.mxu0
        %v4728 = vadd.f32 %v2364, %v4727
        %v4729 = vpop.f32.mrf.mxu0
        %v4730 = vadd.f32 %v2364, %v4729
        %v4731 = vpop.f32.mrf.mxu0
        %v4732 = vadd.f32 %v2369, %v4731
        %v4733 = vpop.f32.mrf.mxu0
        %v4734 = vadd.f32 %v2369, %v4733
        %4735 = vmatprep.mubr.bf16.mxu0 0
        %4736 = vmatmul.mubr.bf16.gmra.mxu0 %v2479
        %v4737 = vpop.f32.mrf.mxu0
        %v4738 = vadd.f32 %v2374, %v4737
        %v4739 = vpop.f32.mrf.mxu0
        %v4740 = vadd.f32 %v2374, %v4739
        %v4741 = vpop.f32.mrf.mxu0
        %v4742 = vadd.f32 %v2379, %v4741
        %v4743 = vpop.f32.mrf.mxu0
        %v4744 = vadd.f32 %v2379, %v4743
        %4745 = vmatprep.mubr.bf16.mxu0 0
        %4746 = vmatmul.mubr.bf16.gmra.mxu0 %v2482
        %v4747 = vpop.f32.mrf.mxu0
        %v4748 = vadd.f32 %v2384, %v4747
        %v4749 = vpop.f32.mrf.mxu0
        %v4750 = vadd.f32 %v2384, %v4749
        %v4751 = vpop.f32.mrf.mxu0
        %v4752 = vadd.f32 %v2389, %v4751
        %v4753 = vpop.f32.mrf.mxu0
        %v4754 = vadd.f32 %v2389, %v4753
        %4755 = vmatprep.mubr.bf16.mxu0 0
        %4756 = vmatmul.mubr.bf16.gmra.mxu0 %v2485
        %v4757 = vpop.f32.mrf.mxu0
        %v4758 = vadd.f32 %v2394, %v4757
        %v4759 = vpop.f32.mrf.mxu0
        %v4760 = vadd.f32 %v2394, %v4759
        %v4761 = vpop.f32.mrf.mxu0
        %v4762 = vadd.f32 %v2399, %v4761
        %v4763 = vpop.f32.mrf.mxu0
        %v4764 = vadd.f32 %v2399, %v4763
        %4765 = vmatprep.mubr.bf16.mxu0 0
        %4766 = vmatmul.mubr.bf16.gmra.mxu0 %v2488
        %v4767 = vpop.f32.mrf.mxu0
        %v4768 = vadd.f32 %v2404, %v4767
        %v4769 = vpop.f32.mrf.mxu0
        %v4770 = vadd.f32 %v2404, %v4769
        %v4771 = vpop.f32.mrf.mxu0
        %v4772 = vadd.f32 %v2409, %v4771
        %v4773 = vpop.f32.mrf.mxu0
        %v4774 = vadd.f32 %v2409, %v4773
        %4775 = vmatprep.mubr.bf16.mxu0 0
        %4776 = vmatmul.mubr.bf16.gmra.mxu0 %v2491
        %v4777 = vpop.f32.mrf.mxu0
        %v4778 = vadd.f32 %v2414, %v4777
        %v4779 = vpop.f32.mrf.mxu0
        %v4780 = vadd.f32 %v2414, %v4779
        %v4781 = vpop.f32.mrf.mxu0
        %v4782 = vadd.f32 %v2419, %v4781
        %v4783 = vpop.f32.mrf.mxu0
        %v4784 = vadd.f32 %v2419, %v4783
        %4785 = vmatprep.mubr.bf16.mxu0 0
        %4786 = vmatmul.mubr.bf16.gmra.mxu0 %v2494
        %v4787 = vpop.f32.mrf.mxu0
        %v4788 = vadd.f32 %v2424, %v4787
        %v4789 = vpop.f32.mrf.mxu0
        %v4790 = vadd.f32 %v2424, %v4789
        %v4791 = vpop.f32.mrf.mxu0
        %v4792 = vadd.f32 %v2429, %v4791
        %v4793 = vpop.f32.mrf.mxu0
        %v4794 = vadd.f32 %v2429, %v4793
        %4795 = vdwg.mxu0
        %4796 = vset.pattern.permute.xlu0 1
        %4797 = vperm.xlu0 %4796, %v636
        %v4798 = vpop.permute.xlu0 %4797
        %4800 = vset.pattern.permute.xlu0 1
        %4801 = vperm.xlu0 %4800, %v637
        %v4802 = vpop.permute.xlu0 %4801
        %4804 = vset.pattern.permute.xlu0 1
        %4805 = vperm.xlu0 %4804, %v638
        %v4806 = vpop.permute.xlu0 %4805
        %4808 = vset.pattern.permute.xlu0 1
        %4809 = vperm.xlu0 %4808, %v639
        %v4810 = vpop.permute.xlu0 %4809
        %4812 = vset.pattern.permute.xlu0 1
        %4813 = vperm.xlu0 %4812, %v640
        %v4814 = vpop.permute.xlu0 %4813
        %4816 = vset.pattern.permute.xlu0 1
        %4817 = vperm.xlu0 %4816, %v641
        %v4818 = vpop.permute.xlu0 %4817
        %4820 = vset.pattern.permute.xlu0 1
        %4821 = vperm.xlu0 %4820, %v642
        %v4822 = vpop.permute.xlu0 %4821
        %4824 = vset.pattern.permute.xlu0 1
        %4825 = vperm.xlu0 %4824, %v643
        %v4826 = vpop.permute.xlu0 %4825
        %4828 = vset.pattern.permute.xlu0 1
        %4829 = vperm.xlu0 %4828, %v644
        %v4830 = vpop.permute.xlu0 %4829
        %4832 = vset.pattern.permute.xlu0 1
        %4833 = vperm.xlu0 %4832, %v645
        %v4834 = vpop.permute.xlu0 %4833
        %4836 = vset.pattern.permute.xlu0 1
        %4837 = vperm.xlu0 %4836, %v646
        %v4838 = vpop.permute.xlu0 %4837
        %4840 = vset.pattern.permute.xlu0 1
        %4841 = vperm.xlu0 %4840, %v647
        %v4842 = vpop.permute.xlu0 %4841
        %4844 = vset.pattern.permute.xlu0 1
        %4845 = vperm.xlu0 %4844, %v648
        %v4846 = vpop.permute.xlu0 %4845
        %4848 = vset.pattern.permute.xlu0 1
        %4849 = vperm.xlu0 %4848, %v649
        %v4850 = vpop.permute.xlu0 %4849
        %4852 = vset.pattern.permute.xlu0 1
        %4853 = vperm.xlu0 %4852, %v650
        %v4854 = vpop.permute.xlu0 %4853
        %4856 = vset.pattern.permute.xlu0 1
        %4857 = vperm.xlu0 %4856, %v651
        %v4858 = vpop.permute.xlu0 %4857
        %v4860 = vmul.f32 %v4798, %v572
        %v4861 = vmul.f32 %v4798, %v573
        %v4862 = vmul.f32 %v4798, %v574
        %v4863 = vmul.f32 %v4798, %v575
        %v4864 = vmul.f32 %v4802, %v576
        %v4865 = vmul.f32 %v4802, %v577
        %v4866 = vmul.f32 %v4802, %v578
        %v4867 = vmul.f32 %v4802, %v579
        %v4868 = vmul.f32 %v4806, %v580
        %v4869 = vmul.f32 %v4806, %v581
        %v4870 = vmul.f32 %v4806, %v582
        %v4871 = vmul.f32 %v4806, %v583
        %v4872 = vmul.f32 %v4810, %v584
        %v4873 = vmul.f32 %v4810, %v585
        %v4874 = vmul.f32 %v4810, %v586
        %v4875 = vmul.f32 %v4810, %v587
        %v4876 = vmul.f32 %v4814, %v588
        %v4877 = vmul.f32 %v4814, %v589
        %v4878 = vmul.f32 %v4814, %v590
        %v4879 = vmul.f32 %v4814, %v591
        %v4880 = vmul.f32 %v4818, %v592
        %v4881 = vmul.f32 %v4818, %v593
        %v4882 = vmul.f32 %v4818, %v594
        %v4883 = vmul.f32 %v4818, %v595
        %v4884 = vmul.f32 %v4822, %v596
        %v4885 = vmul.f32 %v4822, %v597
        %v4886 = vmul.f32 %v4822, %v598
        %v4887 = vmul.f32 %v4822, %v599
        %v4888 = vmul.f32 %v4826, %v600
        %v4889 = vmul.f32 %v4826, %v601
        %v4890 = vmul.f32 %v4826, %v602
        %v4891 = vmul.f32 %v4826, %v603
        %v4892 = vmul.f32 %v4830, %v604
        %v4893 = vmul.f32 %v4830, %v605
        %v4894 = vmul.f32 %v4830, %v606
        %v4895 = vmul.f32 %v4830, %v607
        %v4896 = vmul.f32 %v4834, %v608
        %v4897 = vmul.f32 %v4834, %v609
        %v4898 = vmul.f32 %v4834, %v610
        %v4899 = vmul.f32 %v4834, %v611
        %v4900 = vmul.f32 %v4838, %v612
        %v4901 = vmul.f32 %v4838, %v613
        %v4902 = vmul.f32 %v4838, %v614
        %v4903 = vmul.f32 %v4838, %v615
        %v4904 = vmul.f32 %v4842, %v616
        %v4905 = vmul.f32 %v4842, %v617
        %v4906 = vmul.f32 %v4842, %v618
        %v4907 = vmul.f32 %v4842, %v619
        %v4908 = vmul.f32 %v4846, %v620
        %v4909 = vmul.f32 %v4846, %v621
        %v4910 = vmul.f32 %v4846, %v622
        %v4911 = vmul.f32 %v4846, %v623
        %v4912 = vmul.f32 %v4850, %v624
        %v4913 = vmul.f32 %v4850, %v625
        %v4914 = vmul.f32 %v4850, %v626
        %v4915 = vmul.f32 %v4850, %v627
        %v4916 = vmul.f32 %v4854, %v628
        %v4917 = vmul.f32 %v4854, %v629
        %v4918 = vmul.f32 %v4854, %v630
        %v4919 = vmul.f32 %v4854, %v631
        %v4920 = vmul.f32 %v4858, %v632
        %v4921 = vmul.f32 %v4858, %v633
        %v4922 = vmul.f32 %v4858, %v634
        %v4923 = vmul.f32 %v4858, %v635
        %v4924 = vadd.f32 %v4860, %v4605
        %v4925 = vadd.f32 %v4861, %v4607
        %v4926 = vadd.f32 %v4862, %v4718
        %v4927 = vadd.f32 %v4863, %v4720
        %v4928 = vadd.f32 %v4864, %v4609
        %v4929 = vadd.f32 %v4865, %v4611
        %v4930 = vadd.f32 %v4866, %v4722
        %v4931 = vadd.f32 %v4867, %v4724
        %v4932 = vadd.f32 %v4868, %v4615
        %v4933 = vadd.f32 %v4869, %v4617
        %v4934 = vadd.f32 %v4870, %v4728
        %v4935 = vadd.f32 %v4871, %v4730
        %v4936 = vadd.f32 %v4872, %v4619
        %v4937 = vadd.f32 %v4873, %v4621
        %v4938 = vadd.f32 %v4874, %v4732
        %v4939 = vadd.f32 %v4875, %v4734
        %v4940 = vadd.f32 %v4876, %v4625
        %v4941 = vadd.f32 %v4877, %v4627
        %v4942 = vadd.f32 %v4878, %v4738
        %v4943 = vadd.f32 %v4879, %v4740
        %v4944 = vadd.f32 %v4880, %v4629
        %v4945 = vadd.f32 %v4881, %v4631
        %v4946 = vadd.f32 %v4882, %v4742
        %v4947 = vadd.f32 %v4883, %v4744
        %v4948 = vadd.f32 %v4884, %v4635
        %v4949 = vadd.f32 %v4885, %v4637
        %v4950 = vadd.f32 %v4886, %v4748
        %v4951 = vadd.f32 %v4887, %v4750
        %v4952 = vadd.f32 %v4888, %v4639
        %v4953 = vadd.f32 %v4889, %v4641
        %v4954 = vadd.f32 %v4890, %v4752
        %v4955 = vadd.f32 %v4891, %v4754
        %v4956 = vadd.f32 %v4892, %v4645
        %v4957 = vadd.f32 %v4893, %v4647
        %v4958 = vadd.f32 %v4894, %v4758
        %v4959 = vadd.f32 %v4895, %v4760
        %v4960 = vadd.f32 %v4896, %v4649
        %v4961 = vadd.f32 %v4897, %v4651
        %v4962 = vadd.f32 %v4898, %v4762
        %v4963 = vadd.f32 %v4899, %v4764
        %v4964 = vadd.f32 %v4900, %v4655
        %v4965 = vadd.f32 %v4901, %v4657
        %v4966 = vadd.f32 %v4902, %v4768
        %v4967 = vadd.f32 %v4903, %v4770
        %v4968 = vadd.f32 %v4904, %v4659
        %v4969 = vadd.f32 %v4905, %v4661
        %v4970 = vadd.f32 %v4906, %v4772
        %v4971 = vadd.f32 %v4907, %v4774
        %v4972 = vadd.f32 %v4908, %v4665
        %v4973 = vadd.f32 %v4909, %v4667
        %v4974 = vadd.f32 %v4910, %v4778
        %v4975 = vadd.f32 %v4911, %v4780
        %v4976 = vadd.f32 %v4912, %v4669
        %v4977 = vadd.f32 %v4913, %v4671
        %v4978 = vadd.f32 %v4914, %v4782
        %v4979 = vadd.f32 %v4915, %v4784
        %v4980 = vadd.f32 %v4916, %v4675
        %v4981 = vadd.f32 %v4917, %v4677
        %v4982 = vadd.f32 %v4918, %v4788
        %v4983 = vadd.f32 %v4919, %v4790
        %v4984 = vadd.f32 %v4920, %v4679
        %v4985 = vadd.f32 %v4921, %v4681
        %v4986 = vadd.f32 %v4922, %v4792
        %v4987 = vadd.f32 %v4923, %v4794
        %v4988 = vpack.c.bf16 %v4928, %v4924
        %v4989 = vpack.c.bf16 %v4929, %v4925
        %v4990 = vpack.c.bf16 %v4930, %v4926
        %v4991 = vpack.c.bf16 %v4931, %v4927
        %v4992 = vpack.c.bf16 %v4936, %v4932
        %v4993 = vpack.c.bf16 %v4937, %v4933
        %v4994 = vpack.c.bf16 %v4938, %v4934
        %v4995 = vpack.c.bf16 %v4939, %v4935
        %v4996 = vpack.c.bf16 %v4944, %v4940
        %v4997 = vpack.c.bf16 %v4945, %v4941
        %v4998 = vpack.c.bf16 %v4946, %v4942
        %v4999 = vpack.c.bf16 %v4947, %v4943
        %v5000 = vpack.c.bf16 %v4952, %v4948
        %v5001 = vpack.c.bf16 %v4953, %v4949
        %v5002 = vpack.c.bf16 %v4954, %v4950
        %v5003 = vpack.c.bf16 %v4955, %v4951
        %v5004 = vpack.c.bf16 %v4960, %v4956
        %v5005 = vpack.c.bf16 %v4961, %v4957
        %v5006 = vpack.c.bf16 %v4962, %v4958
        %v5007 = vpack.c.bf16 %v4963, %v4959
        %v5008 = vpack.c.bf16 %v4968, %v4964
        %v5009 = vpack.c.bf16 %v4969, %v4965
        %v5010 = vpack.c.bf16 %v4970, %v4966
        %v5011 = vpack.c.bf16 %v4971, %v4967
        %v5012 = vpack.c.bf16 %v4976, %v4972
        %v5013 = vpack.c.bf16 %v4977, %v4973
        %v5014 = vpack.c.bf16 %v4978, %v4974
        %v5015 = vpack.c.bf16 %v4979, %v4975
        %v5016 = vpack.c.bf16 %v4984, %v4980
        %v5017 = vpack.c.bf16 %v4985, %v4981
        %v5018 = vpack.c.bf16 %v4986, %v4982
        %v5019 = vpack.c.bf16 %v4987, %v4983
        %5020 = vmatprep.subr.bf16.mxu0 %v5017
        %5021 = vmatpush1.bf16.msra.mxu0 %v5016
        %5022 = vmatprep.subr.bf16.mxu0 %v5013
        %5023 = vmatpush1.bf16.msra.mxu0 %v5012
        %5024 = vmatprep.subr.bf16.mxu0 %v5009
        %5025 = vmatpush1.bf16.msra.mxu0 %v5008
        %5026 = vmatprep.subr.bf16.mxu0 %v5005
        %5027 = vmatpush1.bf16.msra.mxu0 %v5004
        %5028 = vmatprep.subr.bf16.mxu0 %v5001
        %5029 = vmatpush1.bf16.msra.mxu0 %v5000
        %5030 = vmatprep.subr.bf16.mxu0 %v4997
        %5031 = vmatpush1.bf16.msra.mxu0 %v4996
        %5032 = vmatprep.subr.bf16.mxu0 %v4993
        %5033 = vmatpush1.bf16.msra.mxu0 %v4992
        %5034 = vmatprep.subr.bf16.mxu0 %v4989
        %5035 = vmatpush1.bf16.msra.mxu0 %v4988
        %5036 = vmatprep.subr.bf16.mxu0 0
        %5037 = vmatpush2.bf16.msra.mxu0 0
        %5038 = vmatprep.subr.bf16.mxu0 0
        %5039 = vmatpush2.bf16.msra.mxu0 0
        %5040 = vmatprep.subr.bf16.mxu0 0
        %5041 = vmatpush2.bf16.msra.mxu0 0
        %5042 = vmatprep.subr.bf16.mxu0 0
        %5043 = vmatpush2.bf16.msra.mxu0 0
        %5044 = vmatprep.subr.bf16.mxu0 0
        %5045 = vmatpush2.bf16.msra.mxu0 0
        %5046 = vmatprep.subr.bf16.mxu0 0
        %5047 = vmatpush2.bf16.msra.mxu0 0
        %5048 = vmatprep.subr.bf16.mxu0 0
        %5049 = vmatpush2.bf16.msra.mxu0 0
        %5050 = vmatprep.subr.bf16.mxu0 0
        %5051 = vmatpush2.bf16.msra.mxu0 0
        %5052 = vmatprep.mubr.bf16.mxu0 0
        %5053 = vmatmul.mubr.bf16.gmra.mxu0 %v3074
        %v5054 = vpop.f32.mrf.mxu0
        %v5055 = vadd.f32 %v2965, %v5054
        %v5056 = vpop.f32.mrf.mxu0
        %v5057 = vadd.f32 %v2965, %v5056
        %v5058 = vpop.f32.mrf.mxu0
        %v5059 = vadd.f32 %v2970, %v5058
        %v5060 = vpop.f32.mrf.mxu0
        %v5061 = vadd.f32 %v2970, %v5060
        %5062 = vmatprep.mubr.bf16.mxu0 0
        %5063 = vmatmul.mubr.bf16.gmra.mxu0 %v3075
        %v5064 = vpop.f32.mrf.mxu0
        %v5065 = vadd.f32 %v2975, %v5064
        %v5066 = vpop.f32.mrf.mxu0
        %v5067 = vadd.f32 %v2975, %v5066
        %v5068 = vpop.f32.mrf.mxu0
        %v5069 = vadd.f32 %v2980, %v5068
        %v5070 = vpop.f32.mrf.mxu0
        %v5071 = vadd.f32 %v2980, %v5070
        %5072 = vmatprep.mubr.bf16.mxu0 0
        %5073 = vmatmul.mubr.bf16.gmra.mxu0 %v3076
        %v5074 = vpop.f32.mrf.mxu0
        %v5075 = vadd.f32 %v2985, %v5074
        %v5076 = vpop.f32.mrf.mxu0
        %v5077 = vadd.f32 %v2985, %v5076
        %v5078 = vpop.f32.mrf.mxu0
        %v5079 = vadd.f32 %v2990, %v5078
        %v5080 = vpop.f32.mrf.mxu0
        %v5081 = vadd.f32 %v2990, %v5080
        %5082 = vmatprep.mubr.bf16.mxu0 0
        %5083 = vmatmul.mubr.bf16.gmra.mxu0 %v3077
        %v5084 = vpop.f32.mrf.mxu0
        %v5085 = vadd.f32 %v2995, %v5084
        %v5086 = vpop.f32.mrf.mxu0
        %v5087 = vadd.f32 %v2995, %v5086
        %v5088 = vpop.f32.mrf.mxu0
        %v5089 = vadd.f32 %v3000, %v5088
        %v5090 = vpop.f32.mrf.mxu0
        %v5091 = vadd.f32 %v3000, %v5090
        %5092 = vmatprep.mubr.bf16.mxu0 0
        %5093 = vmatmul.mubr.bf16.gmra.mxu0 %v3078
        %v5094 = vpop.f32.mrf.mxu0
        %v5095 = vadd.f32 %v3005, %v5094
        %v5096 = vpop.f32.mrf.mxu0
        %v5097 = vadd.f32 %v3005, %v5096
        %v5098 = vpop.f32.mrf.mxu0
        %v5099 = vadd.f32 %v3010, %v5098
        %v5100 = vpop.f32.mrf.mxu0
        %v5101 = vadd.f32 %v3010, %v5100
        %5102 = vmatprep.mubr.bf16.mxu0 0
        %5103 = vmatmul.mubr.bf16.gmra.mxu0 %v3079
        %v5104 = vpop.f32.mrf.mxu0
        %v5105 = vadd.f32 %v3015, %v5104
        %v5106 = vpop.f32.mrf.mxu0
        %v5107 = vadd.f32 %v3015, %v5106
        %v5108 = vpop.f32.mrf.mxu0
        %v5109 = vadd.f32 %v3020, %v5108
        %v5110 = vpop.f32.mrf.mxu0
        %v5111 = vadd.f32 %v3020, %v5110
        %5112 = vmatprep.mubr.bf16.mxu0 0
        %5113 = vmatmul.mubr.bf16.gmra.mxu0 %v3080
        %v5114 = vpop.f32.mrf.mxu0
        %v5115 = vadd.f32 %v3025, %v5114
        %v5116 = vpop.f32.mrf.mxu0
        %v5117 = vadd.f32 %v3025, %v5116
        %v5118 = vpop.f32.mrf.mxu0
        %v5119 = vadd.f32 %v3030, %v5118
        %v5120 = vpop.f32.mrf.mxu0
        %v5121 = vadd.f32 %v3030, %v5120
        %5122 = vmatprep.mubr.bf16.mxu0 0
        %5123 = vmatmul.mubr.bf16.gmra.mxu0 %v3081
        %v5124 = vpop.f32.mrf.mxu0
        %v5125 = vadd.f32 %v3035, %v5124
        %v5126 = vpop.f32.mrf.mxu0
        %v5127 = vadd.f32 %v3035, %v5126
        %v5128 = vpop.f32.mrf.mxu0
        %v5129 = vadd.f32 %v3040, %v5128
        %v5130 = vpop.f32.mrf.mxu0
        %v5131 = vadd.f32 %v3040, %v5130
        %5132 = vdwg.mxu0
        %5133 = vmatprep.subr.bf16.mxu0 %v5019
        %5134 = vmatpush1.bf16.msra.mxu0 %v5018
        %5135 = vmatprep.subr.bf16.mxu0 %v5015
        %5136 = vmatpush1.bf16.msra.mxu0 %v5014
        %5137 = vmatprep.subr.bf16.mxu0 %v5011
        %5138 = vmatpush1.bf16.msra.mxu0 %v5010
        %5139 = vmatprep.subr.bf16.mxu0 %v5007
        %5140 = vmatpush1.bf16.msra.mxu0 %v5006
        %5141 = vmatprep.subr.bf16.mxu0 %v5003
        %5142 = vmatpush1.bf16.msra.mxu0 %v5002
        %5143 = vmatprep.subr.bf16.mxu0 %v4999
        %5144 = vmatpush1.bf16.msra.mxu0 %v4998
        %5145 = vmatprep.subr.bf16.mxu0 %v4995
        %5146 = vmatpush1.bf16.msra.mxu0 %v4994
        %5147 = vmatprep.subr.bf16.mxu0 %v4991
        %5148 = vmatpush1.bf16.msra.mxu0 %v4990
        %5149 = vmatprep.subr.bf16.mxu0 0
        %5150 = vmatpush2.bf16.msra.mxu0 0
        %5151 = vmatprep.subr.bf16.mxu0 0
        %5152 = vmatpush2.bf16.msra.mxu0 0
        %5153 = vmatprep.subr.bf16.mxu0 0
        %5154 = vmatpush2.bf16.msra.mxu0 0
        %5155 = vmatprep.subr.bf16.mxu0 0
        %5156 = vmatpush2.bf16.msra.mxu0 0
        %5157 = vmatprep.subr.bf16.mxu0 0
        %5158 = vmatpush2.bf16.msra.mxu0 0
        %5159 = vmatprep.subr.bf16.mxu0 0
        %5160 = vmatpush2.bf16.msra.mxu0 0
        %5161 = vmatprep.subr.bf16.mxu0 0
        %5162 = vmatpush2.bf16.msra.mxu0 0
        %5163 = vmatprep.subr.bf16.mxu0 0
        %5164 = vmatpush2.bf16.msra.mxu0 0
        %5165 = vmatprep.mubr.bf16.mxu0 0
        %5166 = vmatmul.mubr.bf16.gmra.mxu0 %v3074
        %v5167 = vpop.f32.mrf.mxu0
        %v5168 = vadd.f32 %v2965, %v5167
        %v5169 = vpop.f32.mrf.mxu0
        %v5170 = vadd.f32 %v2965, %v5169
        %v5171 = vpop.f32.mrf.mxu0
        %v5172 = vadd.f32 %v2970, %v5171
        %v5173 = vpop.f32.mrf.mxu0
        %v5174 = vadd.f32 %v2970, %v5173
        %5175 = vmatprep.mubr.bf16.mxu0 0
        %5176 = vmatmul.mubr.bf16.gmra.mxu0 %v3075
        %v5177 = vpop.f32.mrf.mxu0
        %v5178 = vadd.f32 %v2975, %v5177
        %v5179 = vpop.f32.mrf.mxu0
        %v5180 = vadd.f32 %v2975, %v5179
        %v5181 = vpop.f32.mrf.mxu0
        %v5182 = vadd.f32 %v2980, %v5181
        %v5183 = vpop.f32.mrf.mxu0
        %v5184 = vadd.f32 %v2980, %v5183
        %5185 = vmatprep.mubr.bf16.mxu0 0
        %5186 = vmatmul.mubr.bf16.gmra.mxu0 %v3076
        %v5187 = vpop.f32.mrf.mxu0
        %v5188 = vadd.f32 %v2985, %v5187
        %v5189 = vpop.f32.mrf.mxu0
        %v5190 = vadd.f32 %v2985, %v5189
        %v5191 = vpop.f32.mrf.mxu0
        %v5192 = vadd.f32 %v2990, %v5191
        %v5193 = vpop.f32.mrf.mxu0
        %v5194 = vadd.f32 %v2990, %v5193
        %5195 = vmatprep.mubr.bf16.mxu0 0
        %5196 = vmatmul.mubr.bf16.gmra.mxu0 %v3077
        %v5197 = vpop.f32.mrf.mxu0
        %v5198 = vadd.f32 %v2995, %v5197
        %v5199 = vpop.f32.mrf.mxu0
        %v5200 = vadd.f32 %v2995, %v5199
        %v5201 = vpop.f32.mrf.mxu0
        %v5202 = vadd.f32 %v3000, %v5201
        %v5203 = vpop.f32.mrf.mxu0
        %v5204 = vadd.f32 %v3000, %v5203
        %5205 = vmatprep.mubr.bf16.mxu0 0
        %5206 = vmatmul.mubr.bf16.gmra.mxu0 %v3078
        %v5207 = vpop.f32.mrf.mxu0
        %v5208 = vadd.f32 %v3005, %v5207
        %v5209 = vpop.f32.mrf.mxu0
        %v5210 = vadd.f32 %v3005, %v5209
        %v5211 = vpop.f32.mrf.mxu0
        %v5212 = vadd.f32 %v3010, %v5211
        %v5213 = vpop.f32.mrf.mxu0
        %v5214 = vadd.f32 %v3010, %v5213
        %5215 = vmatprep.mubr.bf16.mxu0 0
        %5216 = vmatmul.mubr.bf16.gmra.mxu0 %v3079
        %v5217 = vpop.f32.mrf.mxu0
        %v5218 = vadd.f32 %v3015, %v5217
        %v5219 = vpop.f32.mrf.mxu0
        %v5220 = vadd.f32 %v3015, %v5219
        %v5221 = vpop.f32.mrf.mxu0
        %v5222 = vadd.f32 %v3020, %v5221
        %v5223 = vpop.f32.mrf.mxu0
        %v5224 = vadd.f32 %v3020, %v5223
        %5225 = vmatprep.mubr.bf16.mxu0 0
        %5226 = vmatmul.mubr.bf16.gmra.mxu0 %v3080
        %v5227 = vpop.f32.mrf.mxu0
        %v5228 = vadd.f32 %v3025, %v5227
        %v5229 = vpop.f32.mrf.mxu0
        %v5230 = vadd.f32 %v3025, %v5229
        %v5231 = vpop.f32.mrf.mxu0
        %v5232 = vadd.f32 %v3030, %v5231
        %v5233 = vpop.f32.mrf.mxu0
        %v5234 = vadd.f32 %v3030, %v5233
        %5235 = vmatprep.mubr.bf16.mxu0 0
        %5236 = vmatmul.mubr.bf16.gmra.mxu0 %v3081
        %v5237 = vpop.f32.mrf.mxu0
        %v5238 = vadd.f32 %v3035, %v5237
        %v5239 = vpop.f32.mrf.mxu0
        %v5240 = vadd.f32 %v3035, %v5239
        %v5241 = vpop.f32.mrf.mxu0
        %v5242 = vadd.f32 %v3040, %v5241
        %v5243 = vpop.f32.mrf.mxu0
        %v5244 = vadd.f32 %v3040, %v5243
        %5245 = vdwg.mxu0
        %v5246 = vmax.f32 %v5055, %v5059
        %v5247 = vmax.f32 %v5246, %v5065
        %v5248 = vmax.f32 %v5247, %v5069
        %v5249 = vmax.f32 %v5248, %v5075
        %v5250 = vmax.f32 %v5249, %v5079
        %v5251 = vmax.f32 %v5250, %v5085
        %v5252 = vmax.f32 %v5251, %v5089
        %v5253 = vmax.f32 %v5252, %v5095
        %v5254 = vmax.f32 %v5253, %v5099
        %v5255 = vmax.f32 %v5254, %v5105
        %v5256 = vmax.f32 %v5255, %v5109
        %v5257 = vmax.f32 %v5256, %v5115
        %v5258 = vmax.f32 %v5257, %v5119
        %v5259 = vmax.f32 %v5258, %v5125
        %v5260 = vmax.f32 %v5259, %v5129
        %v5261 = vrot.slane %v5260, 4
        %v5262 = vmax.f32 %v5260, %v5261
        %v5263 = vrot.slane %v5262, 2
        %v5264 = vmax.f32 %v5262, %v5263
        %v5265 = vrot.slane %v5264, 1
        %v5266 = vmax.f32 %v5264, %v5265
        %v5267 = vmax.f32 %v5057, %v5061
        %v5268 = vmax.f32 %v5267, %v5067
        %v5269 = vmax.f32 %v5268, %v5071
        %v5270 = vmax.f32 %v5269, %v5077
        %v5271 = vmax.f32 %v5270, %v5081
        %v5272 = vmax.f32 %v5271, %v5087
        %v5273 = vmax.f32 %v5272, %v5091
        %v5274 = vmax.f32 %v5273, %v5097
        %v5275 = vmax.f32 %v5274, %v5101
        %v5276 = vmax.f32 %v5275, %v5107
        %v5277 = vmax.f32 %v5276, %v5111
        %v5278 = vmax.f32 %v5277, %v5117
        %v5279 = vmax.f32 %v5278, %v5121
        %v5280 = vmax.f32 %v5279, %v5127
        %v5281 = vmax.f32 %v5280, %v5131
        %v5282 = vrot.slane %v5281, 4
        %v5283 = vmax.f32 %v5281, %v5282
        %v5284 = vrot.slane %v5283, 2
        %v5285 = vmax.f32 %v5283, %v5284
        %v5286 = vrot.slane %v5285, 1
        %v5287 = vmax.f32 %v5285, %v5286
        %v5288 = vmax.f32 %v5168, %v5172
        %v5289 = vmax.f32 %v5288, %v5178
        %v5290 = vmax.f32 %v5289, %v5182
        %v5291 = vmax.f32 %v5290, %v5188
        %v5292 = vmax.f32 %v5291, %v5192
        %v5293 = vmax.f32 %v5292, %v5198
        %v5294 = vmax.f32 %v5293, %v5202
        %v5295 = vmax.f32 %v5294, %v5208
        %v5296 = vmax.f32 %v5295, %v5212
        %v5297 = vmax.f32 %v5296, %v5218
        %v5298 = vmax.f32 %v5297, %v5222
        %v5299 = vmax.f32 %v5298, %v5228
        %v5300 = vmax.f32 %v5299, %v5232
        %v5301 = vmax.f32 %v5300, %v5238
        %v5302 = vmax.f32 %v5301, %v5242
        %v5303 = vrot.slane %v5302, 4
        %v5304 = vmax.f32 %v5302, %v5303
        %v5305 = vrot.slane %v5304, 2
        %v5306 = vmax.f32 %v5304, %v5305
        %v5307 = vrot.slane %v5306, 1
        %v5308 = vmax.f32 %v5306, %v5307
        %v5309 = vmax.f32 %v5170, %v5174
        %v5310 = vmax.f32 %v5309, %v5180
        %v5311 = vmax.f32 %v5310, %v5184
        %v5312 = vmax.f32 %v5311, %v5190
        %v5313 = vmax.f32 %v5312, %v5194
        %v5314 = vmax.f32 %v5313, %v5200
        %v5315 = vmax.f32 %v5314, %v5204
        %v5316 = vmax.f32 %v5315, %v5210
        %v5317 = vmax.f32 %v5316, %v5214
        %v5318 = vmax.f32 %v5317, %v5220
        %v5319 = vmax.f32 %v5318, %v5224
        %v5320 = vmax.f32 %v5319, %v5230
        %v5321 = vmax.f32 %v5320, %v5234
        %v5322 = vmax.f32 %v5321, %v5240
        %v5323 = vmax.f32 %v5322, %v5244
        %v5324 = vrot.slane %v5323, 4
        %v5325 = vmax.f32 %v5323, %v5324
        %v5326 = vrot.slane %v5325, 2
        %v5327 = vmax.f32 %v5325, %v5326
        %v5328 = vrot.slane %v5327, 1
        %v5329 = vmax.f32 %v5327, %v5328
        %v5330 = vsub.f32 %v5055, %v5266
        %v5331 = vsub.f32 %v5057, %v5287
        %v5332 = vsub.f32 %v5168, %v5308
        %v5333 = vsub.f32 %v5170, %v5329
        %v5334 = vsub.f32 %v5059, %v5266
        %v5335 = vsub.f32 %v5061, %v5287
        %v5336 = vsub.f32 %v5172, %v5308
        %v5337 = vsub.f32 %v5174, %v5329
        %v5338 = vsub.f32 %v5065, %v5266
        %v5339 = vsub.f32 %v5067, %v5287
        %v5340 = vsub.f32 %v5178, %v5308
        %v5341 = vsub.f32 %v5180, %v5329
        %v5342 = vsub.f32 %v5069, %v5266
        %v5343 = vsub.f32 %v5071, %v5287
        %v5344 = vsub.f32 %v5182, %v5308
        %v5345 = vsub.f32 %v5184, %v5329
        %v5346 = vsub.f32 %v5075, %v5266
        %v5347 = vsub.f32 %v5077, %v5287
        %v5348 = vsub.f32 %v5188, %v5308
        %v5349 = vsub.f32 %v5190, %v5329
        %v5350 = vsub.f32 %v5079, %v5266
        %v5351 = vsub.f32 %v5081, %v5287
        %v5352 = vsub.f32 %v5192, %v5308
        %v5353 = vsub.f32 %v5194, %v5329
        %v5354 = vsub.f32 %v5085, %v5266
        %v5355 = vsub.f32 %v5087, %v5287
        %v5356 = vsub.f32 %v5198, %v5308
        %v5357 = vsub.f32 %v5200, %v5329
        %v5358 = vsub.f32 %v5089, %v5266
        %v5359 = vsub.f32 %v5091, %v5287
        %v5360 = vsub.f32 %v5202, %v5308
        %v5361 = vsub.f32 %v5204, %v5329
        %v5362 = vsub.f32 %v5095, %v5266
        %v5363 = vsub.f32 %v5097, %v5287
        %v5364 = vsub.f32 %v5208, %v5308
        %v5365 = vsub.f32 %v5210, %v5329
        %v5366 = vsub.f32 %v5099, %v5266
        %v5367 = vsub.f32 %v5101, %v5287
        %v5368 = vsub.f32 %v5212, %v5308
        %v5369 = vsub.f32 %v5214, %v5329
        %v5370 = vsub.f32 %v5105, %v5266
        %v5371 = vsub.f32 %v5107, %v5287
        %v5372 = vsub.f32 %v5218, %v5308
        %v5373 = vsub.f32 %v5220, %v5329
        %v5374 = vsub.f32 %v5109, %v5266
        %v5375 = vsub.f32 %v5111, %v5287
        %v5376 = vsub.f32 %v5222, %v5308
        %v5377 = vsub.f32 %v5224, %v5329
        %v5378 = vsub.f32 %v5115, %v5266
        %v5379 = vsub.f32 %v5117, %v5287
        %v5380 = vsub.f32 %v5228, %v5308
        %v5381 = vsub.f32 %v5230, %v5329
        %v5382 = vsub.f32 %v5119, %v5266
        %v5383 = vsub.f32 %v5121, %v5287
        %v5384 = vsub.f32 %v5232, %v5308
        %v5385 = vsub.f32 %v5234, %v5329
        %v5386 = vsub.f32 %v5125, %v5266
        %v5387 = vsub.f32 %v5127, %v5287
        %v5388 = vsub.f32 %v5238, %v5308
        %v5389 = vsub.f32 %v5240, %v5329
        %v5390 = vsub.f32 %v5129, %v5266
        %v5391 = vsub.f32 %v5131, %v5287
        %v5392 = vsub.f32 %v5242, %v5308
        %v5393 = vsub.f32 %v5244, %v5329
        %v5394 = vmul.f32 %v5330, 1.442695
        %v5395 = vpow.pop %v5394
        %v5396 = vmul.f32 %v5331, 1.442695
        %v5397 = vpow.pop %v5396
        %v5398 = vmul.f32 %v5332, 1.442695
        %v5399 = vpow.pop %v5398
        %v5400 = vmul.f32 %v5333, 1.442695
        %v5401 = vpow.pop %v5400
        %v5402 = vmul.f32 %v5334, 1.442695
        %v5403 = vpow.pop %v5402
        %v5404 = vmul.f32 %v5335, 1.442695
        %v5405 = vpow.pop %v5404
        %v5406 = vmul.f32 %v5336, 1.442695
        %v5407 = vpow.pop %v5406
        %v5408 = vmul.f32 %v5337, 1.442695
        %v5409 = vpow.pop %v5408
        %v5410 = vmul.f32 %v5338, 1.442695
        %v5411 = vpow.pop %v5410
        %v5412 = vmul.f32 %v5339, 1.442695
        %v5413 = vpow.pop %v5412
        %v5414 = vmul.f32 %v5340, 1.442695
        %v5415 = vpow.pop %v5414
        %v5416 = vmul.f32 %v5341, 1.442695
        %v5417 = vpow.pop %v5416
        %v5418 = vmul.f32 %v5342, 1.442695
        %v5419 = vpow.pop %v5418
        %v5420 = vmul.f32 %v5343, 1.442695
        %v5421 = vpow.pop %v5420
        %v5422 = vmul.f32 %v5344, 1.442695
        %v5423 = vpow.pop %v5422
        %v5424 = vmul.f32 %v5345, 1.442695
        %v5425 = vpow.pop %v5424
        %v5426 = vmul.f32 %v5346, 1.442695
        %v5427 = vpow.pop %v5426
        %v5428 = vmul.f32 %v5347, 1.442695
        %v5429 = vpow.pop %v5428
        %v5430 = vmul.f32 %v5348, 1.442695
        %v5431 = vpow.pop %v5430
        %v5432 = vmul.f32 %v5349, 1.442695
        %v5433 = vpow.pop %v5432
        %v5434 = vmul.f32 %v5350, 1.442695
        %v5435 = vpow.pop %v5434
        %v5436 = vmul.f32 %v5351, 1.442695
        %v5437 = vpow.pop %v5436
        %v5438 = vmul.f32 %v5352, 1.442695
        %v5439 = vpow.pop %v5438
        %v5440 = vmul.f32 %v5353, 1.442695
        %v5441 = vpow.pop %v5440
        %v5442 = vmul.f32 %v5354, 1.442695
        %v5443 = vpow.pop %v5442
        %v5444 = vmul.f32 %v5355, 1.442695
        %v5445 = vpow.pop %v5444
        %v5446 = vmul.f32 %v5356, 1.442695
        %v5447 = vpow.pop %v5446
        %v5448 = vmul.f32 %v5357, 1.442695
        %v5449 = vpow.pop %v5448
        %v5450 = vmul.f32 %v5358, 1.442695
        %v5451 = vpow.pop %v5450
        %v5452 = vmul.f32 %v5359, 1.442695
        %v5453 = vpow.pop %v5452
        %v5454 = vmul.f32 %v5360, 1.442695
        %v5455 = vpow.pop %v5454
        %v5456 = vmul.f32 %v5361, 1.442695
        %v5457 = vpow.pop %v5456
        %v5458 = vmul.f32 %v5362, 1.442695
        %v5459 = vpow.pop %v5458
        %v5460 = vmul.f32 %v5363, 1.442695
        %v5461 = vpow.pop %v5460
        %v5462 = vmul.f32 %v5364, 1.442695
        %v5463 = vpow.pop %v5462
        %v5464 = vmul.f32 %v5365, 1.442695
        %v5465 = vpow.pop %v5464
        %v5466 = vmul.f32 %v5366, 1.442695
        %v5467 = vpow.pop %v5466
        %v5468 = vmul.f32 %v5367, 1.442695
        %v5469 = vpow.pop %v5468
        %v5470 = vmul.f32 %v5368, 1.442695
        %v5471 = vpow.pop %v5470
        %v5472 = vmul.f32 %v5369, 1.442695
        %v5473 = vpow.pop %v5472
        %v5474 = vmul.f32 %v5370, 1.442695
        %v5475 = vpow.pop %v5474
        %v5476 = vmul.f32 %v5371, 1.442695
        %v5477 = vpow.pop %v5476
        %v5478 = vmul.f32 %v5372, 1.442695
        %v5479 = vpow.pop %v5478
        %v5480 = vmul.f32 %v5373, 1.442695
        %v5481 = vpow.pop %v5480
        %v5482 = vmul.f32 %v5374, 1.442695
        %v5483 = vpow.pop %v5482
        %v5484 = vmul.f32 %v5375, 1.442695
        %v5485 = vpow.pop %v5484
        %v5486 = vmul.f32 %v5376, 1.442695
        %v5487 = vpow.pop %v5486
        %v5488 = vmul.f32 %v5377, 1.442695
        %v5489 = vpow.pop %v5488
        %v5490 = vmul.f32 %v5378, 1.442695
        %v5491 = vpow.pop %v5490
        %v5492 = vmul.f32 %v5379, 1.442695
        %v5493 = vpow.pop %v5492
        %v5494 = vmul.f32 %v5380, 1.442695
        %v5495 = vpow.pop %v5494
        %v5496 = vmul.f32 %v5381, 1.442695
        %v5497 = vpow.pop %v5496
        %v5498 = vmul.f32 %v5382, 1.442695
        %v5499 = vpow.pop %v5498
        %v5500 = vmul.f32 %v5383, 1.442695
        %v5501 = vpow.pop %v5500
        %v5502 = vmul.f32 %v5384, 1.442695
        %v5503 = vpow.pop %v5502
        %v5504 = vmul.f32 %v5385, 1.442695
        %v5505 = vpow.pop %v5504
        %v5506 = vmul.f32 %v5386, 1.442695
        %v5507 = vpow.pop %v5506
        %v5508 = vmul.f32 %v5387, 1.442695
        %v5509 = vpow.pop %v5508
        %v5510 = vmul.f32 %v5388, 1.442695
        %v5511 = vpow.pop %v5510
        %v5512 = vmul.f32 %v5389, 1.442695
        %v5513 = vpow.pop %v5512
        %v5514 = vmul.f32 %v5390, 1.442695
        %v5515 = vpow.pop %v5514
        %v5516 = vmul.f32 %v5391, 1.442695
        %v5517 = vpow.pop %v5516
        %v5518 = vmul.f32 %v5392, 1.442695
        %v5519 = vpow.pop %v5518
        %v5520 = vmul.f32 %v5393, 1.442695
        %v5521 = vpow.pop %v5520
        %v5522 = vadd.f32 %v5395, %v5403
        %v5523 = vadd.f32 %v5522, %v5411
        %v5524 = vadd.f32 %v5523, %v5419
        %v5525 = vadd.f32 %v5524, %v5427
        %v5526 = vadd.f32 %v5525, %v5435
        %v5527 = vadd.f32 %v5526, %v5443
        %v5528 = vadd.f32 %v5527, %v5451
        %v5529 = vadd.f32 %v5528, %v5459
        %v5530 = vadd.f32 %v5529, %v5467
        %v5531 = vadd.f32 %v5530, %v5475
        %v5532 = vadd.f32 %v5531, %v5483
        %v5533 = vadd.f32 %v5532, %v5491
        %v5534 = vadd.f32 %v5533, %v5499
        %v5535 = vadd.f32 %v5534, %v5507
        %v5536 = vadd.f32 %v5535, %v5515
        %v5537 = vrot.slane %v5536, 4
        %v5538 = vadd.f32 %v5536, %v5537
        %v5539 = vrot.slane %v5538, 2
        %v5540 = vadd.f32 %v5538, %v5539
        %v5541 = vrot.slane %v5540, 1
        %v5542 = vadd.f32 %v5540, %v5541
        %v5543 = vadd.f32 %v5397, %v5405
        %v5544 = vadd.f32 %v5543, %v5413
        %v5545 = vadd.f32 %v5544, %v5421
        %v5546 = vadd.f32 %v5545, %v5429
        %v5547 = vadd.f32 %v5546, %v5437
        %v5548 = vadd.f32 %v5547, %v5445
        %v5549 = vadd.f32 %v5548, %v5453
        %v5550 = vadd.f32 %v5549, %v5461
        %v5551 = vadd.f32 %v5550, %v5469
        %v5552 = vadd.f32 %v5551, %v5477
        %v5553 = vadd.f32 %v5552, %v5485
        %v5554 = vadd.f32 %v5553, %v5493
        %v5555 = vadd.f32 %v5554, %v5501
        %v5556 = vadd.f32 %v5555, %v5509
        %v5557 = vadd.f32 %v5556, %v5517
        %v5558 = vrot.slane %v5557, 4
        %v5559 = vadd.f32 %v5557, %v5558
        %v5560 = vrot.slane %v5559, 2
        %v5561 = vadd.f32 %v5559, %v5560
        %v5562 = vrot.slane %v5561, 1
        %v5563 = vadd.f32 %v5561, %v5562
        %v5564 = vadd.f32 %v5399, %v5407
        %v5565 = vadd.f32 %v5564, %v5415
        %v5566 = vadd.f32 %v5565, %v5423
        %v5567 = vadd.f32 %v5566, %v5431
        %v5568 = vadd.f32 %v5567, %v5439
        %v5569 = vadd.f32 %v5568, %v5447
        %v5570 = vadd.f32 %v5569, %v5455
        %v5571 = vadd.f32 %v5570, %v5463
        %v5572 = vadd.f32 %v5571, %v5471
        %v5573 = vadd.f32 %v5572, %v5479
        %v5574 = vadd.f32 %v5573, %v5487
        %v5575 = vadd.f32 %v5574, %v5495
        %v5576 = vadd.f32 %v5575, %v5503
        %v5577 = vadd.f32 %v5576, %v5511
        %v5578 = vadd.f32 %v5577, %v5519
        %v5579 = vrot.slane %v5578, 4
        %v5580 = vadd.f32 %v5578, %v5579
        %v5581 = vrot.slane %v5580, 2
        %v5582 = vadd.f32 %v5580, %v5581
        %v5583 = vrot.slane %v5582, 1
        %v5584 = vadd.f32 %v5582, %v5583
        %v5585 = vadd.f32 %v5401, %v5409
        %v5586 = vadd.f32 %v5585, %v5417
        %v5587 = vadd.f32 %v5586, %v5425
        %v5588 = vadd.f32 %v5587, %v5433
        %v5589 = vadd.f32 %v5588, %v5441
        %v5590 = vadd.f32 %v5589, %v5449
        %v5591 = vadd.f32 %v5590, %v5457
        %v5592 = vadd.f32 %v5591, %v5465
        %v5593 = vadd.f32 %v5592, %v5473
        %v5594 = vadd.f32 %v5593, %v5481
        %v5595 = vadd.f32 %v5594, %v5489
        %v5596 = vadd.f32 %v5595, %v5497
        %v5597 = vadd.f32 %v5596, %v5505
        %v5598 = vadd.f32 %v5597, %v5513
        %v5599 = vadd.f32 %v5598, %v5521
        %v5600 = vrot.slane %v5599, 4
        %v5601 = vadd.f32 %v5599, %v5600
        %v5602 = vrot.slane %v5601, 2
        %v5603 = vadd.f32 %v5601, %v5602
        %v5604 = vrot.slane %v5603, 1
        %v5605 = vadd.f32 %v5603, %v5604
        %v5606 = vrcp.pop %v5542
        %v5607 = vrcp.pop %v5563
        %v5608 = vrcp.pop %v5584
        %v5609 = vrcp.pop %v5605
        %v5610 = vmul.f32 %v5395, %v5606
        %v5611 = vmul.f32 %v5397, %v5607
        %v5612 = vmul.f32 %v5399, %v5608
        %v5613 = vmul.f32 %v5401, %v5609
        %v5614 = vmul.f32 %v5403, %v5606
        %v5615 = vmul.f32 %v5405, %v5607
        %v5616 = vmul.f32 %v5407, %v5608
        %v5617 = vmul.f32 %v5409, %v5609
        %v5618 = vmul.f32 %v5411, %v5606
        %v5619 = vmul.f32 %v5413, %v5607
        %v5620 = vmul.f32 %v5415, %v5608
        %v5621 = vmul.f32 %v5417, %v5609
        %v5622 = vmul.f32 %v5419, %v5606
        %v5623 = vmul.f32 %v5421, %v5607
        %v5624 = vmul.f32 %v5423, %v5608
        %v5625 = vmul.f32 %v5425, %v5609
        %v5626 = vmul.f32 %v5427, %v5606
        %v5627 = vmul.f32 %v5429, %v5607
        %v5628 = vmul.f32 %v5431, %v5608
        %v5629 = vmul.f32 %v5433, %v5609
        %v5630 = vmul.f32 %v5435, %v5606
        %v5631 = vmul.f32 %v5437, %v5607
        %v5632 = vmul.f32 %v5439, %v5608
        %v5633 = vmul.f32 %v5441, %v5609
        %v5634 = vmul.f32 %v5443, %v5606
        %v5635 = vmul.f32 %v5445, %v5607
        %v5636 = vmul.f32 %v5447, %v5608
        %v5637 = vmul.f32 %v5449, %v5609
        %v5638 = vmul.f32 %v5451, %v5606
        %v5639 = vmul.f32 %v5453, %v5607
        %v5640 = vmul.f32 %v5455, %v5608
        %v5641 = vmul.f32 %v5457, %v5609
        %v5642 = vmul.f32 %v5459, %v5606
        %v5643 = vmul.f32 %v5461, %v5607
        %v5644 = vmul.f32 %v5463, %v5608
        %v5645 = vmul.f32 %v5465, %v5609
        %v5646 = vmul.f32 %v5467, %v5606
        %v5647 = vmul.f32 %v5469, %v5607
        %v5648 = vmul.f32 %v5471, %v5608
        %v5649 = vmul.f32 %v5473, %v5609
        %v5650 = vmul.f32 %v5475, %v5606
        %v5651 = vmul.f32 %v5477, %v5607
        %v5652 = vmul.f32 %v5479, %v5608
        %v5653 = vmul.f32 %v5481, %v5609
        %v5654 = vmul.f32 %v5483, %v5606
        %v5655 = vmul.f32 %v5485, %v5607
        %v5656 = vmul.f32 %v5487, %v5608
        %v5657 = vmul.f32 %v5489, %v5609
        %v5658 = vmul.f32 %v5491, %v5606
        %v5659 = vmul.f32 %v5493, %v5607
        %v5660 = vmul.f32 %v5495, %v5608
        %v5661 = vmul.f32 %v5497, %v5609
        %v5662 = vmul.f32 %v5499, %v5606
        %v5663 = vmul.f32 %v5501, %v5607
        %v5664 = vmul.f32 %v5503, %v5608
        %v5665 = vmul.f32 %v5505, %v5609
        %v5666 = vmul.f32 %v5507, %v5606
        %v5667 = vmul.f32 %v5509, %v5607
        %v5668 = vmul.f32 %v5511, %v5608
        %v5669 = vmul.f32 %v5513, %v5609
        %v5670 = vmul.f32 %v5515, %v5606
        %v5671 = vmul.f32 %v5517, %v5607
        %v5672 = vmul.f32 %v5519, %v5608
        %v5673 = vmul.f32 %v5521, %v5609
        %v5674 = vmul.f32 %v1335, %v5610
        %v5675 = vmul.f32 %v1337, %v5611
        %v5676 = vmul.f32 %v1528, %v5612
        %v5677 = vmul.f32 %v1530, %v5613
        %v5678 = vmul.f32 %v1339, %v5614
        %v5679 = vmul.f32 %v1341, %v5615
        %v5680 = vmul.f32 %v1532, %v5616
        %v5681 = vmul.f32 %v1534, %v5617
        %v5682 = vmul.f32 %v1345, %v5618
        %v5683 = vmul.f32 %v1347, %v5619
        %v5684 = vmul.f32 %v1538, %v5620
        %v5685 = vmul.f32 %v1540, %v5621
        %v5686 = vmul.f32 %v1349, %v5622
        %v5687 = vmul.f32 %v1351, %v5623
        %v5688 = vmul.f32 %v1542, %v5624
        %v5689 = vmul.f32 %v1544, %v5625
        %v5690 = vmul.f32 %v1355, %v5626
        %v5691 = vmul.f32 %v1357, %v5627
        %v5692 = vmul.f32 %v1548, %v5628
        %v5693 = vmul.f32 %v1550, %v5629
        %v5694 = vmul.f32 %v1359, %v5630
        %v5695 = vmul.f32 %v1361, %v5631
        %v5696 = vmul.f32 %v1552, %v5632
        %v5697 = vmul.f32 %v1554, %v5633
        %v5698 = vmul.f32 %v1365, %v5634
        %v5699 = vmul.f32 %v1367, %v5635
        %v5700 = vmul.f32 %v1558, %v5636
        %v5701 = vmul.f32 %v1560, %v5637
        %v5702 = vmul.f32 %v1369, %v5638
        %v5703 = vmul.f32 %v1371, %v5639
        %v5704 = vmul.f32 %v1562, %v5640
        %v5705 = vmul.f32 %v1564, %v5641
        %v5706 = vmul.f32 %v1375, %v5642
        %v5707 = vmul.f32 %v1377, %v5643
        %v5708 = vmul.f32 %v1568, %v5644
        %v5709 = vmul.f32 %v1570, %v5645
        %v5710 = vmul.f32 %v1379, %v5646
        %v5711 = vmul.f32 %v1381, %v5647
        %v5712 = vmul.f32 %v1572, %v5648
        %v5713 = vmul.f32 %v1574, %v5649
        %v5714 = vmul.f32 %v1385, %v5650
        %v5715 = vmul.f32 %v1387, %v5651
        %v5716 = vmul.f32 %v1578, %v5652
        %v5717 = vmul.f32 %v1580, %v5653
        %v5718 = vmul.f32 %v1389, %v5654
        %v5719 = vmul.f32 %v1391, %v5655
        %v5720 = vmul.f32 %v1582, %v5656
        %v5721 = vmul.f32 %v1584, %v5657
        %v5722 = vmul.f32 %v1395, %v5658
        %v5723 = vmul.f32 %v1397, %v5659
        %v5724 = vmul.f32 %v1588, %v5660
        %v5725 = vmul.f32 %v1590, %v5661
        %v5726 = vmul.f32 %v1399, %v5662
        %v5727 = vmul.f32 %v1401, %v5663
        %v5728 = vmul.f32 %v1592, %v5664
        %v5729 = vmul.f32 %v1594, %v5665
        %v5730 = vmul.f32 %v1405, %v5666
        %v5731 = vmul.f32 %v1407, %v5667
        %v5732 = vmul.f32 %v1598, %v5668
        %v5733 = vmul.f32 %v1600, %v5669
        %v5734 = vmul.f32 %v1409, %v5670
        %v5735 = vmul.f32 %v1411, %v5671
        %v5736 = vmul.f32 %v1602, %v5672
        %v5737 = vmul.f32 %v1604, %v5673
        %v5738 = vadd.f32 %v5674, %v5678
        %v5739 = vadd.f32 %v5738, %v5682
        %v5740 = vadd.f32 %v5739, %v5686
        %v5741 = vadd.f32 %v5740, %v5690
        %v5742 = vadd.f32 %v5741, %v5694
        %v5743 = vadd.f32 %v5742, %v5698
        %v5744 = vadd.f32 %v5743, %v5702
        %v5745 = vadd.f32 %v5744, %v5706
        %v5746 = vadd.f32 %v5745, %v5710
        %v5747 = vadd.f32 %v5746, %v5714
        %v5748 = vadd.f32 %v5747, %v5718
        %v5749 = vadd.f32 %v5748, %v5722
        %v5750 = vadd.f32 %v5749, %v5726
        %v5751 = vadd.f32 %v5750, %v5730
        %v5752 = vadd.f32 %v5751, %v5734
        %v5753 = vrot.slane %v5752, 4
        %v5754 = vadd.f32 %v5752, %v5753
        %v5755 = vrot.slane %v5754, 2
        %v5756 = vadd.f32 %v5754, %v5755
        %v5757 = vrot.slane %v5756, 1
        %v5758 = vadd.f32 %v5756, %v5757
        %v5759 = vadd.f32 %v5675, %v5679
        %v5760 = vadd.f32 %v5759, %v5683
        %v5761 = vadd.f32 %v5760, %v5687
        %v5762 = vadd.f32 %v5761, %v5691
        %v5763 = vadd.f32 %v5762, %v5695
        %v5764 = vadd.f32 %v5763, %v5699
        %v5765 = vadd.f32 %v5764, %v5703
        %v5766 = vadd.f32 %v5765, %v5707
        %v5767 = vadd.f32 %v5766, %v5711
        %v5768 = vadd.f32 %v5767, %v5715
        %v5769 = vadd.f32 %v5768, %v5719
        %v5770 = vadd.f32 %v5769, %v5723
        %v5771 = vadd.f32 %v5770, %v5727
        %v5772 = vadd.f32 %v5771, %v5731
        %v5773 = vadd.f32 %v5772, %v5735
        %v5774 = vrot.slane %v5773, 4
        %v5775 = vadd.f32 %v5773, %v5774
        %v5776 = vrot.slane %v5775, 2
        %v5777 = vadd.f32 %v5775, %v5776
        %v5778 = vrot.slane %v5777, 1
        %v5779 = vadd.f32 %v5777, %v5778
        %v5780 = vadd.f32 %v5676, %v5680
        %v5781 = vadd.f32 %v5780, %v5684
        %v5782 = vadd.f32 %v5781, %v5688
        %v5783 = vadd.f32 %v5782, %v5692
        %v5784 = vadd.f32 %v5783, %v5696
        %v5785 = vadd.f32 %v5784, %v5700
        %v5786 = vadd.f32 %v5785, %v5704
        %v5787 = vadd.f32 %v5786, %v5708
        %v5788 = vadd.f32 %v5787, %v5712
        %v5789 = vadd.f32 %v5788, %v5716
        %v5790 = vadd.f32 %v5789, %v5720
        %v5791 = vadd.f32 %v5790, %v5724
        %v5792 = vadd.f32 %v5791, %v5728
        %v5793 = vadd.f32 %v5792, %v5732
        %v5794 = vadd.f32 %v5793, %v5736
        %v5795 = vrot.slane %v5794, 4
        %v5796 = vadd.f32 %v5794, %v5795
        %v5797 = vrot.slane %v5796, 2
        %v5798 = vadd.f32 %v5796, %v5797
        %v5799 = vrot.slane %v5798, 1
        %v5800 = vadd.f32 %v5798, %v5799
        %v5801 = vadd.f32 %v5677, %v5681
        %v5802 = vadd.f32 %v5801, %v5685
        %v5803 = vadd.f32 %v5802, %v5689
        %v5804 = vadd.f32 %v5803, %v5693
        %v5805 = vadd.f32 %v5804, %v5697
        %v5806 = vadd.f32 %v5805, %v5701
        %v5807 = vadd.f32 %v5806, %v5705
        %v5808 = vadd.f32 %v5807, %v5709
        %v5809 = vadd.f32 %v5808, %v5713
        %v5810 = vadd.f32 %v5809, %v5717
        %v5811 = vadd.f32 %v5810, %v5721
        %v5812 = vadd.f32 %v5811, %v5725
        %v5813 = vadd.f32 %v5812, %v5729
        %v5814 = vadd.f32 %v5813, %v5733
        %v5815 = vadd.f32 %v5814, %v5737
        %v5816 = vrot.slane %v5815, 4
        %v5817 = vadd.f32 %v5815, %v5816
        %v5818 = vrot.slane %v5817, 2
        %v5819 = vadd.f32 %v5817, %v5818
        %v5820 = vrot.slane %v5819, 1
        %v5821 = vadd.f32 %v5819, %v5820
        %v5826 = vcombine.low %v5758, %v5779
        %v5827 = vcombine.low %v5800, %v5821
        %v5829 = vunpack.c.l.s4 1966171168
        %v5830 = vunpack.c.0.s8 %v5829
        %v5831 = vlaneseq
        %v5832 = vshrl.u32 %v5831, 7
        %v5833 = vsub.s32 %v5830, %v5832
        %v5834 = vrot.slane %v5826, %v5833
        %v5836 = vunpack.c.l.s4 1966171168
        %v5837 = vunpack.c.0.s8 %v5836
        %v5838 = vlaneseq
        %v5839 = vshrl.u32 %v5838, 7
        %v5840 = vsub.s32 %v5837, %v5839
        %v5841 = vrot.slane %v5827, %v5840
        %v5842 = vcombine.low %v5834, %v5841
        %v5844 = vunpack.c.l.s4 1966171168
        %v5845 = vunpack.c.0.s8 %v5844
        %v5846 = vlaneseq
        %v5847 = vshrl.u32 %v5846, 7
        %v5848 = vsub.s32 %v5845, %v5847
        %v5849 = vrot.slane %v5842, %v5848
        %s5851 = scalar_lea.vmem %s471, 1 [#allocation7]
        %5852 = vst.msk [vmem:[%s5851] ss:$2 sm:$0xf] %vm3924, %v5849
        %s5853 = sand.u32 %s302, 1
        %s5854 = scalar_lea.sflag [#allocation4], %s5853
        %s5855 = sand.u32 %s302, 1
        %s5856 = smul.addr %s5855, 8
        %s5857 = scalar_lea.vmem [#allocation7], %s5856
        // Predicated region
        $region77: #{tpu_custom_call.1} parent=67 // pred_check
          %p5858 = pneg %p312
        $region78: #{tpu_custom_call.1} parent=67 // pred_check_branch
          %5860 = sbr.rel (%p5858) target = $region80
        $region79: #{tpu_custom_call.1} parent=67 // pred_region
          %s5861 = smul.u32 4, %s32
          %s5863 = ssub.s32 128, 128
          %5864 = vsyncadd %s5854, %s5863
          %s5865 = smul.addr %s5861, 32
          %s5866 = scalar_lea.hbm %s12, %s5865
          %s5868 = sshll.u32 %s5857, 4
          %s5869 = int_to_ptr.vmem [resolvable:$true] %s5868
          %5871 = dma.vmem_to_hbm [thread:$0]  %s5869, 128, %s5866, %s5854
        $region80: #{tpu_custom_call.1} parent=67 // pred_fallthru
          _
      $region68: #{tpu_custom_call.1} parent=5 // pred_fallthru
        _
      %p5872 = scmp.le.s32.totalorder 2, %s27
      // Predicated region
      $region81: #{tpu_custom_call.1} parent=5 // pred_check
        %p5873 = pneg %p5872
      $region82: #{tpu_custom_call.1} parent=5 // pred_check_branch
        %5875 = sbr.rel (%p5873) target = $region84
      $region83: #{tpu_custom_call.1} parent=5 // pred_region
        %s5876 = ssub.s32 %s27, 2
        // Predicated region
        $region85: #{tpu_custom_call.1} parent=83 // pred_check
          %p5877 = pneg %p318
        $region86: #{tpu_custom_call.1} parent=83 // pred_check_branch
          %5879 = sbr.rel (%p5877) target = $region88
        $region87: #{tpu_custom_call.1} parent=83 // pred_region
          %s5880 = sand.u32 %s303, 1
          %s5881 = scalar_lea.sflag [#allocation4], %s5880
          %s5882 = sand.u32 %s303, 1
          %s5883 = smul.addr %s5882, 8
          %s5884 = scalar_lea.vmem [#allocation7], %s5883
          %5885 = dma.done %s5881, 128
        $region88: #{tpu_custom_call.1} parent=83 // pred_fallthru
          _
      $region84: #{tpu_custom_call.1} parent=5 // pred_fallthru
        _
    $region6: #{tpu_custom_call.1} parent=1 // loop_footer
      %s31 = sadd.s32 1, %s27
    $region7: #{tpu_custom_call.1} parent=1 // loop_footer_branch
      %26 = sbr.rel target = $region3
    $region8: #{tpu_custom_call.1} parent=1 // loop_exit
      _
    %5886 = vsyncpa [#allocation3], 1
    %s5887 = scalar_lea.sflag [#allocation3], 1
    %5888 = vsyncpa %s5887, 1
    %5889 = vsyncpa [#allocation6], 1
    %s5890 = scalar_lea.sflag [#allocation6], 1
    %5891 = vsyncpa %s5890, 1
    %5892 = vsyncpa [#allocation4], 1
    %s5893 = scalar_lea.sflag [#allocation4], 1
    %5894 = vsyncpa %s5893, 1

</llo_original>
